<compile_context>
chip_gen: v7x
topology: tpu7x:2x2x1
jax: 0.10.0
libtpu: 0.0.40
codegen_flags: <defaults>
</compile_context>

<pallas_src>
import jax
import jax.numpy as jnp
from jax.experimental import pallas as pl
from jax.experimental.pallas import tpu as pltpu

K = 3        # conv kernel size (both convs), stride 1, padding 1
POOL_K = 3   # maxpool kernel size
POOL_S = 2   # maxpool stride (padding 1)


def conv_layers_kernel(xcol_ref, w1_ref, b1_ref, w2_ref, b2_ref, o_ref,
                       pad1_ref, pad2_ref):
    # xcol_ref: (1, H*W, K*K*Cin)  im2col patches of the input, one batch element
    # w1_ref  : (K*K*Cin, C1)      conv1 weights (BN folded), row = (ky*K+kx)*Cin+ci
    # b1_ref  : (1, C1)
    # w2_ref  : (K*K, C1, C2)      conv2 weights (BN folded)
    # b2_ref  : (1, C2)
    # o_ref   : (1, Ho, Wo, C2)
    # pad1_ref: (H+2, W+2, C1) VMEM scratch - zero-padded conv1 activations
    # pad2_ref: (H+2, W+2, C2) VMEM scratch - zero-padded conv2 activations
    Hp, Wp, C1 = pad1_ref.shape
    H, W = Hp - 2, Wp - 2
    C2 = w2_ref.shape[2]
    _, Ho, Wo, _ = o_ref.shape

    # ---- conv1 (3x3, pad 1) + folded BN + ReLU: one (H*W,27)x(27,C1) MXU matmul.
    h1 = jnp.dot(xcol_ref[0], w1_ref[...], preferred_element_type=jnp.float32)
    h1 = jnp.maximum(h1 + b1_ref[...], 0.0).reshape(H, W, C1)    # (H, W, C1)

    # Zero-padded halo copy for conv2 (scratch re-zeroed every grid step so the
    # border stays 0 no matter how the batch grid is split across cores).
    pad1_ref[...] = jnp.zeros_like(pad1_ref)
    pad1_ref[1:H + 1, 1:W + 1, :] = h1

    # ---- conv2 (3x3, pad 1) + folded BN + ReLU: 9 shifted MXU matmuls, f32 acc.
    acc2 = jnp.zeros((H * W, C2), jnp.float32)
    for ky in range(K):
        for kx in range(K):
            patch = pad1_ref[ky:ky + H, kx:kx + W, :]            # (H, W, C1)
            acc2 = acc2 + jnp.dot(patch.reshape(H * W, C1),
                                  w2_ref[ky * K + kx],
                                  preferred_element_type=jnp.float32)
    h2 = jnp.maximum(acc2 + b2_ref[...], 0.0).reshape(H, W, C2)  # (H, W, C2)

    # ---- maxpool 3x3 / stride 2 / pad 1.  ReLU output is >= 0, so a zero
    # border is equivalent to PyTorch's -inf padding for this max.
    pad2_ref[...] = jnp.zeros_like(pad2_ref)
    pad2_ref[1:H + 1, 1:W + 1, :] = h2

    m = pad2_ref[pl.ds(0, Ho, stride=POOL_S), pl.ds(0, Wo, stride=POOL_S), :]
    for dy in range(POOL_K):
        for dx in range(POOL_K):
            if dy == 0 and dx == 0:
                continue
            win = pad2_ref[pl.ds(dy, Ho, stride=POOL_S),
                           pl.ds(dx, Wo, stride=POOL_S), :]      # (Ho, Wo, C2)
            m = jnp.maximum(m, win)
    o_ref[0] = m.astype(o_ref.dtype)


def conv_layers_forward(x, params, *, eps=1e-5):
    """x: (N, 3, H, W) NCHW float32 -> (N, 96, Ho, Wo), matching ConvLayers.forward
    with inference-mode BatchNorm."""
    (w1, b1, g1, be1, m1, v1, w2, b2, g2, be2, m2, v2) = params
    N, Cin, H, W = x.shape
    C1 = w1.shape[0]
    C2 = w2.shape[0]
    Ho = (H + 2 - POOL_K) // POOL_S + 1
    Wo = (W + 2 - POOL_K) // POOL_S + 1

    # Fold inference BN into conv weights/bias (wrapper-side, free):
    #   BN(conv(x) + b) == conv(x, w*s) + ((b - mean)*s + beta),  s = g/sqrt(v+eps)
    s1 = g1 / jnp.sqrt(v1 + eps)
    w1e = w1 * s1[:, None, None, None]
    b1e = (b1 - m1) * s1 + be1
    s2 = g2 / jnp.sqrt(v2 + eps)
    w2e = w2 * s2[:, None, None, None]
    b2e = (b2 - m2) * s2 + be2

    # Layout plumbing only (no arithmetic hoisted): NCHW -> NHWC, halo pad, and
    # im2col for conv1 so the kernel sees the 27 taps on the lane axis (MXU-able).
    x_pad = jnp.pad(jnp.transpose(x, (0, 2, 3, 1)),              # (N, H+2, W+2, Cin)
                    ((0, 0), (1, 1), (1, 1), (0, 0)))
    x_col = jnp.concatenate(
        [x_pad[:, ky:ky + H, kx:kx + W, :] for ky in range(K) for kx in range(K)],
        axis=-1).reshape(N, H * W, K * K * Cin)                  # tap order (ky,kx,ci)

    w1_k = jnp.transpose(w1e, (2, 3, 1, 0)).reshape(K * K * Cin, C1)  # (kh,kw,ci,co)
    w2_k = jnp.transpose(w2e, (2, 3, 1, 0)).reshape(K * K, C1, C2)
    b1_k = b1e.reshape(1, C1)
    b2_k = b2e.reshape(1, C2)

    out_nhwc = pl.pallas_call(
        conv_layers_kernel,
        out_shape=jax.ShapeDtypeStruct((N, Ho, Wo, C2), x.dtype),
        grid=(N,),
        in_specs=[
            pl.BlockSpec((1, H * W, K * K * Cin), lambda n: (n, 0, 0)),
            pl.BlockSpec((K * K * Cin, C1), lambda n: (0, 0)),
            pl.BlockSpec((1, C1), lambda n: (0, 0)),
            pl.BlockSpec((K * K, C1, C2), lambda n: (0, 0, 0)),
            pl.BlockSpec((1, C2), lambda n: (0, 0)),
        ],
        out_specs=pl.BlockSpec((1, Ho, Wo, C2), lambda n: (n, 0, 0, 0)),
        scratch_shapes=[
            pltpu.VMEM((H + 2, W + 2, C1), jnp.float32),
            pltpu.VMEM((H + 2, W + 2, C2), jnp.float32),
        ],
        compiler_params=pltpu.CompilerParams(
            dimension_semantics=("parallel",)),
    )(x_col, w1_k, b1_k, w2_k, b2_k)

    return jnp.transpose(out_nhwc, (0, 3, 1, 2))                 # NHWC -> NCHW


def conv_layers_reference(x, params, *, eps=1e-5):
    """Pure-JAX reference (NCHW) of ConvLayers.forward with inference BN."""
    (w1, b1, g1, be1, m1, v1, w2, b2, g2, be2, m2, v2) = params

    def conv_block(y, w, b, g, be, mu, var):
        y = jax.lax.conv_general_dilated(
            y, w, window_strides=(1, 1), padding=((1, 1), (1, 1)),
            dimension_numbers=("NCHW", "OIHW", "NCHW"),
            precision=jax.lax.Precision.HIGHEST)
        y = y + b[None, :, None, None]
        scale = (g / jnp.sqrt(var + eps))[None, :, None, None]
        y = (y - mu[None, :, None, None]) * scale + be[None, :, None, None]
        return jnp.maximum(y, 0.0)

    y = conv_block(x, w1, b1, g1, be1, m1, v1)
    y = conv_block(y, w2, b2, g2, be2, m2, v2)
    return jax.lax.reduce_window(
        y, -jnp.inf, jax.lax.max,
        window_dimensions=(1, 1, POOL_K, POOL_K),
        window_strides=(1, 1, POOL_S, POOL_S),
        padding=((0, 0), (0, 0), (1, 1), (1, 1)))


if __name__ == "__main__":
    key = jax.random.PRNGKey(0)
    keys = jax.random.split(key, 13)

    N, Cin, H, W = 2, 3, 16, 16
    C1, C2 = 48, 96            # fixed by the module definition (3->48->96)

    x = jax.random.normal(keys[0], (N, Cin, H, W), jnp.float32)

    def conv_bn_params(kw, kb, kg, kbe, km, kv, c_out, c_in):
        bound = 1.0 / (c_in * K * K) ** 0.5
        w = jax.random.uniform(kw, (c_out, c_in, K, K), jnp.float32, -bound, bound)
        b = jax.random.uniform(kb, (c_out,), jnp.float32, -bound, bound)
        g = 1.0 + 0.1 * jax.random.normal(kg, (c_out,), jnp.float32)
        be = 0.1 * jax.random.normal(kbe, (c_out,), jnp.float32)
        mu = 0.1 * jax.random.normal(km, (c_out,), jnp.float32)
        var = jax.random.uniform(kv, (c_out,), jnp.float32, 0.5, 1.5)
        return w, b, g, be, mu, var

    p1 = conv_bn_params(*keys[1:7], C1, Cin)
    p2 = conv_bn_params(*keys[7:13], C2, C1)
    params = (*p1, *p2)

    y = jax.jit(conv_layers_forward)(x, params)
    y = jax.block_until_ready(y)

    y_ref = conv_layers_reference(x, params)
    Ho = (H + 2 - POOL_K) // POOL_S + 1
    Wo = (W + 2 - POOL_K) // POOL_S + 1
    assert y.shape == (N, C2, Ho, Wo)
    assert jnp.allclose(y, y_ref, atol=5e-3, rtol=5e-3), \
        float(jnp.max(jnp.abs(y - y_ref)))

    print("KERNEL_OK")
</pallas_src>

<mosaic_0001>
module attributes {stable_mosaic.version = 11 : i64} {
  func.func @conv_layers_kernel(%arg0: i32, %arg1: memref<1x256x27xf32, #tpu.memory_space<vmem>>, %arg2: memref<27x48xf32, #tpu.memory_space<vmem>>, %arg3: memref<1x48xf32, #tpu.memory_space<vmem>>, %arg4: memref<9x48x96xf32, #tpu.memory_space<vmem>>, %arg5: memref<1x96xf32, #tpu.memory_space<vmem>>, %arg6: memref<1x8x8x96xf32, #tpu.memory_space<vmem>>, %arg7: memref<18x18x48xf32, #tpu.memory_space<vmem>>, %arg8: memref<18x18x96xf32, #tpu.memory_space<vmem>>) attributes {dimension_semantics = [#tpu.dimension_semantics<parallel>], iteration_bounds = array<i64: 2>, scalar_prefetch = 0 : i64, scratch_operands = 2 : i64, tpu.core_type = #tpu.core_type<tc>, window_params = [{transform_indices = @transform_0, window_bounds = array<i64: 1, 256, 27>}, {pipeline_mode = #tpu.pipeline_mode<synchronous>, transform_indices = @transform_1, window_bounds = array<i64: 27, 48>}, {pipeline_mode = #tpu.pipeline_mode<synchronous>, transform_indices = @transform_2, window_bounds = array<i64: 1, 48>}, {pipeline_mode = #tpu.pipeline_mode<synchronous>, transform_indices = @transform_3, window_bounds = array<i64: 9, 48, 96>}, {pipeline_mode = #tpu.pipeline_mode<synchronous>, transform_indices = @transform_4, window_bounds = array<i64: 1, 96>}, {transform_indices = @transform_5, window_bounds = array<i64: 1, 8, 8, 96>}]} {
    %c0 = arith.constant 0 : index
    %c0_0 = arith.constant 0 : index
    %c0_1 = arith.constant 0 : index
    %0 = vector.load %arg1[%c0, %c0_0, %c0_1] : memref<1x256x27xf32, #tpu.memory_space<vmem>>, vector<1x256x27xf32>
    %1 = vector.shape_cast %0 : vector<1x256x27xf32> to vector<256x27xf32>
    %c0_2 = arith.constant 0 : index
    %c0_3 = arith.constant 0 : index
    %2 = vector.load %arg2[%c0_2, %c0_3] : memref<27x48xf32, #tpu.memory_space<vmem>>, vector<27x48xf32>
    %cst = arith.constant dense<0.000000e+00> : vector<256x48xf32>
    %3 = tpu.matmul %1, %2, %cst {dimension_numbers = #tpu.dot_dimension_numbers<[1], [0], [0], [1], [0, 0, 1, 1], [], []>} : vector<256x27xf32>, vector<27x48xf32>, vector<256x48xf32> -> vector<256x48xf32>
    %c0_4 = arith.constant 0 : index
    %c0_5 = arith.constant 0 : index
    %4 = vector.load %arg3[%c0_4, %c0_5] : memref<1x48xf32, #tpu.memory_space<vmem>>, vector<1x48xf32>
    %5 = vector.broadcast %4 : vector<1x48xf32> to vector<256x48xf32>
    %6 = arith.addf %3, %5 : vector<256x48xf32>
    %cst_6 = arith.constant 0.000000e+00 : f32
    %7 = vector.broadcast %cst_6 : f32 to vector<256x48xf32>
    %8 = arith.maximumf %6, %7 : vector<256x48xf32>
    %9 = vector.shape_cast %8 : vector<256x48xf32> to vector<16x16x48xf32>
    %cst_7 = arith.constant 0.000000e+00 : f32
    %10 = vector.broadcast %cst_7 : f32 to vector<18x18x48xf32>
    %c0_8 = arith.constant 0 : index
    %c0_9 = arith.constant 0 : index
    %c0_10 = arith.constant 0 : index
    %11 = vector.load %arg7[%c0_8, %c0_9, %c0_10] : memref<18x18x48xf32, #tpu.memory_space<vmem>>, vector<18x18x48xf32>
    tpu.vector_store %arg7[%c0_8, %c0_9, %c0_10], %10 {strides = array<i32>} : memref<18x18x48xf32, #tpu.memory_space<vmem>>, vector<18x18x48xf32>,
    %c1 = arith.constant 1 : index
    %c1_11 = arith.constant 1 : index
    %c0_12 = arith.constant 0 : index
    %12 = vector.load %arg7[%c1, %c1_11, %c0_12] : memref<18x18x48xf32, #tpu.memory_space<vmem>>, vector<16x16x48xf32>
    tpu.vector_store %arg7[%c1, %c1_11, %c0_12], %9 {strides = array<i32>} : memref<18x18x48xf32, #tpu.memory_space<vmem>>, vector<16x16x48xf32>,
    %cst_13 = arith.constant 0.000000e+00 : f32
    %13 = vector.broadcast %cst_13 : f32 to vector<256x96xf32>
    %c0_14 = arith.constant 0 : index
    %c0_15 = arith.constant 0 : index
    %c0_16 = arith.constant 0 : index
    %14 = vector.load %arg7[%c0_14, %c0_15, %c0_16] : memref<18x18x48xf32, #tpu.memory_space<vmem>>, vector<16x16x48xf32>
    %15 = vector.shape_cast %14 : vector<16x16x48xf32> to vector<256x48xf32>
    %c0_17 = arith.constant 0 : index
    %c0_18 = arith.constant 0 : index
    %c0_19 = arith.constant 0 : index
    %16 = vector.load %arg4[%c0_17, %c0_18, %c0_19] : memref<9x48x96xf32, #tpu.memory_space<vmem>>, vector<1x48x96xf32>
    %17 = vector.shape_cast %16 : vector<1x48x96xf32> to vector<48x96xf32>
    %cst_20 = arith.constant dense<0.000000e+00> : vector<256x96xf32>
    %18 = tpu.matmul %15, %17, %cst_20 {dimension_numbers = #tpu.dot_dimension_numbers<[1], [0], [0], [1], [0, 0, 1, 1], [], []>} : vector<256x48xf32>, vector<48x96xf32>, vector<256x96xf32> -> vector<256x96xf32>
    %19 = arith.addf %13, %18 : vector<256x96xf32>
    %c0_21 = arith.constant 0 : index
    %c1_22 = arith.constant 1 : index
    %c0_23 = arith.constant 0 : index
    %20 = vector.load %arg7[%c0_21, %c1_22, %c0_23] : memref<18x18x48xf32, #tpu.memory_space<vmem>>, vector<16x16x48xf32>
    %21 = vector.shape_cast %20 : vector<16x16x48xf32> to vector<256x48xf32>
    %c1_24 = arith.constant 1 : index
    %c0_25 = arith.constant 0 : index
    %c0_26 = arith.constant 0 : index
    %22 = vector.load %arg4[%c1_24, %c0_25, %c0_26] : memref<9x48x96xf32, #tpu.memory_space<vmem>>, vector<1x48x96xf32>
    %23 = vector.shape_cast %22 : vector<1x48x96xf32> to vector<48x96xf32>
    %cst_27 = arith.constant dense<0.000000e+00> : vector<256x96xf32>
    %24 = tpu.matmul %21, %23, %cst_27 {dimension_numbers = #tpu.dot_dimension_numbers<[1], [0], [0], [1], [0, 0, 1, 1], [], []>} : vector<256x48xf32>, vector<48x96xf32>, vector<256x96xf32> -> vector<256x96xf32>
    %25 = arith.addf %19, %24 : vector<256x96xf32>
    %c0_28 = arith.constant 0 : index
    %c2 = arith.constant 2 : index
    %c0_29 = arith.constant 0 : index
    %26 = vector.load %arg7[%c0_28, %c2, %c0_29] : memref<18x18x48xf32, #tpu.memory_space<vmem>>, vector<16x16x48xf32>
    %27 = vector.shape_cast %26 : vector<16x16x48xf32> to vector<256x48xf32>
    %c2_30 = arith.constant 2 : index
    %c0_31 = arith.constant 0 : index
    %c0_32 = arith.constant 0 : index
    %28 = vector.load %arg4[%c2_30, %c0_31, %c0_32] : memref<9x48x96xf32, #tpu.memory_space<vmem>>, vector<1x48x96xf32>
    %29 = vector.shape_cast %28 : vector<1x48x96xf32> to vector<48x96xf32>
    %cst_33 = arith.constant dense<0.000000e+00> : vector<256x96xf32>
    %30 = tpu.matmul %27, %29, %cst_33 {dimension_numbers = #tpu.dot_dimension_numbers<[1], [0], [0], [1], [0, 0, 1, 1], [], []>} : vector<256x48xf32>, vector<48x96xf32>, vector<256x96xf32> -> vector<256x96xf32>
    %31 = arith.addf %25, %30 : vector<256x96xf32>
    %c1_34 = arith.constant 1 : index
    %c0_35 = arith.constant 0 : index
    %c0_36 = arith.constant 0 : index
    %32 = vector.load %arg7[%c1_34, %c0_35, %c0_36] : memref<18x18x48xf32, #tpu.memory_space<vmem>>, vector<16x16x48xf32>
    %33 = vector.shape_cast %32 : vector<16x16x48xf32> to vector<256x48xf32>
    %c3 = arith.constant 3 : index
    %c0_37 = arith.constant 0 : index
    %c0_38 = arith.constant 0 : index
    %34 = vector.load %arg4[%c3, %c0_37, %c0_38] : memref<9x48x96xf32, #tpu.memory_space<vmem>>, vector<1x48x96xf32>
    %35 = vector.shape_cast %34 : vector<1x48x96xf32> to vector<48x96xf32>
    %cst_39 = arith.constant dense<0.000000e+00> : vector<256x96xf32>
    %36 = tpu.matmul %33, %35, %cst_39 {dimension_numbers = #tpu.dot_dimension_numbers<[1], [0], [0], [1], [0, 0, 1, 1], [], []>} : vector<256x48xf32>, vector<48x96xf32>, vector<256x96xf32> -> vector<256x96xf32>
    %37 = arith.addf %31, %36 : vector<256x96xf32>
    %c1_40 = arith.constant 1 : index
    %c1_41 = arith.constant 1 : index
    %c0_42 = arith.constant 0 : index
    %38 = vector.load %arg7[%c1_40, %c1_41, %c0_42] : memref<18x18x48xf32, #tpu.memory_space<vmem>>, vector<16x16x48xf32>
    %39 = vector.shape_cast %38 : vector<16x16x48xf32> to vector<256x48xf32>
    %c4 = arith.constant 4 : index
    %c0_43 = arith.constant 0 : index
    %c0_44 = arith.constant 0 : index
    %40 = vector.load %arg4[%c4, %c0_43, %c0_44] : memref<9x48x96xf32, #tpu.memory_space<vmem>>, vector<1x48x96xf32>
    %41 = vector.shape_cast %40 : vector<1x48x96xf32> to vector<48x96xf32>
    %cst_45 = arith.constant dense<0.000000e+00> : vector<256x96xf32>
    %42 = tpu.matmul %39, %41, %cst_45 {dimension_numbers = #tpu.dot_dimension_numbers<[1], [0], [0], [1], [0, 0, 1, 1], [], []>} : vector<256x48xf32>, vector<48x96xf32>, vector<256x96xf32> -> vector<256x96xf32>
    %43 = arith.addf %37, %42 : vector<256x96xf32>
    %c1_46 = arith.constant 1 : index
    %c2_47 = arith.constant 2 : index
    %c0_48 = arith.constant 0 : index
    %44 = vector.load %arg7[%c1_46, %c2_47, %c0_48] : memref<18x18x48xf32, #tpu.memory_space<vmem>>, vector<16x16x48xf32>
    %45 = vector.shape_cast %44 : vector<16x16x48xf32> to vector<256x48xf32>
    %c5 = arith.constant 5 : index
    %c0_49 = arith.constant 0 : index
    %c0_50 = arith.constant 0 : index
    %46 = vector.load %arg4[%c5, %c0_49, %c0_50] : memref<9x48x96xf32, #tpu.memory_space<vmem>>, vector<1x48x96xf32>
    %47 = vector.shape_cast %46 : vector<1x48x96xf32> to vector<48x96xf32>
    %cst_51 = arith.constant dense<0.000000e+00> : vector<256x96xf32>
    %48 = tpu.matmul %45, %47, %cst_51 {dimension_numbers = #tpu.dot_dimension_numbers<[1], [0], [0], [1], [0, 0, 1, 1], [], []>} : vector<256x48xf32>, vector<48x96xf32>, vector<256x96xf32> -> vector<256x96xf32>
    %49 = arith.addf %43, %48 : vector<256x96xf32>
    %c2_52 = arith.constant 2 : index
    %c0_53 = arith.constant 0 : index
    %c0_54 = arith.constant 0 : index
    %50 = vector.load %arg7[%c2_52, %c0_53, %c0_54] : memref<18x18x48xf32, #tpu.memory_space<vmem>>, vector<16x16x48xf32>
    %51 = vector.shape_cast %50 : vector<16x16x48xf32> to vector<256x48xf32>
    %c6 = arith.constant 6 : index
    %c0_55 = arith.constant 0 : index
    %c0_56 = arith.constant 0 : index
    %52 = vector.load %arg4[%c6, %c0_55, %c0_56] : memref<9x48x96xf32, #tpu.memory_space<vmem>>, vector<1x48x96xf32>
    %53 = vector.shape_cast %52 : vector<1x48x96xf32> to vector<48x96xf32>
    %cst_57 = arith.constant dense<0.000000e+00> : vector<256x96xf32>
    %54 = tpu.matmul %51, %53, %cst_57 {dimension_numbers = #tpu.dot_dimension_numbers<[1], [0], [0], [1], [0, 0, 1, 1], [], []>} : vector<256x48xf32>, vector<48x96xf32>, vector<256x96xf32> -> vector<256x96xf32>
    %55 = arith.addf %49, %54 : vector<256x96xf32>
    %c2_58 = arith.constant 2 : index
    %c1_59 = arith.constant 1 : index
    %c0_60 = arith.constant 0 : index
    %56 = vector.load %arg7[%c2_58, %c1_59, %c0_60] : memref<18x18x48xf32, #tpu.memory_space<vmem>>, vector<16x16x48xf32>
    %57 = vector.shape_cast %56 : vector<16x16x48xf32> to vector<256x48xf32>
    %c7 = arith.constant 7 : index
    %c0_61 = arith.constant 0 : index
    %c0_62 = arith.constant 0 : index
    %58 = vector.load %arg4[%c7, %c0_61, %c0_62] : memref<9x48x96xf32, #tpu.memory_space<vmem>>, vector<1x48x96xf32>
    %59 = vector.shape_cast %58 : vector<1x48x96xf32> to vector<48x96xf32>
    %cst_63 = arith.constant dense<0.000000e+00> : vector<256x96xf32>
    %60 = tpu.matmul %57, %59, %cst_63 {dimension_numbers = #tpu.dot_dimension_numbers<[1], [0], [0], [1], [0, 0, 1, 1], [], []>} : vector<256x48xf32>, vector<48x96xf32>, vector<256x96xf32> -> vector<256x96xf32>
    %61 = arith.addf %55, %60 : vector<256x96xf32>
    %c2_64 = arith.constant 2 : index
    %c2_65 = arith.constant 2 : index
    %c0_66 = arith.constant 0 : index
    %62 = vector.load %arg7[%c2_64, %c2_65, %c0_66] : memref<18x18x48xf32, #tpu.memory_space<vmem>>, vector<16x16x48xf32>
    %63 = vector.shape_cast %62 : vector<16x16x48xf32> to vector<256x48xf32>
    %c8 = arith.constant 8 : index
    %c0_67 = arith.constant 0 : index
    %c0_68 = arith.constant 0 : index
    %64 = vector.load %arg4[%c8, %c0_67, %c0_68] : memref<9x48x96xf32, #tpu.memory_space<vmem>>, vector<1x48x96xf32>
    %65 = vector.shape_cast %64 : vector<1x48x96xf32> to vector<48x96xf32>
    %cst_69 = arith.constant dense<0.000000e+00> : vector<256x96xf32>
    %66 = tpu.matmul %63, %65, %cst_69 {dimension_numbers = #tpu.dot_dimension_numbers<[1], [0], [0], [1], [0, 0, 1, 1], [], []>} : vector<256x48xf32>, vector<48x96xf32>, vector<256x96xf32> -> vector<256x96xf32>
    %67 = arith.addf %61, %66 : vector<256x96xf32>
    %c0_70 = arith.constant 0 : index
    %c0_71 = arith.constant 0 : index
    %68 = vector.load %arg5[%c0_70, %c0_71] : memref<1x96xf32, #tpu.memory_space<vmem>>, vector<1x96xf32>
    %69 = vector.broadcast %68 : vector<1x96xf32> to vector<256x96xf32>
    %70 = arith.addf %67, %69 : vector<256x96xf32>
    %cst_72 = arith.constant 0.000000e+00 : f32
    %71 = vector.broadcast %cst_72 : f32 to vector<256x96xf32>
    %72 = arith.maximumf %70, %71 : vector<256x96xf32>
    %73 = vector.shape_cast %72 : vector<256x96xf32> to vector<16x16x96xf32>
    %cst_73 = arith.constant 0.000000e+00 : f32
    %74 = vector.broadcast %cst_73 : f32 to vector<18x18x96xf32>
    %c0_74 = arith.constant 0 : index
    %c0_75 = arith.constant 0 : index
    %c0_76 = arith.constant 0 : index
    %75 = vector.load %arg8[%c0_74, %c0_75, %c0_76] : memref<18x18x96xf32, #tpu.memory_space<vmem>>, vector<18x18x96xf32>
    tpu.vector_store %arg8[%c0_74, %c0_75, %c0_76], %74 {strides = array<i32>} : memref<18x18x96xf32, #tpu.memory_space<vmem>>, vector<18x18x96xf32>,
    %c1_77 = arith.constant 1 : index
    %c1_78 = arith.constant 1 : index
    %c0_79 = arith.constant 0 : index
    %76 = vector.load %arg8[%c1_77, %c1_78, %c0_79] : memref<18x18x96xf32, #tpu.memory_space<vmem>>, vector<16x16x96xf32>
    tpu.vector_store %arg8[%c1_77, %c1_78, %c0_79], %73 {strides = array<i32>} : memref<18x18x96xf32, #tpu.memory_space<vmem>>, vector<16x16x96xf32>,
    %c0_80 = arith.constant 0 : index
    %c0_81 = arith.constant 0 : index
    %c0_82 = arith.constant 0 : index
    %77 = tpu.strided_load %arg8[%c0_80, %c0_81, %c0_82] {strides = array<i32: 2, 2, 1>} : memref<18x18x96xf32, #tpu.memory_space<vmem>>, vector<8x8x96xf32>
    %c0_83 = arith.constant 0 : index
    %c1_84 = arith.constant 1 : index
    %c0_85 = arith.constant 0 : index
    %78 = tpu.strided_load %arg8[%c0_83, %c1_84, %c0_85] {strides = array<i32: 2, 2, 1>} : memref<18x18x96xf32, #tpu.memory_space<vmem>>, vector<8x8x96xf32>
    %79 = arith.maximumf %77, %78 : vector<8x8x96xf32>
    %c0_86 = arith.constant 0 : index
    %c2_87 = arith.constant 2 : index
    %c0_88 = arith.constant 0 : index
    %80 = tpu.strided_load %arg8[%c0_86, %c2_87, %c0_88] {strides = array<i32: 2, 2, 1>} : memref<18x18x96xf32, #tpu.memory_space<vmem>>, vector<8x8x96xf32>
    %81 = arith.maximumf %79, %80 : vector<8x8x96xf32>
    %c1_89 = arith.constant 1 : index
    %c0_90 = arith.constant 0 : index
    %c0_91 = arith.constant 0 : index
    %82 = tpu.strided_load %arg8[%c1_89, %c0_90, %c0_91] {strides = array<i32: 2, 2, 1>} : memref<18x18x96xf32, #tpu.memory_space<vmem>>, vector<8x8x96xf32>
    %83 = arith.maximumf %81, %82 : vector<8x8x96xf32>
    %c1_92 = arith.constant 1 : index
    %c1_93 = arith.constant 1 : index
    %c0_94 = arith.constant 0 : index
    %84 = tpu.strided_load %arg8[%c1_92, %c1_93, %c0_94] {strides = array<i32: 2, 2, 1>} : memref<18x18x96xf32, #tpu.memory_space<vmem>>, vector<8x8x96xf32>
    %85 = arith.maximumf %83, %84 : vector<8x8x96xf32>
    %c1_95 = arith.constant 1 : index
    %c2_96 = arith.constant 2 : index
    %c0_97 = arith.constant 0 : index
    %86 = tpu.strided_load %arg8[%c1_95, %c2_96, %c0_97] {strides = array<i32: 2, 2, 1>} : memref<18x18x96xf32, #tpu.memory_space<vmem>>, vector<8x8x96xf32>
    %87 = arith.maximumf %85, %86 : vector<8x8x96xf32>
    %c2_98 = arith.constant 2 : index
    %c0_99 = arith.constant 0 : index
    %c0_100 = arith.constant 0 : index
    %88 = tpu.strided_load %arg8[%c2_98, %c0_99, %c0_100] {strides = array<i32: 2, 2, 1>} : memref<18x18x96xf32, #tpu.memory_space<vmem>>, vector<8x8x96xf32>
    %89 = arith.maximumf %87, %88 : vector<8x8x96xf32>
    %c2_101 = arith.constant 2 : index
    %c1_102 = arith.constant 1 : index
    %c0_103 = arith.constant 0 : index
    %90 = tpu.strided_load %arg8[%c2_101, %c1_102, %c0_103] {strides = array<i32: 2, 2, 1>} : memref<18x18x96xf32, #tpu.memory_space<vmem>>, vector<8x8x96xf32>
    %91 = arith.maximumf %89, %90 : vector<8x8x96xf32>
    %c2_104 = arith.constant 2 : index
    %c2_105 = arith.constant 2 : index
    %c0_106 = arith.constant 0 : index
    %92 = tpu.strided_load %arg8[%c2_104, %c2_105, %c0_106] {strides = array<i32: 2, 2, 1>} : memref<18x18x96xf32, #tpu.memory_space<vmem>>, vector<8x8x96xf32>
    %93 = arith.maximumf %91, %92 : vector<8x8x96xf32>
    %c0_107 = arith.constant 0 : index
    %c0_108 = arith.constant 0 : index
    %c0_109 = arith.constant 0 : index
    %c0_110 = arith.constant 0 : index
    %94 = vector.load %arg6[%c0_107, %c0_108, %c0_109, %c0_110] : memref<1x8x8x96xf32, #tpu.memory_space<vmem>>, vector<1x8x8x96xf32>
    %95 = vector.shape_cast %94 : vector<1x8x8x96xf32> to vector<8x8x96xf32>
    %96 = vector.shape_cast %93 : vector<8x8x96xf32> to vector<1x8x8x96xf32>
    tpu.vector_store %arg6[%c0_107, %c0_108, %c0_109, %c0_110], %96 {strides = array<i32>} : memref<1x8x8x96xf32, #tpu.memory_space<vmem>>, vector<1x8x8x96xf32>,
    return
  }
  func.func @transform_0(%arg0: i32) -> (i32, i32, i32) {
    %c0_i32 = arith.constant 0 : i32
    %c0_i32_0 = arith.constant 0 : i32
    %c0_i32_1 = arith.constant 0 : i32
    return %arg0, %c0_i32, %c0_i32_0 : i32, i32, i32
  }
  func.func @transform_1(%arg0: i32) -> (i32, i32) {
    %c0_i32 = arith.constant 0 : i32
    %c0_i32_0 = arith.constant 0 : i32
    %c0_i32_1 = arith.constant 0 : i32
    return %c0_i32, %c0_i32_0 : i32, i32
  }
  func.func @transform_2(%arg0: i32) -> (i32, i32) {
    %c0_i32 = arith.constant 0 : i32
    %c0_i32_0 = arith.constant 0 : i32
    %c0_i32_1 = arith.constant 0 : i32
    return %c0_i32, %c0_i32_0 : i32, i32
  }
  func.func @transform_3(%arg0: i32) -> (i32, i32, i32) {
    %c0_i32 = arith.constant 0 : i32
    %c0_i32_0 = arith.constant 0 : i32
    %c0_i32_1 = arith.constant 0 : i32
    %c0_i32_2 = arith.constant 0 : i32
    return %c0_i32, %c0_i32_0, %c0_i32_1 : i32, i32, i32
  }
  func.func @transform_4(%arg0: i32) -> (i32, i32) {
    %c0_i32 = arith.constant 0 : i32
    %c0_i32_0 = arith.constant 0 : i32
    %c0_i32_1 = arith.constant 0 : i32
    return %c0_i32, %c0_i32_0 : i32, i32
  }
  func.func @transform_5(%arg0: i32) -> (i32, i32, i32, i32) {
    %c0_i32 = arith.constant 0 : i32
    %c0_i32_0 = arith.constant 0 : i32
    %c0_i32_1 = arith.constant 0 : i32
    %c0_i32_2 = arith.constant 0 : i32
    return %arg0, %c0_i32, %c0_i32_0, %c0_i32_1 : i32, i32, i32, i32
  }
}

</mosaic_0001>

<llo_original>
// kernel: conv_layers_forward.1
$region0: #{conv_layers_forward.1}
  #allocation0 [shape = 'u32[]', space=smem, size = 0x4, offset = 0x4, fixed_abs, tag = 'smem constant byte address 0x4 - core index']
  #allocation1 [shape = 'u32[144,128]{1,0:T(1,128)}', space=vmem, size = 0x12000, scoped, tag = 'internal scratch']
  #allocation2 [shape = 'f32[18,18,48]{2,1,0:T(8,128)}', space=vmem, size = 0x36000, scoped, tag = 'scratch operand']
  #allocation3 [shape = 'f32[18,18,96]{2,1,0:T(8,128)}', space=vmem, size = 0x36000, scoped, tag = 'scratch operand']
  %s0 = inlined_call_operand.vmem [shape: f32[2,256,27], index: 0, kind: input, shape index: {}]
  %s1 = inlined_call_operand.vmem [shape: f32[27,48], index: 1, kind: input, shape index: {}]
  %s2 = inlined_call_operand.vmem [shape: f32[1,48], index: 2, kind: input, shape index: {}]
  %s3 = inlined_call_operand.vmem [shape: f32[9,48,96], index: 3, kind: input, shape index: {}]
  %s4 = inlined_call_operand.vmem [shape: f32[1,96], index: 4, kind: input, shape index: {}]
  %s5 = inlined_call_operand.hbm [shape: f32[2,8,8,96], index: 5, kind: output, shape index: {}]
  %s6 = sld [smem:[#allocation0]]
  $region53: #{conv_layers_forward.1} parent=0
    _
  %s8 = ssub.s32 1, %s6
  %s9 = scalar_select 0, %s8, %s6
  $region1: #{conv_layers_forward.1} parent=0
    #allocation4 [shape = 'u8[65536]{0}', space=vmem, size = 0x10000, scoped, tag = 'output window, operand 0']
    #allocation5 [shape = 's32[2]{0}', space=sflag, size = 0x8, scoped, tag = 'scoped memory for conv_layers_forward.1']
    %10 = vsyncpa [#allocation5], 0
    %s11 = scalar_lea.sflag [#allocation5], 1
    %12 = vsyncpa %s11, 0
    loop: start=0, step=1, limit=4
    $region2: #{conv_layers_forward.1} parent=1 // loop_pre_header
      _
    $region3: #{conv_layers_forward.1} parent=1 // loop_header
      %s14 = sphi 0, %s18
      %p15 = scmp.ge.s32.totalorder %s14, 4
      %s24 = sphi 0, %s26
      %s27 = sphi 0, %s24
      %s28 = sphi 0, %s27
      %s44 = sphi 0, %s28
      %s48 = sphi 0, %s48
      %s50 = sphi 0, %s48
      %s51 = sphi 0, %s50
      %s65 = sphi 0, %s51
      %s69 = sphi 0, %s69
      %s71 = sphi 0, %s69
      %s72 = sphi 0, %s71
      %s86 = sphi 0, %s72
      %s90 = sphi 0, %s90
      %s92 = sphi 0, %s90
      %s93 = sphi 0, %s92
      %s107 = sphi 0, %s93
      %s111 = sphi 0, %s111
      %s113 = sphi 0, %s111
      %s114 = sphi 0, %s113
      %s128 = sphi 0, %s114
      %s134 = sphi 0, %s136
      %s137 = sphi 0, %s134
      %s138 = sphi 0, %s137
      %s154 = sphi 0, %s138
    $region4: #{conv_layers_forward.1} parent=1 // loop_header_branch
      %17 = sbr.rel (%p15) target = $region8
    $region5: #{conv_layers_forward.1} parent=1 // loop_body
      %s19 = ssub.s32 %s14, 1
      %s20 = ssub.s32 %s14, 2
      %s21 = sadd.s32 %s14, 1
      %s22 = ssub.s32 %s14, %s21
      %p23 = scmp.eq.s32.totalorder %s22, 0
      %s25 = sadd.s32 %s24, 1
      %s26 = scalar_select %p23, %s24, %s25
      %p29 = pneg %p23
      %p30 = scmp.eq.s32.totalorder %s14, 1
      %p31 = por %p29, %p30
      %p32 = scmp.ne.s32.totalorder %s24, %s27
      %p33 = scmp.eq.s32.totalorder %s14, 0
      %p34 = por %p32, %p33
      %p35 = scmp.ne.s32.totalorder %s24, %s27
      %p36 = scmp.eq.s32.totalorder %s19, 1
      %p37 = por %p35, %p36
      %p38 = scmp.ne.s32.totalorder %s27, %s28
      %p39 = scmp.eq.s32.totalorder %s19, 0
      %p40 = por %p38, %p39
      %p41 = scmp.ne.s32.totalorder %s27, %s28
      %p42 = scmp.eq.s32.totalorder %s20, 1
      %p43 = por %p41, %p42
      %p45 = scmp.ne.s32.totalorder %s28, %s44
      %p46 = scmp.eq.s32.totalorder %s20, 0
      %p47 = por %p45, %p46
      %s49 = sadd.s32 %s48, 1
      %p52 = scmp.eq.s32.totalorder %s14, 1
      %p53 = scmp.ne.s32.totalorder %s48, %s50
      %p54 = scmp.eq.s32.totalorder %s14, 0
      %p55 = por %p53, %p54
      %p56 = scmp.ne.s32.totalorder %s48, %s50
      %p57 = scmp.eq.s32.totalorder %s19, 1
      %p58 = por %p56, %p57
      %p59 = scmp.ne.s32.totalorder %s50, %s51
      %p60 = scmp.eq.s32.totalorder %s19, 0
      %p61 = por %p59, %p60
      %p62 = scmp.ne.s32.totalorder %s50, %s51
      %p63 = scmp.eq.s32.totalorder %s20, 1
      %p64 = por %p62, %p63
      %p66 = scmp.ne.s32.totalorder %s51, %s65
      %p67 = scmp.eq.s32.totalorder %s20, 0
      %p68 = por %p66, %p67
      %s70 = sadd.s32 %s69, 1
      %p73 = scmp.eq.s32.totalorder %s14, 1
      %p74 = scmp.ne.s32.totalorder %s69, %s71
      %p75 = scmp.eq.s32.totalorder %s14, 0
      %p76 = por %p74, %p75
      %p77 = scmp.ne.s32.totalorder %s69, %s71
      %p78 = scmp.eq.s32.totalorder %s19, 1
      %p79 = por %p77, %p78
      %p80 = scmp.ne.s32.totalorder %s71, %s72
      %p81 = scmp.eq.s32.totalorder %s19, 0
      %p82 = por %p80, %p81
      %p83 = scmp.ne.s32.totalorder %s71, %s72
      %p84 = scmp.eq.s32.totalorder %s20, 1
      %p85 = por %p83, %p84
      %p87 = scmp.ne.s32.totalorder %s72, %s86
      %p88 = scmp.eq.s32.totalorder %s20, 0
      %p89 = por %p87, %p88
      %s91 = sadd.s32 %s90, 1
      %p94 = scmp.eq.s32.totalorder %s14, 1
      %p95 = scmp.ne.s32.totalorder %s90, %s92
      %p96 = scmp.eq.s32.totalorder %s14, 0
      %p97 = por %p95, %p96
      %p98 = scmp.ne.s32.totalorder %s90, %s92
      %p99 = scmp.eq.s32.totalorder %s19, 1
      %p100 = por %p98, %p99
      %p101 = scmp.ne.s32.totalorder %s92, %s93
      %p102 = scmp.eq.s32.totalorder %s19, 0
      %p103 = por %p101, %p102
      %p104 = scmp.ne.s32.totalorder %s92, %s93
      %p105 = scmp.eq.s32.totalorder %s20, 1
      %p106 = por %p104, %p105
      %p108 = scmp.ne.s32.totalorder %s93, %s107
      %p109 = scmp.eq.s32.totalorder %s20, 0
      %p110 = por %p108, %p109
      %s112 = sadd.s32 %s111, 1
      %p115 = scmp.eq.s32.totalorder %s14, 1
      %p116 = scmp.ne.s32.totalorder %s111, %s113
      %p117 = scmp.eq.s32.totalorder %s14, 0
      %p118 = por %p116, %p117
      %p119 = scmp.ne.s32.totalorder %s111, %s113
      %p120 = scmp.eq.s32.totalorder %s19, 1
      %p121 = por %p119, %p120
      %p122 = scmp.ne.s32.totalorder %s113, %s114
      %p123 = scmp.eq.s32.totalorder %s19, 0
      %p124 = por %p122, %p123
      %p125 = scmp.ne.s32.totalorder %s113, %s114
      %p126 = scmp.eq.s32.totalorder %s20, 1
      %p127 = por %p125, %p126
      %p129 = scmp.ne.s32.totalorder %s114, %s128
      %p130 = scmp.eq.s32.totalorder %s20, 0
      %p131 = por %p129, %p130
      %s132 = ssub.s32 %s14, %s21
      %p133 = scmp.eq.s32.totalorder %s132, 0
      %s135 = sadd.s32 %s134, 1
      %s136 = scalar_select %p133, %s134, %s135
      %p139 = pneg %p133
      %p140 = scmp.eq.s32.totalorder %s14, 1
      %p141 = por %p139, %p140
      %p142 = scmp.ne.s32.totalorder %s134, %s137
      %p143 = scmp.eq.s32.totalorder %s14, 0
      %p144 = por %p142, %p143
      %p145 = scmp.ne.s32.totalorder %s134, %s137
      %p146 = scmp.eq.s32.totalorder %s19, 1
      %p147 = por %p145, %p146
      %p148 = scmp.ne.s32.totalorder %s137, %s138
      %p149 = scmp.eq.s32.totalorder %s19, 0
      %p150 = por %p148, %p149
      %p151 = scmp.ne.s32.totalorder %s137, %s138
      %p152 = scmp.eq.s32.totalorder %s20, 1
      %p153 = por %p151, %p152
      %p155 = scmp.ne.s32.totalorder %s138, %s154
      %p156 = scmp.eq.s32.totalorder %s20, 0
      %p157 = por %p155, %p156
      %p158 = scmp.le.s32.totalorder 1, %s14
      %p159 = scmp.lt.s32.totalorder %s14, 3
      %p160 = pnand %p158, %p159
      %p161 = pneg %p160
      // Predicated region
      $region9: #{conv_layers_forward.1} parent=5 // pred_check
        _
      $region10: #{conv_layers_forward.1} parent=5 // pred_check_branch
        %163 = sbr.rel (%p160) target = $region12
      $region11: #{conv_layers_forward.1} parent=5 // pred_region
        %s164 = ssub.s32 %s14, 1
        // Predicated region
        $region13: #{conv_layers_forward.1} parent=11 // pred_check
          %p165 = pneg %p61
        $region14: #{conv_layers_forward.1} parent=11 // pred_check_branch
          %167 = sbr.rel (%p165) target = $region16
        $region15: #{conv_layers_forward.1} parent=11 // pred_region
          _
        $region16: #{conv_layers_forward.1} parent=11 // pred_fallthru
          _
        // Predicated region
        $region17: #{conv_layers_forward.1} parent=11 // pred_check
          %p168 = pneg %p82
        $region18: #{conv_layers_forward.1} parent=11 // pred_check_branch
          %170 = sbr.rel (%p168) target = $region20
        $region19: #{conv_layers_forward.1} parent=11 // pred_region
          _
        $region20: #{conv_layers_forward.1} parent=11 // pred_fallthru
          _
        // Predicated region
        $region21: #{conv_layers_forward.1} parent=11 // pred_check
          %p171 = pneg %p103
        $region22: #{conv_layers_forward.1} parent=11 // pred_check_branch
          %173 = sbr.rel (%p171) target = $region24
        $region23: #{conv_layers_forward.1} parent=11 // pred_region
          _
        $region24: #{conv_layers_forward.1} parent=11 // pred_fallthru
          _
        // Predicated region
        $region25: #{conv_layers_forward.1} parent=11 // pred_check
          %p174 = pneg %p124
        $region26: #{conv_layers_forward.1} parent=11 // pred_check_branch
          %176 = sbr.rel (%p174) target = $region28
        $region27: #{conv_layers_forward.1} parent=11 // pred_region
          _
        $region28: #{conv_layers_forward.1} parent=11 // pred_fallthru
          _
      $region12: #{conv_layers_forward.1} parent=5 // pred_fallthru
        _
      %p177 = scmp.lt.s32.totalorder %s14, 2
      // Predicated region
      $region29: #{conv_layers_forward.1} parent=5 // pred_check
        %p178 = pneg %p177
      $region30: #{conv_layers_forward.1} parent=5 // pred_check_branch
        %180 = sbr.rel (%p178) target = $region32
      $region31: #{conv_layers_forward.1} parent=5 // pred_region
        // Predicated region
        $region33: #{conv_layers_forward.1} parent=31 // pred_check
          %p181 = pneg %p34
        $region34: #{conv_layers_forward.1} parent=31 // pred_check_branch
          %183 = sbr.rel (%p181) target = $region36
        $region35: #{conv_layers_forward.1} parent=31 // pred_region
          %p184 = scmp.lt.s32.totalorder %s14, 1
          %s185 = scalar_select %p184, %s14, 1
          %s186 = smul.addr %s185, 32
          %s187 = smul.addr %s186, 8
          %s188 = scalar_lea.vmem %s0, %s187
        $region36: #{conv_layers_forward.1} parent=31 // pred_fallthru
          _
      $region32: #{conv_layers_forward.1} parent=5 // pred_fallthru
        _
      %p189 = scmp.le.s32.totalorder 1, %s14
      %p190 = scmp.lt.s32.totalorder %s14, 3
      %p191 = pnand %p189, %p190
      %p192 = pneg %p191
      // Predicated region
      $region37: #{conv_layers_forward.1} parent=5 // pred_check
        _
      $region38: #{conv_layers_forward.1} parent=5 // pred_check_branch
        %194 = sbr.rel (%p191) target = $region40
      $region39: #{conv_layers_forward.1} parent=5 // pred_region
        %s195 = ssub.s32 %s14, 1
        %p196 = scmp.lt.s32.totalorder %s19, 1
        %s197 = scalar_select %p196, %s19, 1
        %s198 = smul.addr %s197, 32
        %s199 = smul.addr %s198, 8
        %s200 = scalar_lea.vmem %s0, %s199
        %p201 = pneg %p40
        %p202 = pneg %p37
        %p203 = pneg %p61
        %p204 = pneg %p58
        %p205 = pneg %p82
        %p206 = pneg %p79
        %p207 = pneg %p103
        %p208 = pneg %p100
        %p209 = pneg %p124
        %p210 = pneg %p121
        %p211 = pneg %p150
        %p212 = pneg %p147
        %s213 = sand.u32 %s137, 1
        %s214 = scalar_lea.sflag [#allocation5], %s213
        %s215 = sand.u32 %s137, 1
        %s216 = smul.addr %s215, 64
        %s217 = scalar_lea.vmem [#allocation4], %s216
        %p218 = scmp.lt.s32.totalorder %s19, 1
        %s219 = scalar_select %p218, %s19, 1
        %s220 = smul.addr %s219, 32
        %s221 = smul.addr %s220, 8
        %s222 = scalar_lea.vmem %s0, %s221
        %v223 = vld [vmem:[%s222] sm:$0xff]
        %v224 = vld [vmem:[%s222 + $0x8] sm:$0xff]
        %v225 = vld [vmem:[%s222 + $0x10] sm:$0xff]
        %v226 = vld [vmem:[%s222 + $0x18] sm:$0xff]
        %v227 = vld [vmem:[%s222 + $0x20] sm:$0xff]
        %v228 = vld [vmem:[%s222 + $0x28] sm:$0xff]
        %v229 = vld [vmem:[%s222 + $0x30] sm:$0xff]
        %v230 = vld [vmem:[%s222 + $0x38] sm:$0xff]
        %v231 = vld [vmem:[%s222 + $0x40] sm:$0xff]
        %v232 = vld [vmem:[%s222 + $0x48] sm:$0xff]
        %v233 = vld [vmem:[%s222 + $0x50] sm:$0xff]
        %v234 = vld [vmem:[%s222 + $0x58] sm:$0xff]
        %v235 = vld [vmem:[%s222 + $0x60] sm:$0xff]
        %v236 = vld [vmem:[%s222 + $0x68] sm:$0xff]
        %v237 = vld [vmem:[%s222 + $0x70] sm:$0xff]
        %v238 = vld [vmem:[%s222 + $0x78] sm:$0xff]
        %v239 = vld [vmem:[%s222 + $0x80] sm:$0xff]
        %v240 = vld [vmem:[%s222 + $0x88] sm:$0xff]
        %v241 = vld [vmem:[%s222 + $0x90] sm:$0xff]
        %v242 = vld [vmem:[%s222 + $0x98] sm:$0xff]
        %v243 = vld [vmem:[%s222 + $0xa0] sm:$0xff]
        %v244 = vld [vmem:[%s222 + $0xa8] sm:$0xff]
        %v245 = vld [vmem:[%s222 + $0xb0] sm:$0xff]
        %v246 = vld [vmem:[%s222 + $0xb8] sm:$0xff]
        %v247 = vld [vmem:[%s222 + $0xc0] sm:$0xff]
        %v248 = vld [vmem:[%s222 + $0xc8] sm:$0xff]
        %v249 = vld [vmem:[%s222 + $0xd0] sm:$0xff]
        %v250 = vld [vmem:[%s222 + $0xd8] sm:$0xff]
        %v251 = vld [vmem:[%s222 + $0xe0] sm:$0xff]
        %v252 = vld [vmem:[%s222 + $0xe8] sm:$0xff]
        %v253 = vld [vmem:[%s222 + $0xf0] sm:$0xff]
        %v254 = vld [vmem:[%s222 + $0xf8] sm:$0xff]
        %v255 = vld [vmem:[%s1] sm:$0xff]
        %v256 = vld [vmem:[%s1 + $0x8] sm:$0xff]
        %v257 = vld [vmem:[%s1 + $0x10] sm:$0xff]
        %v258 = vld [vmem:[%s1 + $0x18] sm:$0x7]
        %v259 = vld [vmem:[%s2] sm:$0x1]
        %v261 = vlaneseq
        %v262 = vshrl.u32 %v261, 7
        %v263 = vsub.s32 0, %v262
        %v264 = vrot.slane %v259, %v263
        %vm266 = vcmask 220160
        %v268 = vsel %vm266, %v223, 0
        %v271 = vsel %vm266, %v224, 0
        %v274 = vsel %vm266, %v225, 0
        %v277 = vsel %vm266, %v226, 0
        %v280 = vsel %vm266, %v227, 0
        %v283 = vsel %vm266, %v228, 0
        %v286 = vsel %vm266, %v229, 0
        %v289 = vsel %vm266, %v230, 0
        %v292 = vsel %vm266, %v231, 0
        %v295 = vsel %vm266, %v232, 0
        %v298 = vsel %vm266, %v233, 0
        %v301 = vsel %vm266, %v234, 0
        %v304 = vsel %vm266, %v235, 0
        %v307 = vsel %vm266, %v236, 0
        %v310 = vsel %vm266, %v237, 0
        %v313 = vsel %vm266, %v238, 0
        %v316 = vsel %vm266, %v239, 0
        %v319 = vsel %vm266, %v240, 0
        %v322 = vsel %vm266, %v241, 0
        %v325 = vsel %vm266, %v242, 0
        %v328 = vsel %vm266, %v243, 0
        %v331 = vsel %vm266, %v244, 0
        %v334 = vsel %vm266, %v245, 0
        %v337 = vsel %vm266, %v246, 0
        %v340 = vsel %vm266, %v247, 0
        %v343 = vsel %vm266, %v248, 0
        %v346 = vsel %vm266, %v249, 0
        %v349 = vsel %vm266, %v250, 0
        %v352 = vsel %vm266, %v251, 0
        %v355 = vsel %vm266, %v252, 0
        %v358 = vsel %vm266, %v253, 0
        %v361 = vsel %vm266, %v254, 0
        %vm363 = vcmask 1042432
        %v365 = vsel %vm363, %v258, 0
        %367 = vmatprep.subr.mxu0 0.0
        %368 = vmatpush1.msra.mxu0 %v255
        %369 = vmatprep.subr.mxu0 0.0
        %370 = vmatpush1.msra.mxu0 %v256
        %371 = vmatprep.subr.mxu0 0.0
        %372 = vmatpush1.msra.mxu0 %v257
        %373 = vmatprep.subr.mxu0 0.0
        %374 = vmatpush1.msra.mxu0 %v365
        %375 = vmatprep.subr.mxu0 0.0
        %376 = vmatpush1.msra.mxu0 0.0
        %377 = vmatprep.subr.mxu0 0.0
        %378 = vmatpush1.msra.mxu0 0.0
        %379 = vmatprep.subr.mxu0 0.0
        %380 = vmatpush1.msra.mxu0 0.0
        %381 = vmatprep.subr.mxu0 0.0
        %382 = vmatpush1.msra.mxu0 0.0
        %383 = vmatprep.subr.mxu0 0.0
        %384 = vmatpush1.msra.mxu0 0.0
        %385 = vmatprep.subr.mxu0 0.0
        %386 = vmatpush1.msra.mxu0 0.0
        %387 = vmatprep.subr.mxu0 0.0
        %388 = vmatpush1.msra.mxu0 0.0
        %389 = vmatprep.subr.mxu0 0.0
        %390 = vmatpush1.msra.mxu0 0.0
        %391 = vmatprep.subr.mxu0 0.0
        %392 = vmatpush1.msra.mxu0 0.0
        %393 = vmatprep.subr.mxu0 0.0
        %394 = vmatpush1.msra.mxu0 0.0
        %395 = vmatprep.subr.mxu0 0.0
        %396 = vmatpush1.msra.mxu0 0.0
        %397 = vmatprep.subr.mxu0 0.0
        %398 = vmatpush1.msra.mxu0 0.0
        %399 = vmatprep.subr.mxu0 0.0
        %400 = vmatpush1.msra.mxu0 0.0
        %401 = vmatprep.subr.mxu0 0.0
        %402 = vmatpush1.msra.mxu0 0.0
        %403 = vmatprep.subr.mxu0 0.0
        %404 = vmatpush1.msra.mxu0 0.0
        %405 = vmatprep.subr.mxu0 0.0
        %406 = vmatpush1.msra.mxu0 0.0
        %407 = vmatprep.subr.mxu0 0.0
        %408 = vmatpush1.msra.mxu0 0.0
        %409 = vmatprep.subr.mxu0 0.0
        %410 = vmatpush1.msra.mxu0 0.0
        %411 = vmatprep.subr.mxu0 0.0
        %412 = vmatpush1.msra.mxu0 0.0
        %413 = vmatprep.subr.mxu0 0.0
        %414 = vmatpush1.msra.mxu0 0.0
        %415 = vmatprep.subr.mxu0 0.0
        %416 = vmatpush1.msra.mxu0 0.0
        %417 = vmatprep.subr.mxu0 0.0
        %418 = vmatpush1.msra.mxu0 0.0
        %419 = vmatprep.subr.mxu0 0.0
        %420 = vmatpush1.msra.mxu0 0.0
        %421 = vmatprep.subr.mxu0 0.0
        %422 = vmatpush1.msra.mxu0 0.0
        %423 = vmatprep.subr.mxu0 0.0
        %424 = vmatpush1.msra.mxu0 0.0
        %425 = vmatprep.subr.mxu0 0.0
        %426 = vmatpush1.msra.mxu0 0.0
        %427 = vmatprep.subr.mxu0 0.0
        %428 = vmatpush1.msra.mxu0 0.0
        %429 = vmatprep.subr.mxu0 0.0
        %430 = vmatpush1.msra.mxu0 0.0
        %431 = vmatprep.mubr.f32.mxu0 0.0
        %432 = vmatmul.mubr.f32.gmra.mrb[0].mxu0 %v268
        %v433 = vpop.f32.mrb[0].mxu0
        %v434 = vadd.f32 %v264, %v433
        %v435 = vpop.f32.mrb[0].mxu0
        %436 = vmatprep.mubr.f32.mxu0 0.0
        %437 = vmatmul.mubr.f32.gmra.mrb[0].mxu0 %v271
        %v438 = vpop.f32.mrb[0].mxu0
        %v439 = vadd.f32 %v264, %v438
        %v440 = vpop.f32.mrb[0].mxu0
        %441 = vmatprep.mubr.f32.mxu0 0.0
        %442 = vmatmul.mubr.f32.gmra.mrb[0].mxu0 %v274
        %v443 = vpop.f32.mrb[0].mxu0
        %v444 = vadd.f32 %v264, %v443
        %v445 = vpop.f32.mrb[0].mxu0
        %446 = vmatprep.mubr.f32.mxu0 0.0
        %447 = vmatmul.mubr.f32.gmra.mrb[0].mxu0 %v277
        %v448 = vpop.f32.mrb[0].mxu0
        %v449 = vadd.f32 %v264, %v448
        %v450 = vpop.f32.mrb[0].mxu0
        %451 = vmatprep.mubr.f32.mxu0 0.0
        %452 = vmatmul.mubr.f32.gmra.mrb[0].mxu0 %v280
        %v453 = vpop.f32.mrb[0].mxu0
        %v454 = vadd.f32 %v264, %v453
        %v455 = vpop.f32.mrb[0].mxu0
        %456 = vmatprep.mubr.f32.mxu0 0.0
        %457 = vmatmul.mubr.f32.gmra.mrb[0].mxu0 %v283
        %v458 = vpop.f32.mrb[0].mxu0
        %v459 = vadd.f32 %v264, %v458
        %v460 = vpop.f32.mrb[0].mxu0
        %461 = vmatprep.mubr.f32.mxu0 0.0
        %462 = vmatmul.mubr.f32.gmra.mrb[0].mxu0 %v286
        %v463 = vpop.f32.mrb[0].mxu0
        %v464 = vadd.f32 %v264, %v463
        %v465 = vpop.f32.mrb[0].mxu0
        %466 = vmatprep.mubr.f32.mxu0 0.0
        %467 = vmatmul.mubr.f32.gmra.mrb[0].mxu0 %v289
        %v468 = vpop.f32.mrb[0].mxu0
        %v469 = vadd.f32 %v264, %v468
        %v470 = vpop.f32.mrb[0].mxu0
        %471 = vmatprep.mubr.f32.mxu0 0.0
        %472 = vmatmul.mubr.f32.gmra.mrb[0].mxu0 %v292
        %v473 = vpop.f32.mrb[0].mxu0
        %v474 = vadd.f32 %v264, %v473
        %v475 = vpop.f32.mrb[0].mxu0
        %476 = vmatprep.mubr.f32.mxu0 0.0
        %477 = vmatmul.mubr.f32.gmra.mrb[0].mxu0 %v295
        %v478 = vpop.f32.mrb[0].mxu0
        %v479 = vadd.f32 %v264, %v478
        %v480 = vpop.f32.mrb[0].mxu0
        %481 = vmatprep.mubr.f32.mxu0 0.0
        %482 = vmatmul.mubr.f32.gmra.mrb[0].mxu0 %v298
        %v483 = vpop.f32.mrb[0].mxu0
        %v484 = vadd.f32 %v264, %v483
        %v485 = vpop.f32.mrb[0].mxu0
        %486 = vmatprep.mubr.f32.mxu0 0.0
        %487 = vmatmul.mubr.f32.gmra.mrb[0].mxu0 %v301
        %v488 = vpop.f32.mrb[0].mxu0
        %v489 = vadd.f32 %v264, %v488
        %v490 = vpop.f32.mrb[0].mxu0
        %491 = vmatprep.mubr.f32.mxu0 0.0
        %492 = vmatmul.mubr.f32.gmra.mrb[0].mxu0 %v304
        %v493 = vpop.f32.mrb[0].mxu0
        %v494 = vadd.f32 %v264, %v493
        %v495 = vpop.f32.mrb[0].mxu0
        %496 = vmatprep.mubr.f32.mxu0 0.0
        %497 = vmatmul.mubr.f32.gmra.mrb[0].mxu0 %v307
        %v498 = vpop.f32.mrb[0].mxu0
        %v499 = vadd.f32 %v264, %v498
        %v500 = vpop.f32.mrb[0].mxu0
        %501 = vmatprep.mubr.f32.mxu0 0.0
        %502 = vmatmul.mubr.f32.gmra.mrb[0].mxu0 %v310
        %v503 = vpop.f32.mrb[0].mxu0
        %v504 = vadd.f32 %v264, %v503
        %v505 = vpop.f32.mrb[0].mxu0
        %506 = vmatprep.mubr.f32.mxu0 0.0
        %507 = vmatmul.mubr.f32.gmra.mrb[0].mxu0 %v313
        %v508 = vpop.f32.mrb[0].mxu0
        %v509 = vadd.f32 %v264, %v508
        %v510 = vpop.f32.mrb[0].mxu0
        %511 = vmatprep.mubr.f32.mxu0 0.0
        %512 = vmatmul.mubr.f32.gmra.mrb[0].mxu0 %v316
        %v513 = vpop.f32.mrb[0].mxu0
        %v514 = vadd.f32 %v264, %v513
        %v515 = vpop.f32.mrb[0].mxu0
        %516 = vmatprep.mubr.f32.mxu0 0.0
        %517 = vmatmul.mubr.f32.gmra.mrb[0].mxu0 %v319
        %v518 = vpop.f32.mrb[0].mxu0
        %v519 = vadd.f32 %v264, %v518
        %v520 = vpop.f32.mrb[0].mxu0
        %521 = vmatprep.mubr.f32.mxu0 0.0
        %522 = vmatmul.mubr.f32.gmra.mrb[0].mxu0 %v322
        %v523 = vpop.f32.mrb[0].mxu0
        %v524 = vadd.f32 %v264, %v523
        %v525 = vpop.f32.mrb[0].mxu0
        %526 = vmatprep.mubr.f32.mxu0 0.0
        %527 = vmatmul.mubr.f32.gmra.mrb[0].mxu0 %v325
        %v528 = vpop.f32.mrb[0].mxu0
        %v529 = vadd.f32 %v264, %v528
        %v530 = vpop.f32.mrb[0].mxu0
        %531 = vmatprep.mubr.f32.mxu0 0.0
        %532 = vmatmul.mubr.f32.gmra.mrb[0].mxu0 %v328
        %v533 = vpop.f32.mrb[0].mxu0
        %v534 = vadd.f32 %v264, %v533
        %v535 = vpop.f32.mrb[0].mxu0
        %536 = vmatprep.mubr.f32.mxu0 0.0
        %537 = vmatmul.mubr.f32.gmra.mrb[0].mxu0 %v331
        %v538 = vpop.f32.mrb[0].mxu0
        %v539 = vadd.f32 %v264, %v538
        %v540 = vpop.f32.mrb[0].mxu0
        %541 = vmatprep.mubr.f32.mxu0 0.0
        %542 = vmatmul.mubr.f32.gmra.mrb[0].mxu0 %v334
        %v543 = vpop.f32.mrb[0].mxu0
        %v544 = vadd.f32 %v264, %v543
        %v545 = vpop.f32.mrb[0].mxu0
        %546 = vmatprep.mubr.f32.mxu0 0.0
        %547 = vmatmul.mubr.f32.gmra.mrb[0].mxu0 %v337
        %v548 = vpop.f32.mrb[0].mxu0
        %v549 = vadd.f32 %v264, %v548
        %v550 = vpop.f32.mrb[0].mxu0
        %551 = vmatprep.mubr.f32.mxu0 0.0
        %552 = vmatmul.mubr.f32.gmra.mrb[0].mxu0 %v340
        %v553 = vpop.f32.mrb[0].mxu0
        %v554 = vadd.f32 %v264, %v553
        %v555 = vpop.f32.mrb[0].mxu0
        %556 = vmatprep.mubr.f32.mxu0 0.0
        %557 = vmatmul.mubr.f32.gmra.mrb[0].mxu0 %v343
        %v558 = vpop.f32.mrb[0].mxu0
        %v559 = vadd.f32 %v264, %v558
        %v560 = vpop.f32.mrb[0].mxu0
        %561 = vmatprep.mubr.f32.mxu0 0.0
        %562 = vmatmul.mubr.f32.gmra.mrb[0].mxu0 %v346
        %v563 = vpop.f32.mrb[0].mxu0
        %v564 = vadd.f32 %v264, %v563
        %v565 = vpop.f32.mrb[0].mxu0
        %566 = vmatprep.mubr.f32.mxu0 0.0
        %567 = vmatmul.mubr.f32.gmra.mrb[0].mxu0 %v349
        %v568 = vpop.f32.mrb[0].mxu0
        %v569 = vadd.f32 %v264, %v568
        %v570 = vpop.f32.mrb[0].mxu0
        %571 = vmatprep.mubr.f32.mxu0 0.0
        %572 = vmatmul.mubr.f32.gmra.mrb[0].mxu0 %v352
        %v573 = vpop.f32.mrb[0].mxu0
        %v574 = vadd.f32 %v264, %v573
        %v575 = vpop.f32.mrb[0].mxu0
        %576 = vmatprep.mubr.f32.mxu0 0.0
        %577 = vmatmul.mubr.f32.gmra.mrb[0].mxu0 %v355
        %v578 = vpop.f32.mrb[0].mxu0
        %v579 = vadd.f32 %v264, %v578
        %v580 = vpop.f32.mrb[0].mxu0
        %581 = vmatprep.mubr.f32.mxu0 0.0
        %582 = vmatmul.mubr.f32.gmra.mrb[0].mxu0 %v358
        %v583 = vpop.f32.mrb[0].mxu0
        %v584 = vadd.f32 %v264, %v583
        %v585 = vpop.f32.mrb[0].mxu0
        %586 = vmatprep.mubr.f32.mxu0 0.0
        %587 = vmatmul.mubr.f32.gmra.mrb[0].mxu0 %v361
        %v588 = vpop.f32.mrb[0].mxu0
        %v589 = vadd.f32 %v264, %v588
        %v590 = vpop.f32.mrb[0].mxu0
        %591 = vdwg.mxu0
        %v592 = vmax.f32 %v434, 0.0
        %v593 = vmax.f32 %v439, 0.0
        %v594 = vmax.f32 %v444, 0.0
        %v595 = vmax.f32 %v449, 0.0
        %v596 = vmax.f32 %v454, 0.0
        %v597 = vmax.f32 %v459, 0.0
        %v598 = vmax.f32 %v464, 0.0
        %v599 = vmax.f32 %v469, 0.0
        %v600 = vmax.f32 %v474, 0.0
        %v601 = vmax.f32 %v479, 0.0
        %v602 = vmax.f32 %v484, 0.0
        %v603 = vmax.f32 %v489, 0.0
        %v604 = vmax.f32 %v494, 0.0
        %v605 = vmax.f32 %v499, 0.0
        %v606 = vmax.f32 %v504, 0.0
        %v607 = vmax.f32 %v509, 0.0
        %v608 = vmax.f32 %v514, 0.0
        %v609 = vmax.f32 %v519, 0.0
        %v610 = vmax.f32 %v524, 0.0
        %v611 = vmax.f32 %v529, 0.0
        %v612 = vmax.f32 %v534, 0.0
        %v613 = vmax.f32 %v539, 0.0
        %v614 = vmax.f32 %v544, 0.0
        %v615 = vmax.f32 %v549, 0.0
        %v616 = vmax.f32 %v554, 0.0
        %v617 = vmax.f32 %v559, 0.0
        %v618 = vmax.f32 %v564, 0.0
        %v619 = vmax.f32 %v569, 0.0
        %v620 = vmax.f32 %v574, 0.0
        %v621 = vmax.f32 %v579, 0.0
        %v622 = vmax.f32 %v584, 0.0
        %v623 = vmax.f32 %v589, 0.0
        %vm624 = vcmask 392192
        %625 = vst.msk [vmem:[#allocation2] sm:$0xff] %vm624, 0.0
        %626 = vst.msk [vmem:[#allocation2 + $0x8] sm:$0xff] %vm624, 0.0
        %vm627 = vcmask 386048
        %628 = vst.msk [vmem:[#allocation2 + $0x10] sm:$0x3] %vm627, 0.0
        %629 = vst.msk [vmem:[#allocation2 + $0x18] sm:$0xff] %vm624, 0.0
        %630 = vst.msk [vmem:[#allocation2 + $0x20] sm:$0xff] %vm624, 0.0
        %631 = vst.msk [vmem:[#allocation2 + $0x28] sm:$0x3] %vm627, 0.0
        %632 = vst.msk [vmem:[#allocation2 + $0x30] sm:$0xff] %vm624, 0.0
        %633 = vst.msk [vmem:[#allocation2 + $0x38] sm:$0xff] %vm624, 0.0
        %634 = vst.msk [vmem:[#allocation2 + $0x40] sm:$0x3] %vm627, 0.0
        %635 = vst.msk [vmem:[#allocation2 + $0x48] sm:$0xff] %vm624, 0.0
        %636 = vst.msk [vmem:[#allocation2 + $0x50] sm:$0xff] %vm624, 0.0
        %637 = vst.msk [vmem:[#allocation2 + $0x58] sm:$0x3] %vm627, 0.0
        %638 = vst.msk [vmem:[#allocation2 + $0x60] sm:$0xff] %vm624, 0.0
        %639 = vst.msk [vmem:[#allocation2 + $0x68] sm:$0xff] %vm624, 0.0
        %640 = vst.msk [vmem:[#allocation2 + $0x70] sm:$0x3] %vm627, 0.0
        %641 = vst.msk [vmem:[#allocation2 + $0x78] sm:$0xff] %vm624, 0.0
        %642 = vst.msk [vmem:[#allocation2 + $0x80] sm:$0xff] %vm624, 0.0
        %643 = vst.msk [vmem:[#allocation2 + $0x88] sm:$0x3] %vm627, 0.0
        %644 = vst.msk [vmem:[#allocation2 + $0x90] sm:$0xff] %vm624, 0.0
        %645 = vst.msk [vmem:[#allocation2 + $0x98] sm:$0xff] %vm624, 0.0
        %646 = vst.msk [vmem:[#allocation2 + $0xa0] sm:$0x3] %vm627, 0.0
        %647 = vst.msk [vmem:[#allocation2 + $0xa8] sm:$0xff] %vm624, 0.0
        %648 = vst.msk [vmem:[#allocation2 + $0xb0] sm:$0xff] %vm624, 0.0
        %649 = vst.msk [vmem:[#allocation2 + $0xb8] sm:$0x3] %vm627, 0.0
        %650 = vst.msk [vmem:[#allocation2 + $0xc0] sm:$0xff] %vm624, 0.0
        %651 = vst.msk [vmem:[#allocation2 + $0xc8] sm:$0xff] %vm624, 0.0
        %652 = vst.msk [vmem:[#allocation2 + $0xd0] sm:$0x3] %vm627, 0.0
        %653 = vst.msk [vmem:[#allocation2 + $0xd8] sm:$0xff] %vm624, 0.0
        %654 = vst.msk [vmem:[#allocation2 + $0xe0] sm:$0xff] %vm624, 0.0
        %655 = vst.msk [vmem:[#allocation2 + $0xe8] sm:$0x3] %vm627, 0.0
        %656 = vst.msk [vmem:[#allocation2 + $0xf0] sm:$0xff] %vm624, 0.0
        %657 = vst.msk [vmem:[#allocation2 + $0xf8] sm:$0xff] %vm624, 0.0
        %658 = vst.msk [vmem:[#allocation2 + $0x100] sm:$0x3] %vm627, 0.0
        %659 = vst.msk [vmem:[#allocation2 + $0x108] sm:$0xff] %vm624, 0.0
        %660 = vst.msk [vmem:[#allocation2 + $0x110] sm:$0xff] %vm624, 0.0
        %661 = vst.msk [vmem:[#allocation2 + $0x118] sm:$0x3] %vm627, 0.0
        %662 = vst.msk [vmem:[#allocation2 + $0x120] sm:$0xff] %vm624, 0.0
        %663 = vst.msk [vmem:[#allocation2 + $0x128] sm:$0xff] %vm624, 0.0
        %664 = vst.msk [vmem:[#allocation2 + $0x130] sm:$0x3] %vm627, 0.0
        %665 = vst.msk [vmem:[#allocation2 + $0x138] sm:$0xff] %vm624, 0.0
        %666 = vst.msk [vmem:[#allocation2 + $0x140] sm:$0xff] %vm624, 0.0
        %667 = vst.msk [vmem:[#allocation2 + $0x148] sm:$0x3] %vm627, 0.0
        %668 = vst.msk [vmem:[#allocation2 + $0x150] sm:$0xff] %vm624, 0.0
        %669 = vst.msk [vmem:[#allocation2 + $0x158] sm:$0xff] %vm624, 0.0
        %670 = vst.msk [vmem:[#allocation2 + $0x160] sm:$0x3] %vm627, 0.0
        %671 = vst.msk [vmem:[#allocation2 + $0x168] sm:$0xff] %vm624, 0.0
        %672 = vst.msk [vmem:[#allocation2 + $0x170] sm:$0xff] %vm624, 0.0
        %673 = vst.msk [vmem:[#allocation2 + $0x178] sm:$0x3] %vm627, 0.0
        %674 = vst.msk [vmem:[#allocation2 + $0x180] sm:$0xff] %vm624, 0.0
        %675 = vst.msk [vmem:[#allocation2 + $0x188] sm:$0xff] %vm624, 0.0
        %676 = vst.msk [vmem:[#allocation2 + $0x190] sm:$0x3] %vm627, 0.0
        %677 = vst.msk [vmem:[#allocation2 + $0x198] sm:$0xff] %vm624, 0.0
        %678 = vst.msk [vmem:[#allocation2 + $0x1a0] sm:$0xff] %vm624, 0.0
        %679 = vst.msk [vmem:[#allocation2 + $0x1a8] sm:$0x3] %vm627, 0.0
        %s680 = scalar_lea.vmem [#allocation2], 24
        %681 = vst.msk [vmem:[%s680 + $0x1] sm:$0xff] %vm624, %v592
        %682 = vst.msk [vmem:[%s680 + $0x9] sm:$0xff] %vm624, %v593
        %683 = vst.msk [vmem:[%s680 + $0x19] sm:$0xff] %vm624, %v594
        %684 = vst.msk [vmem:[%s680 + $0x21] sm:$0xff] %vm624, %v595
        %685 = vst.msk [vmem:[%s680 + $0x31] sm:$0xff] %vm624, %v596
        %686 = vst.msk [vmem:[%s680 + $0x39] sm:$0xff] %vm624, %v597
        %687 = vst.msk [vmem:[%s680 + $0x49] sm:$0xff] %vm624, %v598
        %688 = vst.msk [vmem:[%s680 + $0x51] sm:$0xff] %vm624, %v599
        %689 = vst.msk [vmem:[%s680 + $0x61] sm:$0xff] %vm624, %v600
        %690 = vst.msk [vmem:[%s680 + $0x69] sm:$0xff] %vm624, %v601
        %691 = vst.msk [vmem:[%s680 + $0x79] sm:$0xff] %vm624, %v602
        %692 = vst.msk [vmem:[%s680 + $0x81] sm:$0xff] %vm624, %v603
        %693 = vst.msk [vmem:[%s680 + $0x91] sm:$0xff] %vm624, %v604
        %694 = vst.msk [vmem:[%s680 + $0x99] sm:$0xff] %vm624, %v605
        %695 = vst.msk [vmem:[%s680 + $0xa9] sm:$0xff] %vm624, %v606
        %696 = vst.msk [vmem:[%s680 + $0xb1] sm:$0xff] %vm624, %v607
        %697 = vst.msk [vmem:[%s680 + $0xc1] sm:$0xff] %vm624, %v608
        %698 = vst.msk [vmem:[%s680 + $0xc9] sm:$0xff] %vm624, %v609
        %699 = vst.msk [vmem:[%s680 + $0xd9] sm:$0xff] %vm624, %v610
        %700 = vst.msk [vmem:[%s680 + $0xe1] sm:$0xff] %vm624, %v611
        %701 = vst.msk [vmem:[%s680 + $0xf1] sm:$0xff] %vm624, %v612
        %702 = vst.msk [vmem:[%s680 + $0xf9] sm:$0xff] %vm624, %v613
        %703 = vst.msk [vmem:[%s680 + $0x109] sm:$0xff] %vm624, %v614
        %704 = vst.msk [vmem:[%s680 + $0x111] sm:$0xff] %vm624, %v615
        %705 = vst.msk [vmem:[%s680 + $0x121] sm:$0xff] %vm624, %v616
        %706 = vst.msk [vmem:[%s680 + $0x129] sm:$0xff] %vm624, %v617
        %707 = vst.msk [vmem:[%s680 + $0x139] sm:$0xff] %vm624, %v618
        %708 = vst.msk [vmem:[%s680 + $0x141] sm:$0xff] %vm624, %v619
        %709 = vst.msk [vmem:[%s680 + $0x151] sm:$0xff] %vm624, %v620
        %710 = vst.msk [vmem:[%s680 + $0x159] sm:$0xff] %vm624, %v621
        %711 = vst.msk [vmem:[%s680 + $0x169] sm:$0xff] %vm624, %v622
        %712 = vst.msk [vmem:[%s680 + $0x171] sm:$0xff] %vm624, %v623
        %v713 = vld [vmem:[#allocation2] sm:$0xff]
        %v714 = vld [vmem:[#allocation2 + $0x8] sm:$0xff]
        %v715 = vld [vmem:[#allocation2 + $0x18] sm:$0xff]
        %v716 = vld [vmem:[#allocation2 + $0x20] sm:$0xff]
        %v717 = vld [vmem:[#allocation2 + $0x30] sm:$0xff]
        %v718 = vld [vmem:[#allocation2 + $0x38] sm:$0xff]
        %v719 = vld [vmem:[#allocation2 + $0x48] sm:$0xff]
        %v720 = vld [vmem:[#allocation2 + $0x50] sm:$0xff]
        %v721 = vld [vmem:[#allocation2 + $0x60] sm:$0xff]
        %v722 = vld [vmem:[#allocation2 + $0x68] sm:$0xff]
        %v723 = vld [vmem:[#allocation2 + $0x78] sm:$0xff]
        %v724 = vld [vmem:[#allocation2 + $0x80] sm:$0xff]
        %v725 = vld [vmem:[#allocation2 + $0x90] sm:$0xff]
        %v726 = vld [vmem:[#allocation2 + $0x98] sm:$0xff]
        %v727 = vld [vmem:[#allocation2 + $0xa8] sm:$0xff]
        %v728 = vld [vmem:[#allocation2 + $0xb0] sm:$0xff]
        %v729 = vld [vmem:[#allocation2 + $0xc0] sm:$0xff]
        %v730 = vld [vmem:[#allocation2 + $0xc8] sm:$0xff]
        %v731 = vld [vmem:[#allocation2 + $0xd8] sm:$0xff]
        %v732 = vld [vmem:[#allocation2 + $0xe0] sm:$0xff]
        %v733 = vld [vmem:[#allocation2 + $0xf0] sm:$0xff]
        %v734 = vld [vmem:[#allocation2 + $0xf8] sm:$0xff]
        %v735 = vld [vmem:[#allocation2 + $0x108] sm:$0xff]
        %v736 = vld [vmem:[#allocation2 + $0x110] sm:$0xff]
        %v737 = vld [vmem:[#allocation2 + $0x120] sm:$0xff]
        %v738 = vld [vmem:[#allocation2 + $0x128] sm:$0xff]
        %v739 = vld [vmem:[#allocation2 + $0x138] sm:$0xff]
        %v740 = vld [vmem:[#allocation2 + $0x140] sm:$0xff]
        %v741 = vld [vmem:[#allocation2 + $0x150] sm:$0xff]
        %v742 = vld [vmem:[#allocation2 + $0x158] sm:$0xff]
        %v743 = vld [vmem:[#allocation2 + $0x168] sm:$0xff]
        %v744 = vld [vmem:[#allocation2 + $0x170] sm:$0xff]
        %v745 = vld [vmem:[%s3] sm:$0xff]
        %v746 = vld [vmem:[%s3 + $0x8] sm:$0xff]
        %v747 = vld [vmem:[%s3 + $0x10] sm:$0xff]
        %v748 = vld [vmem:[%s3 + $0x18] sm:$0xff]
        %v749 = vld [vmem:[%s3 + $0x20] sm:$0xff]
        %v750 = vld [vmem:[%s3 + $0x28] sm:$0xff]
        %v751 = vld [vmem:[#allocation2 + $0x1] sm:$0xff]
        %v752 = vld [vmem:[#allocation2 + $0x9] sm:$0xff]
        %v753 = vld [vmem:[#allocation2 + $0x19] sm:$0xff]
        %v754 = vld [vmem:[#allocation2 + $0x21] sm:$0xff]
        %v755 = vld [vmem:[#allocation2 + $0x31] sm:$0xff]
        %v756 = vld [vmem:[#allocation2 + $0x39] sm:$0xff]
        %v757 = vld [vmem:[#allocation2 + $0x49] sm:$0xff]
        %v758 = vld [vmem:[#allocation2 + $0x51] sm:$0xff]
        %v759 = vld [vmem:[#allocation2 + $0x61] sm:$0xff]
        %v760 = vld [vmem:[#allocation2 + $0x69] sm:$0xff]
        %v761 = vld [vmem:[#allocation2 + $0x79] sm:$0xff]
        %v762 = vld [vmem:[#allocation2 + $0x81] sm:$0xff]
        %v763 = vld [vmem:[#allocation2 + $0x91] sm:$0xff]
        %v764 = vld [vmem:[#allocation2 + $0x99] sm:$0xff]
        %v765 = vld [vmem:[#allocation2 + $0xa9] sm:$0xff]
        %v766 = vld [vmem:[#allocation2 + $0xb1] sm:$0xff]
        %v767 = vld [vmem:[#allocation2 + $0xc1] sm:$0xff]
        %v768 = vld [vmem:[#allocation2 + $0xc9] sm:$0xff]
        %v769 = vld [vmem:[#allocation2 + $0xd9] sm:$0xff]
        %v770 = vld [vmem:[#allocation2 + $0xe1] sm:$0xff]
        %v771 = vld [vmem:[#allocation2 + $0xf1] sm:$0xff]
        %v772 = vld [vmem:[#allocation2 + $0xf9] sm:$0xff]
        %v773 = vld [vmem:[#allocation2 + $0x109] sm:$0xff]
        %v774 = vld [vmem:[#allocation2 + $0x111] sm:$0xff]
        %v775 = vld [vmem:[#allocation2 + $0x121] sm:$0xff]
        %v776 = vld [vmem:[#allocation2 + $0x129] sm:$0xff]
        %v777 = vld [vmem:[#allocation2 + $0x139] sm:$0xff]
        %v778 = vld [vmem:[#allocation2 + $0x141] sm:$0xff]
        %v779 = vld [vmem:[#allocation2 + $0x151] sm:$0xff]
        %v780 = vld [vmem:[#allocation2 + $0x159] sm:$0xff]
        %v781 = vld [vmem:[#allocation2 + $0x169] sm:$0xff]
        %v782 = vld [vmem:[#allocation2 + $0x171] sm:$0xff]
        %s783 = scalar_lea.vmem %s3, 48
        %v784 = vld [vmem:[%s783] sm:$0xff]
        %v785 = vld [vmem:[%s783 + $0x8] sm:$0xff]
        %v786 = vld [vmem:[%s783 + $0x10] sm:$0xff]
        %v787 = vld [vmem:[%s783 + $0x18] sm:$0xff]
        %v788 = vld [vmem:[%s783 + $0x20] sm:$0xff]
        %v789 = vld [vmem:[%s783 + $0x28] sm:$0xff]
        %v791 = vsel %vm624, %v751, 0
        %v794 = vsel %vm624, %v752, 0
        %v797 = vsel %vm624, %v753, 0
        %v800 = vsel %vm624, %v754, 0
        %v803 = vsel %vm624, %v755, 0
        %v806 = vsel %vm624, %v756, 0
        %v809 = vsel %vm624, %v757, 0
        %v812 = vsel %vm624, %v758, 0
        %v815 = vsel %vm624, %v759, 0
        %v818 = vsel %vm624, %v760, 0
        %v821 = vsel %vm624, %v761, 0
        %v824 = vsel %vm624, %v762, 0
        %v827 = vsel %vm624, %v763, 0
        %v830 = vsel %vm624, %v764, 0
        %v833 = vsel %vm624, %v765, 0
        %v836 = vsel %vm624, %v766, 0
        %v839 = vsel %vm624, %v767, 0
        %v842 = vsel %vm624, %v768, 0
        %v845 = vsel %vm624, %v769, 0
        %v848 = vsel %vm624, %v770, 0
        %v851 = vsel %vm624, %v771, 0
        %v854 = vsel %vm624, %v772, 0
        %v857 = vsel %vm624, %v773, 0
        %v860 = vsel %vm624, %v774, 0
        %v863 = vsel %vm624, %v775, 0
        %v866 = vsel %vm624, %v776, 0
        %v869 = vsel %vm624, %v777, 0
        %v872 = vsel %vm624, %v778, 0
        %v875 = vsel %vm624, %v779, 0
        %v878 = vsel %vm624, %v780, 0
        %v881 = vsel %vm624, %v781, 0
        %v884 = vsel %vm624, %v782, 0
        %886 = vmatprep.subr.mxu0 0.0
        %887 = vmatpush1.msra.mxu0 %v784
        %888 = vmatprep.subr.mxu0 0.0
        %889 = vmatpush1.msra.mxu0 %v785
        %890 = vmatprep.subr.mxu0 0.0
        %891 = vmatpush1.msra.mxu0 %v786
        %892 = vmatprep.subr.mxu0 0.0
        %893 = vmatpush1.msra.mxu0 %v787
        %894 = vmatprep.subr.mxu0 0.0
        %895 = vmatpush1.msra.mxu0 %v788
        %896 = vmatprep.subr.mxu0 0.0
        %897 = vmatpush1.msra.mxu0 %v789
        %898 = vmatprep.subr.mxu0 0.0
        %899 = vmatpush1.msra.mxu0 0.0
        %900 = vmatprep.subr.mxu0 0.0
        %901 = vmatpush1.msra.mxu0 0.0
        %902 = vmatprep.subr.mxu0 0.0
        %903 = vmatpush1.msra.mxu0 0.0
        %904 = vmatprep.subr.mxu0 0.0
        %905 = vmatpush1.msra.mxu0 0.0
        %906 = vmatprep.subr.mxu0 0.0
        %907 = vmatpush1.msra.mxu0 0.0
        %908 = vmatprep.subr.mxu0 0.0
        %909 = vmatpush1.msra.mxu0 0.0
        %910 = vmatprep.subr.mxu0 0.0
        %911 = vmatpush1.msra.mxu0 0.0
        %912 = vmatprep.subr.mxu0 0.0
        %913 = vmatpush1.msra.mxu0 0.0
        %914 = vmatprep.subr.mxu0 0.0
        %915 = vmatpush1.msra.mxu0 0.0
        %916 = vmatprep.subr.mxu0 0.0
        %917 = vmatpush1.msra.mxu0 0.0
        %918 = vmatprep.subr.mxu0 0.0
        %919 = vmatpush1.msra.mxu0 0.0
        %920 = vmatprep.subr.mxu0 0.0
        %921 = vmatpush1.msra.mxu0 0.0
        %922 = vmatprep.subr.mxu0 0.0
        %923 = vmatpush1.msra.mxu0 0.0
        %924 = vmatprep.subr.mxu0 0.0
        %925 = vmatpush1.msra.mxu0 0.0
        %926 = vmatprep.subr.mxu0 0.0
        %927 = vmatpush1.msra.mxu0 0.0
        %928 = vmatprep.subr.mxu0 0.0
        %929 = vmatpush1.msra.mxu0 0.0
        %930 = vmatprep.subr.mxu0 0.0
        %931 = vmatpush1.msra.mxu0 0.0
        %932 = vmatprep.subr.mxu0 0.0
        %933 = vmatpush1.msra.mxu0 0.0
        %934 = vmatprep.subr.mxu0 0.0
        %935 = vmatpush1.msra.mxu0 0.0
        %936 = vmatprep.subr.mxu0 0.0
        %937 = vmatpush1.msra.mxu0 0.0
        %938 = vmatprep.subr.mxu0 0.0
        %939 = vmatpush1.msra.mxu0 0.0
        %940 = vmatprep.subr.mxu0 0.0
        %941 = vmatpush1.msra.mxu0 0.0
        %942 = vmatprep.subr.mxu0 0.0
        %943 = vmatpush1.msra.mxu0 0.0
        %944 = vmatprep.subr.mxu0 0.0
        %945 = vmatpush1.msra.mxu0 0.0
        %946 = vmatprep.subr.mxu0 0.0
        %947 = vmatpush1.msra.mxu0 0.0
        %948 = vmatprep.subr.mxu0 0.0
        %949 = vmatpush1.msra.mxu0 0.0
        %950 = vmatprep.mubr.f32.mxu0 0.0
        %951 = vmatmul.mubr.f32.gmra.mrb[0].mxu0 %v791
        %v952 = vpop.f32.mrb[0].mxu0
        %v953 = vadd.f32 0.0, %v952
        %v954 = vpop.f32.mrb[0].mxu0
        %955 = vmatprep.mubr.f32.mxu0 0.0
        %956 = vmatmul.mubr.f32.gmra.mrb[0].mxu0 %v794
        %v957 = vpop.f32.mrb[0].mxu0
        %v958 = vadd.f32 0.0, %v957
        %v959 = vpop.f32.mrb[0].mxu0
        %960 = vmatprep.mubr.f32.mxu0 0.0
        %961 = vmatmul.mubr.f32.gmra.mrb[0].mxu0 %v797
        %v962 = vpop.f32.mrb[0].mxu0
        %v963 = vadd.f32 0.0, %v962
        %v964 = vpop.f32.mrb[0].mxu0
        %965 = vmatprep.mubr.f32.mxu0 0.0
        %966 = vmatmul.mubr.f32.gmra.mrb[0].mxu0 %v800
        %v967 = vpop.f32.mrb[0].mxu0
        %v968 = vadd.f32 0.0, %v967
        %v969 = vpop.f32.mrb[0].mxu0
        %970 = vmatprep.mubr.f32.mxu0 0.0
        %971 = vmatmul.mubr.f32.gmra.mrb[0].mxu0 %v803
        %v972 = vpop.f32.mrb[0].mxu0
        %v973 = vadd.f32 0.0, %v972
        %v974 = vpop.f32.mrb[0].mxu0
        %975 = vmatprep.mubr.f32.mxu0 0.0
        %976 = vmatmul.mubr.f32.gmra.mrb[0].mxu0 %v806
        %v977 = vpop.f32.mrb[0].mxu0
        %v978 = vadd.f32 0.0, %v977
        %v979 = vpop.f32.mrb[0].mxu0
        %980 = vmatprep.mubr.f32.mxu0 0.0
        %981 = vmatmul.mubr.f32.gmra.mrb[0].mxu0 %v809
        %v982 = vpop.f32.mrb[0].mxu0
        %v983 = vadd.f32 0.0, %v982
        %v984 = vpop.f32.mrb[0].mxu0
        %985 = vmatprep.mubr.f32.mxu0 0.0
        %986 = vmatmul.mubr.f32.gmra.mrb[0].mxu0 %v812
        %v987 = vpop.f32.mrb[0].mxu0
        %v988 = vadd.f32 0.0, %v987
        %v989 = vpop.f32.mrb[0].mxu0
        %990 = vmatprep.mubr.f32.mxu0 0.0
        %991 = vmatmul.mubr.f32.gmra.mrb[0].mxu0 %v815
        %v992 = vpop.f32.mrb[0].mxu0
        %v993 = vadd.f32 0.0, %v992
        %v994 = vpop.f32.mrb[0].mxu0
        %995 = vmatprep.mubr.f32.mxu0 0.0
        %996 = vmatmul.mubr.f32.gmra.mrb[0].mxu0 %v818
        %v997 = vpop.f32.mrb[0].mxu0
        %v998 = vadd.f32 0.0, %v997
        %v999 = vpop.f32.mrb[0].mxu0
        %1000 = vmatprep.mubr.f32.mxu0 0.0
        %1001 = vmatmul.mubr.f32.gmra.mrb[0].mxu0 %v821
        %v1002 = vpop.f32.mrb[0].mxu0
        %v1003 = vadd.f32 0.0, %v1002
        %v1004 = vpop.f32.mrb[0].mxu0
        %1005 = vmatprep.mubr.f32.mxu0 0.0
        %1006 = vmatmul.mubr.f32.gmra.mrb[0].mxu0 %v824
        %v1007 = vpop.f32.mrb[0].mxu0
        %v1008 = vadd.f32 0.0, %v1007
        %v1009 = vpop.f32.mrb[0].mxu0
        %1010 = vmatprep.mubr.f32.mxu0 0.0
        %1011 = vmatmul.mubr.f32.gmra.mrb[0].mxu0 %v827
        %v1012 = vpop.f32.mrb[0].mxu0
        %v1013 = vadd.f32 0.0, %v1012
        %v1014 = vpop.f32.mrb[0].mxu0
        %1015 = vmatprep.mubr.f32.mxu0 0.0
        %1016 = vmatmul.mubr.f32.gmra.mrb[0].mxu0 %v830
        %v1017 = vpop.f32.mrb[0].mxu0
        %v1018 = vadd.f32 0.0, %v1017
        %v1019 = vpop.f32.mrb[0].mxu0
        %1020 = vmatprep.mubr.f32.mxu0 0.0
        %1021 = vmatmul.mubr.f32.gmra.mrb[0].mxu0 %v833
        %v1022 = vpop.f32.mrb[0].mxu0
        %v1023 = vadd.f32 0.0, %v1022
        %v1024 = vpop.f32.mrb[0].mxu0
        %1025 = vmatprep.mubr.f32.mxu0 0.0
        %1026 = vmatmul.mubr.f32.gmra.mrb[0].mxu0 %v836
        %v1027 = vpop.f32.mrb[0].mxu0
        %v1028 = vadd.f32 0.0, %v1027
        %v1029 = vpop.f32.mrb[0].mxu0
        %1030 = vmatprep.mubr.f32.mxu0 0.0
        %1031 = vmatmul.mubr.f32.gmra.mrb[0].mxu0 %v839
        %v1032 = vpop.f32.mrb[0].mxu0
        %v1033 = vadd.f32 0.0, %v1032
        %v1034 = vpop.f32.mrb[0].mxu0
        %1035 = vmatprep.mubr.f32.mxu0 0.0
        %1036 = vmatmul.mubr.f32.gmra.mrb[0].mxu0 %v842
        %v1037 = vpop.f32.mrb[0].mxu0
        %v1038 = vadd.f32 0.0, %v1037
        %v1039 = vpop.f32.mrb[0].mxu0
        %1040 = vmatprep.mubr.f32.mxu0 0.0
        %1041 = vmatmul.mubr.f32.gmra.mrb[0].mxu0 %v845
        %v1042 = vpop.f32.mrb[0].mxu0
        %v1043 = vadd.f32 0.0, %v1042
        %v1044 = vpop.f32.mrb[0].mxu0
        %1045 = vmatprep.mubr.f32.mxu0 0.0
        %1046 = vmatmul.mubr.f32.gmra.mrb[0].mxu0 %v848
        %v1047 = vpop.f32.mrb[0].mxu0
        %v1048 = vadd.f32 0.0, %v1047
        %v1049 = vpop.f32.mrb[0].mxu0
        %1050 = vmatprep.mubr.f32.mxu0 0.0
        %1051 = vmatmul.mubr.f32.gmra.mrb[0].mxu0 %v851
        %v1052 = vpop.f32.mrb[0].mxu0
        %v1053 = vadd.f32 0.0, %v1052
        %v1054 = vpop.f32.mrb[0].mxu0
        %1055 = vmatprep.mubr.f32.mxu0 0.0
        %1056 = vmatmul.mubr.f32.gmra.mrb[0].mxu0 %v854
        %v1057 = vpop.f32.mrb[0].mxu0
        %v1058 = vadd.f32 0.0, %v1057
        %v1059 = vpop.f32.mrb[0].mxu0
        %1060 = vmatprep.mubr.f32.mxu0 0.0
        %1061 = vmatmul.mubr.f32.gmra.mrb[0].mxu0 %v857
        %v1062 = vpop.f32.mrb[0].mxu0
        %v1063 = vadd.f32 0.0, %v1062
        %v1064 = vpop.f32.mrb[0].mxu0
        %1065 = vmatprep.mubr.f32.mxu0 0.0
        %1066 = vmatmul.mubr.f32.gmra.mrb[0].mxu0 %v860
        %v1067 = vpop.f32.mrb[0].mxu0
        %v1068 = vadd.f32 0.0, %v1067
        %v1069 = vpop.f32.mrb[0].mxu0
        %1070 = vmatprep.mubr.f32.mxu0 0.0
        %1071 = vmatmul.mubr.f32.gmra.mrb[0].mxu0 %v863
        %v1072 = vpop.f32.mrb[0].mxu0
        %v1073 = vadd.f32 0.0, %v1072
        %v1074 = vpop.f32.mrb[0].mxu0
        %1075 = vmatprep.mubr.f32.mxu0 0.0
        %1076 = vmatmul.mubr.f32.gmra.mrb[0].mxu0 %v866
        %v1077 = vpop.f32.mrb[0].mxu0
        %v1078 = vadd.f32 0.0, %v1077
        %v1079 = vpop.f32.mrb[0].mxu0
        %1080 = vmatprep.mubr.f32.mxu0 0.0
        %1081 = vmatmul.mubr.f32.gmra.mrb[0].mxu0 %v869
        %v1082 = vpop.f32.mrb[0].mxu0
        %v1083 = vadd.f32 0.0, %v1082
        %v1084 = vpop.f32.mrb[0].mxu0
        %1085 = vmatprep.mubr.f32.mxu0 0.0
        %1086 = vmatmul.mubr.f32.gmra.mrb[0].mxu0 %v872
        %v1087 = vpop.f32.mrb[0].mxu0
        %v1088 = vadd.f32 0.0, %v1087
        %v1089 = vpop.f32.mrb[0].mxu0
        %1090 = vmatprep.mubr.f32.mxu0 0.0
        %1091 = vmatmul.mubr.f32.gmra.mrb[0].mxu0 %v875
        %v1092 = vpop.f32.mrb[0].mxu0
        %v1093 = vadd.f32 0.0, %v1092
        %v1094 = vpop.f32.mrb[0].mxu0
        %1095 = vmatprep.mubr.f32.mxu0 0.0
        %1096 = vmatmul.mubr.f32.gmra.mrb[0].mxu0 %v878
        %v1097 = vpop.f32.mrb[0].mxu0
        %v1098 = vadd.f32 0.0, %v1097
        %v1099 = vpop.f32.mrb[0].mxu0
        %1100 = vmatprep.mubr.f32.mxu0 0.0
        %1101 = vmatmul.mubr.f32.gmra.mrb[0].mxu0 %v881
        %v1102 = vpop.f32.mrb[0].mxu0
        %v1103 = vadd.f32 0.0, %v1102
        %v1104 = vpop.f32.mrb[0].mxu0
        %1105 = vmatprep.mubr.f32.mxu0 0.0
        %1106 = vmatmul.mubr.f32.gmra.mrb[0].mxu0 %v884
        %v1107 = vpop.f32.mrb[0].mxu0
        %v1108 = vadd.f32 0.0, %v1107
        %v1109 = vpop.f32.mrb[0].mxu0
        %1110 = vdwg.mxu0
        %v1112 = vsel %vm624, %v713, 0
        %v1115 = vsel %vm624, %v714, 0
        %v1118 = vsel %vm624, %v715, 0
        %v1121 = vsel %vm624, %v716, 0
        %v1124 = vsel %vm624, %v717, 0
        %v1127 = vsel %vm624, %v718, 0
        %v1130 = vsel %vm624, %v719, 0
        %v1133 = vsel %vm624, %v720, 0
        %v1136 = vsel %vm624, %v721, 0
        %v1139 = vsel %vm624, %v722, 0
        %v1142 = vsel %vm624, %v723, 0
        %v1145 = vsel %vm624, %v724, 0
        %v1148 = vsel %vm624, %v725, 0
        %v1151 = vsel %vm624, %v726, 0
        %v1154 = vsel %vm624, %v727, 0
        %v1157 = vsel %vm624, %v728, 0
        %v1160 = vsel %vm624, %v729, 0
        %v1163 = vsel %vm624, %v730, 0
        %v1166 = vsel %vm624, %v731, 0
        %v1169 = vsel %vm624, %v732, 0
        %v1172 = vsel %vm624, %v733, 0
        %v1175 = vsel %vm624, %v734, 0
        %v1178 = vsel %vm624, %v735, 0
        %v1181 = vsel %vm624, %v736, 0
        %v1184 = vsel %vm624, %v737, 0
        %v1187 = vsel %vm624, %v738, 0
        %v1190 = vsel %vm624, %v739, 0
        %v1193 = vsel %vm624, %v740, 0
        %v1196 = vsel %vm624, %v741, 0
        %v1199 = vsel %vm624, %v742, 0
        %v1202 = vsel %vm624, %v743, 0
        %v1205 = vsel %vm624, %v744, 0
        %1207 = vmatprep.subr.mxu0 0.0
        %1208 = vmatpush1.msra.mxu0 %v745
        %1209 = vmatprep.subr.mxu0 0.0
        %1210 = vmatpush1.msra.mxu0 %v746
        %1211 = vmatprep.subr.mxu0 0.0
        %1212 = vmatpush1.msra.mxu0 %v747
        %1213 = vmatprep.subr.mxu0 0.0
        %1214 = vmatpush1.msra.mxu0 %v748
        %1215 = vmatprep.subr.mxu0 0.0
        %1216 = vmatpush1.msra.mxu0 %v749
        %1217 = vmatprep.subr.mxu0 0.0
        %1218 = vmatpush1.msra.mxu0 %v750
        %1219 = vmatprep.subr.mxu0 0.0
        %1220 = vmatpush1.msra.mxu0 0.0
        %1221 = vmatprep.subr.mxu0 0.0
        %1222 = vmatpush1.msra.mxu0 0.0
        %1223 = vmatprep.subr.mxu0 0.0
        %1224 = vmatpush1.msra.mxu0 0.0
        %1225 = vmatprep.subr.mxu0 0.0
        %1226 = vmatpush1.msra.mxu0 0.0
        %1227 = vmatprep.subr.mxu0 0.0
        %1228 = vmatpush1.msra.mxu0 0.0
        %1229 = vmatprep.subr.mxu0 0.0
        %1230 = vmatpush1.msra.mxu0 0.0
        %1231 = vmatprep.subr.mxu0 0.0
        %1232 = vmatpush1.msra.mxu0 0.0
        %1233 = vmatprep.subr.mxu0 0.0
        %1234 = vmatpush1.msra.mxu0 0.0
        %1235 = vmatprep.subr.mxu0 0.0
        %1236 = vmatpush1.msra.mxu0 0.0
        %1237 = vmatprep.subr.mxu0 0.0
        %1238 = vmatpush1.msra.mxu0 0.0
        %1239 = vmatprep.subr.mxu0 0.0
        %1240 = vmatpush1.msra.mxu0 0.0
        %1241 = vmatprep.subr.mxu0 0.0
        %1242 = vmatpush1.msra.mxu0 0.0
        %1243 = vmatprep.subr.mxu0 0.0
        %1244 = vmatpush1.msra.mxu0 0.0
        %1245 = vmatprep.subr.mxu0 0.0
        %1246 = vmatpush1.msra.mxu0 0.0
        %1247 = vmatprep.subr.mxu0 0.0
        %1248 = vmatpush1.msra.mxu0 0.0
        %1249 = vmatprep.subr.mxu0 0.0
        %1250 = vmatpush1.msra.mxu0 0.0
        %1251 = vmatprep.subr.mxu0 0.0
        %1252 = vmatpush1.msra.mxu0 0.0
        %1253 = vmatprep.subr.mxu0 0.0
        %1254 = vmatpush1.msra.mxu0 0.0
        %1255 = vmatprep.subr.mxu0 0.0
        %1256 = vmatpush1.msra.mxu0 0.0
        %1257 = vmatprep.subr.mxu0 0.0
        %1258 = vmatpush1.msra.mxu0 0.0
        %1259 = vmatprep.subr.mxu0 0.0
        %1260 = vmatpush1.msra.mxu0 0.0
        %1261 = vmatprep.subr.mxu0 0.0
        %1262 = vmatpush1.msra.mxu0 0.0
        %1263 = vmatprep.subr.mxu0 0.0
        %1264 = vmatpush1.msra.mxu0 0.0
        %1265 = vmatprep.subr.mxu0 0.0
        %1266 = vmatpush1.msra.mxu0 0.0
        %1267 = vmatprep.subr.mxu0 0.0
        %1268 = vmatpush1.msra.mxu0 0.0
        %1269 = vmatprep.subr.mxu0 0.0
        %1270 = vmatpush1.msra.mxu0 0.0
        %1271 = vmatprep.mubr.f32.mxu0 0.0
        %1272 = vmatmul.mubr.f32.gmra.mrb[0].mxu0 %v1112
        %v1273 = vpop.f32.mrb[0].mxu0
        %v1274 = vadd.f32 %v953, %v1273
        %v1275 = vpop.f32.mrb[0].mxu0
        %1276 = vmatprep.mubr.f32.mxu0 0.0
        %1277 = vmatmul.mubr.f32.gmra.mrb[0].mxu0 %v1115
        %v1278 = vpop.f32.mrb[0].mxu0
        %v1279 = vadd.f32 %v958, %v1278
        %v1280 = vpop.f32.mrb[0].mxu0
        %1281 = vmatprep.mubr.f32.mxu0 0.0
        %1282 = vmatmul.mubr.f32.gmra.mrb[0].mxu0 %v1118
        %v1283 = vpop.f32.mrb[0].mxu0
        %v1284 = vadd.f32 %v963, %v1283
        %v1285 = vpop.f32.mrb[0].mxu0
        %1286 = vmatprep.mubr.f32.mxu0 0.0
        %1287 = vmatmul.mubr.f32.gmra.mrb[0].mxu0 %v1121
        %v1288 = vpop.f32.mrb[0].mxu0
        %v1289 = vadd.f32 %v968, %v1288
        %v1290 = vpop.f32.mrb[0].mxu0
        %1291 = vmatprep.mubr.f32.mxu0 0.0
        %1292 = vmatmul.mubr.f32.gmra.mrb[0].mxu0 %v1124
        %v1293 = vpop.f32.mrb[0].mxu0
        %v1294 = vadd.f32 %v973, %v1293
        %v1295 = vpop.f32.mrb[0].mxu0
        %1296 = vmatprep.mubr.f32.mxu0 0.0
        %1297 = vmatmul.mubr.f32.gmra.mrb[0].mxu0 %v1127
        %v1298 = vpop.f32.mrb[0].mxu0
        %v1299 = vadd.f32 %v978, %v1298
        %v1300 = vpop.f32.mrb[0].mxu0
        %1301 = vmatprep.mubr.f32.mxu0 0.0
        %1302 = vmatmul.mubr.f32.gmra.mrb[0].mxu0 %v1130
        %v1303 = vpop.f32.mrb[0].mxu0
        %v1304 = vadd.f32 %v983, %v1303
        %v1305 = vpop.f32.mrb[0].mxu0
        %1306 = vmatprep.mubr.f32.mxu0 0.0
        %1307 = vmatmul.mubr.f32.gmra.mrb[0].mxu0 %v1133
        %v1308 = vpop.f32.mrb[0].mxu0
        %v1309 = vadd.f32 %v988, %v1308
        %v1310 = vpop.f32.mrb[0].mxu0
        %1311 = vmatprep.mubr.f32.mxu0 0.0
        %1312 = vmatmul.mubr.f32.gmra.mrb[0].mxu0 %v1136
        %v1313 = vpop.f32.mrb[0].mxu0
        %v1314 = vadd.f32 %v993, %v1313
        %v1315 = vpop.f32.mrb[0].mxu0
        %1316 = vmatprep.mubr.f32.mxu0 0.0
        %1317 = vmatmul.mubr.f32.gmra.mrb[0].mxu0 %v1139
        %v1318 = vpop.f32.mrb[0].mxu0
        %v1319 = vadd.f32 %v998, %v1318
        %v1320 = vpop.f32.mrb[0].mxu0
        %1321 = vmatprep.mubr.f32.mxu0 0.0
        %1322 = vmatmul.mubr.f32.gmra.mrb[0].mxu0 %v1142
        %v1323 = vpop.f32.mrb[0].mxu0
        %v1324 = vadd.f32 %v1003, %v1323
        %v1325 = vpop.f32.mrb[0].mxu0
        %1326 = vmatprep.mubr.f32.mxu0 0.0
        %1327 = vmatmul.mubr.f32.gmra.mrb[0].mxu0 %v1145
        %v1328 = vpop.f32.mrb[0].mxu0
        %v1329 = vadd.f32 %v1008, %v1328
        %v1330 = vpop.f32.mrb[0].mxu0
        %1331 = vmatprep.mubr.f32.mxu0 0.0
        %1332 = vmatmul.mubr.f32.gmra.mrb[0].mxu0 %v1148
        %v1333 = vpop.f32.mrb[0].mxu0
        %v1334 = vadd.f32 %v1013, %v1333
        %v1335 = vpop.f32.mrb[0].mxu0
        %1336 = vmatprep.mubr.f32.mxu0 0.0
        %1337 = vmatmul.mubr.f32.gmra.mrb[0].mxu0 %v1151
        %v1338 = vpop.f32.mrb[0].mxu0
        %v1339 = vadd.f32 %v1018, %v1338
        %v1340 = vpop.f32.mrb[0].mxu0
        %1341 = vmatprep.mubr.f32.mxu0 0.0
        %1342 = vmatmul.mubr.f32.gmra.mrb[0].mxu0 %v1154
        %v1343 = vpop.f32.mrb[0].mxu0
        %v1344 = vadd.f32 %v1023, %v1343
        %v1345 = vpop.f32.mrb[0].mxu0
        %1346 = vmatprep.mubr.f32.mxu0 0.0
        %1347 = vmatmul.mubr.f32.gmra.mrb[0].mxu0 %v1157
        %v1348 = vpop.f32.mrb[0].mxu0
        %v1349 = vadd.f32 %v1028, %v1348
        %v1350 = vpop.f32.mrb[0].mxu0
        %1351 = vmatprep.mubr.f32.mxu0 0.0
        %1352 = vmatmul.mubr.f32.gmra.mrb[0].mxu0 %v1160
        %v1353 = vpop.f32.mrb[0].mxu0
        %v1354 = vadd.f32 %v1033, %v1353
        %v1355 = vpop.f32.mrb[0].mxu0
        %1356 = vmatprep.mubr.f32.mxu0 0.0
        %1357 = vmatmul.mubr.f32.gmra.mrb[0].mxu0 %v1163
        %v1358 = vpop.f32.mrb[0].mxu0
        %v1359 = vadd.f32 %v1038, %v1358
        %v1360 = vpop.f32.mrb[0].mxu0
        %1361 = vmatprep.mubr.f32.mxu0 0.0
        %1362 = vmatmul.mubr.f32.gmra.mrb[0].mxu0 %v1166
        %v1363 = vpop.f32.mrb[0].mxu0
        %v1364 = vadd.f32 %v1043, %v1363
        %v1365 = vpop.f32.mrb[0].mxu0
        %1366 = vmatprep.mubr.f32.mxu0 0.0
        %1367 = vmatmul.mubr.f32.gmra.mrb[0].mxu0 %v1169
        %v1368 = vpop.f32.mrb[0].mxu0
        %v1369 = vadd.f32 %v1048, %v1368
        %v1370 = vpop.f32.mrb[0].mxu0
        %1371 = vmatprep.mubr.f32.mxu0 0.0
        %1372 = vmatmul.mubr.f32.gmra.mrb[0].mxu0 %v1172
        %v1373 = vpop.f32.mrb[0].mxu0
        %v1374 = vadd.f32 %v1053, %v1373
        %v1375 = vpop.f32.mrb[0].mxu0
        %1376 = vmatprep.mubr.f32.mxu0 0.0
        %1377 = vmatmul.mubr.f32.gmra.mrb[0].mxu0 %v1175
        %v1378 = vpop.f32.mrb[0].mxu0
        %v1379 = vadd.f32 %v1058, %v1378
        %v1380 = vpop.f32.mrb[0].mxu0
        %1381 = vmatprep.mubr.f32.mxu0 0.0
        %1382 = vmatmul.mubr.f32.gmra.mrb[0].mxu0 %v1178
        %v1383 = vpop.f32.mrb[0].mxu0
        %v1384 = vadd.f32 %v1063, %v1383
        %v1385 = vpop.f32.mrb[0].mxu0
        %1386 = vmatprep.mubr.f32.mxu0 0.0
        %1387 = vmatmul.mubr.f32.gmra.mrb[0].mxu0 %v1181
        %v1388 = vpop.f32.mrb[0].mxu0
        %v1389 = vadd.f32 %v1068, %v1388
        %v1390 = vpop.f32.mrb[0].mxu0
        %1391 = vmatprep.mubr.f32.mxu0 0.0
        %1392 = vmatmul.mubr.f32.gmra.mrb[0].mxu0 %v1184
        %v1393 = vpop.f32.mrb[0].mxu0
        %v1394 = vadd.f32 %v1073, %v1393
        %v1395 = vpop.f32.mrb[0].mxu0
        %1396 = vmatprep.mubr.f32.mxu0 0.0
        %1397 = vmatmul.mubr.f32.gmra.mrb[0].mxu0 %v1187
        %v1398 = vpop.f32.mrb[0].mxu0
        %v1399 = vadd.f32 %v1078, %v1398
        %v1400 = vpop.f32.mrb[0].mxu0
        %1401 = vmatprep.mubr.f32.mxu0 0.0
        %1402 = vmatmul.mubr.f32.gmra.mrb[0].mxu0 %v1190
        %v1403 = vpop.f32.mrb[0].mxu0
        %v1404 = vadd.f32 %v1083, %v1403
        %v1405 = vpop.f32.mrb[0].mxu0
        %1406 = vmatprep.mubr.f32.mxu0 0.0
        %1407 = vmatmul.mubr.f32.gmra.mrb[0].mxu0 %v1193
        %v1408 = vpop.f32.mrb[0].mxu0
        %v1409 = vadd.f32 %v1088, %v1408
        %v1410 = vpop.f32.mrb[0].mxu0
        %1411 = vmatprep.mubr.f32.mxu0 0.0
        %1412 = vmatmul.mubr.f32.gmra.mrb[0].mxu0 %v1196
        %v1413 = vpop.f32.mrb[0].mxu0
        %v1414 = vadd.f32 %v1093, %v1413
        %v1415 = vpop.f32.mrb[0].mxu0
        %1416 = vmatprep.mubr.f32.mxu0 0.0
        %1417 = vmatmul.mubr.f32.gmra.mrb[0].mxu0 %v1199
        %v1418 = vpop.f32.mrb[0].mxu0
        %v1419 = vadd.f32 %v1098, %v1418
        %v1420 = vpop.f32.mrb[0].mxu0
        %1421 = vmatprep.mubr.f32.mxu0 0.0
        %1422 = vmatmul.mubr.f32.gmra.mrb[0].mxu0 %v1202
        %v1423 = vpop.f32.mrb[0].mxu0
        %v1424 = vadd.f32 %v1103, %v1423
        %v1425 = vpop.f32.mrb[0].mxu0
        %1426 = vmatprep.mubr.f32.mxu0 0.0
        %1427 = vmatmul.mubr.f32.gmra.mrb[0].mxu0 %v1205
        %v1428 = vpop.f32.mrb[0].mxu0
        %v1429 = vadd.f32 %v1108, %v1428
        %v1430 = vpop.f32.mrb[0].mxu0
        %1431 = vdwg.mxu0
        %v1432 = vld [vmem:[#allocation2 + $0x2] sm:$0xff]
        %v1433 = vld [vmem:[#allocation2 + $0xa] sm:$0xff]
        %v1434 = vld [vmem:[#allocation2 + $0x1a] sm:$0xff]
        %v1435 = vld [vmem:[#allocation2 + $0x22] sm:$0xff]
        %v1436 = vld [vmem:[#allocation2 + $0x32] sm:$0xff]
        %v1437 = vld [vmem:[#allocation2 + $0x3a] sm:$0xff]
        %v1438 = vld [vmem:[#allocation2 + $0x4a] sm:$0xff]
        %v1439 = vld [vmem:[#allocation2 + $0x52] sm:$0xff]
        %v1440 = vld [vmem:[#allocation2 + $0x62] sm:$0xff]
        %v1441 = vld [vmem:[#allocation2 + $0x6a] sm:$0xff]
        %v1442 = vld [vmem:[#allocation2 + $0x7a] sm:$0xff]
        %v1443 = vld [vmem:[#allocation2 + $0x82] sm:$0xff]
        %v1444 = vld [vmem:[#allocation2 + $0x92] sm:$0xff]
        %v1445 = vld [vmem:[#allocation2 + $0x9a] sm:$0xff]
        %v1446 = vld [vmem:[#allocation2 + $0xaa] sm:$0xff]
        %v1447 = vld [vmem:[#allocation2 + $0xb2] sm:$0xff]
        %v1448 = vld [vmem:[#allocation2 + $0xc2] sm:$0xff]
        %v1449 = vld [vmem:[#allocation2 + $0xca] sm:$0xff]
        %v1450 = vld [vmem:[#allocation2 + $0xda] sm:$0xff]
        %v1451 = vld [vmem:[#allocation2 + $0xe2] sm:$0xff]
        %v1452 = vld [vmem:[#allocation2 + $0xf2] sm:$0xff]
        %v1453 = vld [vmem:[#allocation2 + $0xfa] sm:$0xff]
        %v1454 = vld [vmem:[#allocation2 + $0x10a] sm:$0xff]
        %v1455 = vld [vmem:[#allocation2 + $0x112] sm:$0xff]
        %v1456 = vld [vmem:[#allocation2 + $0x122] sm:$0xff]
        %v1457 = vld [vmem:[#allocation2 + $0x12a] sm:$0xff]
        %v1458 = vld [vmem:[#allocation2 + $0x13a] sm:$0xff]
        %v1459 = vld [vmem:[#allocation2 + $0x142] sm:$0xff]
        %v1460 = vld [vmem:[#allocation2 + $0x152] sm:$0xff]
        %v1461 = vld [vmem:[#allocation2 + $0x15a] sm:$0xff]
        %v1462 = vld [vmem:[#allocation2 + $0x16a] sm:$0xff]
        %v1463 = vld [vmem:[#allocation2 + $0x172] sm:$0xff]
        %s1464 = scalar_lea.vmem %s3, 96
        %v1465 = vld [vmem:[%s1464] sm:$0xff]
        %v1466 = vld [vmem:[%s1464 + $0x8] sm:$0xff]
        %v1467 = vld [vmem:[%s1464 + $0x10] sm:$0xff]
        %v1468 = vld [vmem:[%s1464 + $0x18] sm:$0xff]
        %v1469 = vld [vmem:[%s1464 + $0x20] sm:$0xff]
        %v1470 = vld [vmem:[%s1464 + $0x28] sm:$0xff]
        %v1472 = vsel %vm624, %v1432, 0
        %v1475 = vsel %vm624, %v1433, 0
        %v1478 = vsel %vm624, %v1434, 0
        %v1481 = vsel %vm624, %v1435, 0
        %v1484 = vsel %vm624, %v1436, 0
        %v1487 = vsel %vm624, %v1437, 0
        %v1490 = vsel %vm624, %v1438, 0
        %v1493 = vsel %vm624, %v1439, 0
        %v1496 = vsel %vm624, %v1440, 0
        %v1499 = vsel %vm624, %v1441, 0
        %v1502 = vsel %vm624, %v1442, 0
        %v1505 = vsel %vm624, %v1443, 0
        %v1508 = vsel %vm624, %v1444, 0
        %v1511 = vsel %vm624, %v1445, 0
        %v1514 = vsel %vm624, %v1446, 0
        %v1517 = vsel %vm624, %v1447, 0
        %v1520 = vsel %vm624, %v1448, 0
        %v1523 = vsel %vm624, %v1449, 0
        %v1526 = vsel %vm624, %v1450, 0
        %v1529 = vsel %vm624, %v1451, 0
        %v1532 = vsel %vm624, %v1452, 0
        %v1535 = vsel %vm624, %v1453, 0
        %v1538 = vsel %vm624, %v1454, 0
        %v1541 = vsel %vm624, %v1455, 0
        %v1544 = vsel %vm624, %v1456, 0
        %v1547 = vsel %vm624, %v1457, 0
        %v1550 = vsel %vm624, %v1458, 0
        %v1553 = vsel %vm624, %v1459, 0
        %v1556 = vsel %vm624, %v1460, 0
        %v1559 = vsel %vm624, %v1461, 0
        %v1562 = vsel %vm624, %v1462, 0
        %v1565 = vsel %vm624, %v1463, 0
        %1567 = vmatprep.subr.mxu0 0.0
        %1568 = vmatpush1.msra.mxu0 %v1465
        %1569 = vmatprep.subr.mxu0 0.0
        %1570 = vmatpush1.msra.mxu0 %v1466
        %1571 = vmatprep.subr.mxu0 0.0
        %1572 = vmatpush1.msra.mxu0 %v1467
        %1573 = vmatprep.subr.mxu0 0.0
        %1574 = vmatpush1.msra.mxu0 %v1468
        %1575 = vmatprep.subr.mxu0 0.0
        %1576 = vmatpush1.msra.mxu0 %v1469
        %1577 = vmatprep.subr.mxu0 0.0
        %1578 = vmatpush1.msra.mxu0 %v1470
        %1579 = vmatprep.subr.mxu0 0.0
        %1580 = vmatpush1.msra.mxu0 0.0
        %1581 = vmatprep.subr.mxu0 0.0
        %1582 = vmatpush1.msra.mxu0 0.0
        %1583 = vmatprep.subr.mxu0 0.0
        %1584 = vmatpush1.msra.mxu0 0.0
        %1585 = vmatprep.subr.mxu0 0.0
        %1586 = vmatpush1.msra.mxu0 0.0
        %1587 = vmatprep.subr.mxu0 0.0
        %1588 = vmatpush1.msra.mxu0 0.0
        %1589 = vmatprep.subr.mxu0 0.0
        %1590 = vmatpush1.msra.mxu0 0.0
        %1591 = vmatprep.subr.mxu0 0.0
        %1592 = vmatpush1.msra.mxu0 0.0
        %1593 = vmatprep.subr.mxu0 0.0
        %1594 = vmatpush1.msra.mxu0 0.0
        %1595 = vmatprep.subr.mxu0 0.0
        %1596 = vmatpush1.msra.mxu0 0.0
        %1597 = vmatprep.subr.mxu0 0.0
        %1598 = vmatpush1.msra.mxu0 0.0
        %1599 = vmatprep.subr.mxu0 0.0
        %1600 = vmatpush1.msra.mxu0 0.0
        %1601 = vmatprep.subr.mxu0 0.0
        %1602 = vmatpush1.msra.mxu0 0.0
        %1603 = vmatprep.subr.mxu0 0.0
        %1604 = vmatpush1.msra.mxu0 0.0
        %1605 = vmatprep.subr.mxu0 0.0
        %1606 = vmatpush1.msra.mxu0 0.0
        %1607 = vmatprep.subr.mxu0 0.0
        %1608 = vmatpush1.msra.mxu0 0.0
        %1609 = vmatprep.subr.mxu0 0.0
        %1610 = vmatpush1.msra.mxu0 0.0
        %1611 = vmatprep.subr.mxu0 0.0
        %1612 = vmatpush1.msra.mxu0 0.0
        %1613 = vmatprep.subr.mxu0 0.0
        %1614 = vmatpush1.msra.mxu0 0.0
        %1615 = vmatprep.subr.mxu0 0.0
        %1616 = vmatpush1.msra.mxu0 0.0
        %1617 = vmatprep.subr.mxu0 0.0
        %1618 = vmatpush1.msra.mxu0 0.0
        %1619 = vmatprep.subr.mxu0 0.0
        %1620 = vmatpush1.msra.mxu0 0.0
        %1621 = vmatprep.subr.mxu0 0.0
        %1622 = vmatpush1.msra.mxu0 0.0
        %1623 = vmatprep.subr.mxu0 0.0
        %1624 = vmatpush1.msra.mxu0 0.0
        %1625 = vmatprep.subr.mxu0 0.0
        %1626 = vmatpush1.msra.mxu0 0.0
        %1627 = vmatprep.subr.mxu0 0.0
        %1628 = vmatpush1.msra.mxu0 0.0
        %1629 = vmatprep.subr.mxu0 0.0
        %1630 = vmatpush1.msra.mxu0 0.0
        %1631 = vmatprep.mubr.f32.mxu0 0.0
        %1632 = vmatmul.mubr.f32.gmra.mrb[0].mxu0 %v1472
        %v1633 = vpop.f32.mrb[0].mxu0
        %v1634 = vadd.f32 0.0, %v1633
        %v1635 = vpop.f32.mrb[0].mxu0
        %1636 = vmatprep.mubr.f32.mxu0 0.0
        %1637 = vmatmul.mubr.f32.gmra.mrb[0].mxu0 %v1475
        %v1638 = vpop.f32.mrb[0].mxu0
        %v1639 = vadd.f32 0.0, %v1638
        %v1640 = vpop.f32.mrb[0].mxu0
        %1641 = vmatprep.mubr.f32.mxu0 0.0
        %1642 = vmatmul.mubr.f32.gmra.mrb[0].mxu0 %v1478
        %v1643 = vpop.f32.mrb[0].mxu0
        %v1644 = vadd.f32 0.0, %v1643
        %v1645 = vpop.f32.mrb[0].mxu0
        %1646 = vmatprep.mubr.f32.mxu0 0.0
        %1647 = vmatmul.mubr.f32.gmra.mrb[0].mxu0 %v1481
        %v1648 = vpop.f32.mrb[0].mxu0
        %v1649 = vadd.f32 0.0, %v1648
        %v1650 = vpop.f32.mrb[0].mxu0
        %1651 = vmatprep.mubr.f32.mxu0 0.0
        %1652 = vmatmul.mubr.f32.gmra.mrb[0].mxu0 %v1484
        %v1653 = vpop.f32.mrb[0].mxu0
        %v1654 = vadd.f32 0.0, %v1653
        %v1655 = vpop.f32.mrb[0].mxu0
        %1656 = vmatprep.mubr.f32.mxu0 0.0
        %1657 = vmatmul.mubr.f32.gmra.mrb[0].mxu0 %v1487
        %v1658 = vpop.f32.mrb[0].mxu0
        %v1659 = vadd.f32 0.0, %v1658
        %v1660 = vpop.f32.mrb[0].mxu0
        %1661 = vmatprep.mubr.f32.mxu0 0.0
        %1662 = vmatmul.mubr.f32.gmra.mrb[0].mxu0 %v1490
        %v1663 = vpop.f32.mrb[0].mxu0
        %v1664 = vadd.f32 0.0, %v1663
        %v1665 = vpop.f32.mrb[0].mxu0
        %1666 = vmatprep.mubr.f32.mxu0 0.0
        %1667 = vmatmul.mubr.f32.gmra.mrb[0].mxu0 %v1493
        %v1668 = vpop.f32.mrb[0].mxu0
        %v1669 = vadd.f32 0.0, %v1668
        %v1670 = vpop.f32.mrb[0].mxu0
        %1671 = vmatprep.mubr.f32.mxu0 0.0
        %1672 = vmatmul.mubr.f32.gmra.mrb[0].mxu0 %v1496
        %v1673 = vpop.f32.mrb[0].mxu0
        %v1674 = vadd.f32 0.0, %v1673
        %v1675 = vpop.f32.mrb[0].mxu0
        %1676 = vmatprep.mubr.f32.mxu0 0.0
        %1677 = vmatmul.mubr.f32.gmra.mrb[0].mxu0 %v1499
        %v1678 = vpop.f32.mrb[0].mxu0
        %v1679 = vadd.f32 0.0, %v1678
        %v1680 = vpop.f32.mrb[0].mxu0
        %1681 = vmatprep.mubr.f32.mxu0 0.0
        %1682 = vmatmul.mubr.f32.gmra.mrb[0].mxu0 %v1502
        %v1683 = vpop.f32.mrb[0].mxu0
        %v1684 = vadd.f32 0.0, %v1683
        %v1685 = vpop.f32.mrb[0].mxu0
        %1686 = vmatprep.mubr.f32.mxu0 0.0
        %1687 = vmatmul.mubr.f32.gmra.mrb[0].mxu0 %v1505
        %v1688 = vpop.f32.mrb[0].mxu0
        %v1689 = vadd.f32 0.0, %v1688
        %v1690 = vpop.f32.mrb[0].mxu0
        %1691 = vmatprep.mubr.f32.mxu0 0.0
        %1692 = vmatmul.mubr.f32.gmra.mrb[0].mxu0 %v1508
        %v1693 = vpop.f32.mrb[0].mxu0
        %v1694 = vadd.f32 0.0, %v1693
        %v1695 = vpop.f32.mrb[0].mxu0
        %1696 = vmatprep.mubr.f32.mxu0 0.0
        %1697 = vmatmul.mubr.f32.gmra.mrb[0].mxu0 %v1511
        %v1698 = vpop.f32.mrb[0].mxu0
        %v1699 = vadd.f32 0.0, %v1698
        %v1700 = vpop.f32.mrb[0].mxu0
        %1701 = vmatprep.mubr.f32.mxu0 0.0
        %1702 = vmatmul.mubr.f32.gmra.mrb[0].mxu0 %v1514
        %v1703 = vpop.f32.mrb[0].mxu0
        %v1704 = vadd.f32 0.0, %v1703
        %v1705 = vpop.f32.mrb[0].mxu0
        %1706 = vmatprep.mubr.f32.mxu0 0.0
        %1707 = vmatmul.mubr.f32.gmra.mrb[0].mxu0 %v1517
        %v1708 = vpop.f32.mrb[0].mxu0
        %v1709 = vadd.f32 0.0, %v1708
        %v1710 = vpop.f32.mrb[0].mxu0
        %1711 = vmatprep.mubr.f32.mxu0 0.0
        %1712 = vmatmul.mubr.f32.gmra.mrb[0].mxu0 %v1520
        %v1713 = vpop.f32.mrb[0].mxu0
        %v1714 = vadd.f32 0.0, %v1713
        %v1715 = vpop.f32.mrb[0].mxu0
        %1716 = vmatprep.mubr.f32.mxu0 0.0
        %1717 = vmatmul.mubr.f32.gmra.mrb[0].mxu0 %v1523
        %v1718 = vpop.f32.mrb[0].mxu0
        %v1719 = vadd.f32 0.0, %v1718
        %v1720 = vpop.f32.mrb[0].mxu0
        %1721 = vmatprep.mubr.f32.mxu0 0.0
        %1722 = vmatmul.mubr.f32.gmra.mrb[0].mxu0 %v1526
        %v1723 = vpop.f32.mrb[0].mxu0
        %v1724 = vadd.f32 0.0, %v1723
        %v1725 = vpop.f32.mrb[0].mxu0
        %1726 = vmatprep.mubr.f32.mxu0 0.0
        %1727 = vmatmul.mubr.f32.gmra.mrb[0].mxu0 %v1529
        %v1728 = vpop.f32.mrb[0].mxu0
        %v1729 = vadd.f32 0.0, %v1728
        %v1730 = vpop.f32.mrb[0].mxu0
        %1731 = vmatprep.mubr.f32.mxu0 0.0
        %1732 = vmatmul.mubr.f32.gmra.mrb[0].mxu0 %v1532
        %v1733 = vpop.f32.mrb[0].mxu0
        %v1734 = vadd.f32 0.0, %v1733
        %v1735 = vpop.f32.mrb[0].mxu0
        %1736 = vmatprep.mubr.f32.mxu0 0.0
        %1737 = vmatmul.mubr.f32.gmra.mrb[0].mxu0 %v1535
        %v1738 = vpop.f32.mrb[0].mxu0
        %v1739 = vadd.f32 0.0, %v1738
        %v1740 = vpop.f32.mrb[0].mxu0
        %1741 = vmatprep.mubr.f32.mxu0 0.0
        %1742 = vmatmul.mubr.f32.gmra.mrb[0].mxu0 %v1538
        %v1743 = vpop.f32.mrb[0].mxu0
        %v1744 = vadd.f32 0.0, %v1743
        %v1745 = vpop.f32.mrb[0].mxu0
        %1746 = vmatprep.mubr.f32.mxu0 0.0
        %1747 = vmatmul.mubr.f32.gmra.mrb[0].mxu0 %v1541
        %v1748 = vpop.f32.mrb[0].mxu0
        %v1749 = vadd.f32 0.0, %v1748
        %v1750 = vpop.f32.mrb[0].mxu0
        %1751 = vmatprep.mubr.f32.mxu0 0.0
        %1752 = vmatmul.mubr.f32.gmra.mrb[0].mxu0 %v1544
        %v1753 = vpop.f32.mrb[0].mxu0
        %v1754 = vadd.f32 0.0, %v1753
        %v1755 = vpop.f32.mrb[0].mxu0
        %1756 = vmatprep.mubr.f32.mxu0 0.0
        %1757 = vmatmul.mubr.f32.gmra.mrb[0].mxu0 %v1547
        %v1758 = vpop.f32.mrb[0].mxu0
        %v1759 = vadd.f32 0.0, %v1758
        %v1760 = vpop.f32.mrb[0].mxu0
        %1761 = vmatprep.mubr.f32.mxu0 0.0
        %1762 = vmatmul.mubr.f32.gmra.mrb[0].mxu0 %v1550
        %v1763 = vpop.f32.mrb[0].mxu0
        %v1764 = vadd.f32 0.0, %v1763
        %v1765 = vpop.f32.mrb[0].mxu0
        %1766 = vmatprep.mubr.f32.mxu0 0.0
        %1767 = vmatmul.mubr.f32.gmra.mrb[0].mxu0 %v1553
        %v1768 = vpop.f32.mrb[0].mxu0
        %v1769 = vadd.f32 0.0, %v1768
        %v1770 = vpop.f32.mrb[0].mxu0
        %1771 = vmatprep.mubr.f32.mxu0 0.0
        %1772 = vmatmul.mubr.f32.gmra.mrb[0].mxu0 %v1556
        %v1773 = vpop.f32.mrb[0].mxu0
        %v1774 = vadd.f32 0.0, %v1773
        %v1775 = vpop.f32.mrb[0].mxu0
        %1776 = vmatprep.mubr.f32.mxu0 0.0
        %1777 = vmatmul.mubr.f32.gmra.mrb[0].mxu0 %v1559
        %v1778 = vpop.f32.mrb[0].mxu0
        %v1779 = vadd.f32 0.0, %v1778
        %v1780 = vpop.f32.mrb[0].mxu0
        %1781 = vmatprep.mubr.f32.mxu0 0.0
        %1782 = vmatmul.mubr.f32.gmra.mrb[0].mxu0 %v1562
        %v1783 = vpop.f32.mrb[0].mxu0
        %v1784 = vadd.f32 0.0, %v1783
        %v1785 = vpop.f32.mrb[0].mxu0
        %1786 = vmatprep.mubr.f32.mxu0 0.0
        %1787 = vmatmul.mubr.f32.gmra.mrb[0].mxu0 %v1565
        %v1788 = vpop.f32.mrb[0].mxu0
        %v1789 = vadd.f32 0.0, %v1788
        %v1790 = vpop.f32.mrb[0].mxu0
        %1791 = vdwg.mxu0
        %v1792 = vadd.f32 %v1274, %v1634
        %v1793 = vadd.f32 %v1279, %v1639
        %v1794 = vadd.f32 %v1284, %v1644
        %v1795 = vadd.f32 %v1289, %v1649
        %v1796 = vadd.f32 %v1294, %v1654
        %v1797 = vadd.f32 %v1299, %v1659
        %v1798 = vadd.f32 %v1304, %v1664
        %v1799 = vadd.f32 %v1309, %v1669
        %v1800 = vadd.f32 %v1314, %v1674
        %v1801 = vadd.f32 %v1319, %v1679
        %v1802 = vadd.f32 %v1324, %v1684
        %v1803 = vadd.f32 %v1329, %v1689
        %v1804 = vadd.f32 %v1334, %v1694
        %v1805 = vadd.f32 %v1339, %v1699
        %v1806 = vadd.f32 %v1344, %v1704
        %v1807 = vadd.f32 %v1349, %v1709
        %v1808 = vadd.f32 %v1354, %v1714
        %v1809 = vadd.f32 %v1359, %v1719
        %v1810 = vadd.f32 %v1364, %v1724
        %v1811 = vadd.f32 %v1369, %v1729
        %v1812 = vadd.f32 %v1374, %v1734
        %v1813 = vadd.f32 %v1379, %v1739
        %v1814 = vadd.f32 %v1384, %v1744
        %v1815 = vadd.f32 %v1389, %v1749
        %v1816 = vadd.f32 %v1394, %v1754
        %v1817 = vadd.f32 %v1399, %v1759
        %v1818 = vadd.f32 %v1404, %v1764
        %v1819 = vadd.f32 %v1409, %v1769
        %v1820 = vadd.f32 %v1414, %v1774
        %v1821 = vadd.f32 %v1419, %v1779
        %v1822 = vadd.f32 %v1424, %v1784
        %v1823 = vadd.f32 %v1429, %v1789
        %v1824 = vld [vmem:[%s680] sm:$0xff]
        %v1825 = vld [vmem:[%s680 + $0x8] sm:$0xff]
        %v1826 = vld [vmem:[%s680 + $0x18] sm:$0xff]
        %v1827 = vld [vmem:[%s680 + $0x20] sm:$0xff]
        %v1828 = vld [vmem:[%s680 + $0x30] sm:$0xff]
        %v1829 = vld [vmem:[%s680 + $0x38] sm:$0xff]
        %v1830 = vld [vmem:[%s680 + $0x48] sm:$0xff]
        %v1831 = vld [vmem:[%s680 + $0x50] sm:$0xff]
        %v1832 = vld [vmem:[%s680 + $0x60] sm:$0xff]
        %v1833 = vld [vmem:[%s680 + $0x68] sm:$0xff]
        %v1834 = vld [vmem:[%s680 + $0x78] sm:$0xff]
        %v1835 = vld [vmem:[%s680 + $0x80] sm:$0xff]
        %v1836 = vld [vmem:[%s680 + $0x90] sm:$0xff]
        %v1837 = vld [vmem:[%s680 + $0x98] sm:$0xff]
        %v1838 = vld [vmem:[%s680 + $0xa8] sm:$0xff]
        %v1839 = vld [vmem:[%s680 + $0xb0] sm:$0xff]
        %v1840 = vld [vmem:[%s680 + $0xc0] sm:$0xff]
        %v1841 = vld [vmem:[%s680 + $0xc8] sm:$0xff]
        %v1842 = vld [vmem:[%s680 + $0xd8] sm:$0xff]
        %v1843 = vld [vmem:[%s680 + $0xe0] sm:$0xff]
        %v1844 = vld [vmem:[%s680 + $0xf0] sm:$0xff]
        %v1845 = vld [vmem:[%s680 + $0xf8] sm:$0xff]
        %v1846 = vld [vmem:[%s680 + $0x108] sm:$0xff]
        %v1847 = vld [vmem:[%s680 + $0x110] sm:$0xff]
        %v1848 = vld [vmem:[%s680 + $0x120] sm:$0xff]
        %v1849 = vld [vmem:[%s680 + $0x128] sm:$0xff]
        %v1850 = vld [vmem:[%s680 + $0x138] sm:$0xff]
        %v1851 = vld [vmem:[%s680 + $0x140] sm:$0xff]
        %v1852 = vld [vmem:[%s680 + $0x150] sm:$0xff]
        %v1853 = vld [vmem:[%s680 + $0x158] sm:$0xff]
        %v1854 = vld [vmem:[%s680 + $0x168] sm:$0xff]
        %v1855 = vld [vmem:[%s680 + $0x170] sm:$0xff]
        %s1856 = scalar_lea.vmem %s3, 144
        %v1857 = vld [vmem:[%s1856] sm:$0xff]
        %v1858 = vld [vmem:[%s1856 + $0x8] sm:$0xff]
        %v1859 = vld [vmem:[%s1856 + $0x10] sm:$0xff]
        %v1860 = vld [vmem:[%s1856 + $0x18] sm:$0xff]
        %v1861 = vld [vmem:[%s1856 + $0x20] sm:$0xff]
        %v1862 = vld [vmem:[%s1856 + $0x28] sm:$0xff]
        %v1864 = vsel %vm624, %v1824, 0
        %v1867 = vsel %vm624, %v1825, 0
        %v1870 = vsel %vm624, %v1826, 0
        %v1873 = vsel %vm624, %v1827, 0
        %v1876 = vsel %vm624, %v1828, 0
        %v1879 = vsel %vm624, %v1829, 0
        %v1882 = vsel %vm624, %v1830, 0
        %v1885 = vsel %vm624, %v1831, 0
        %v1888 = vsel %vm624, %v1832, 0
        %v1891 = vsel %vm624, %v1833, 0
        %v1894 = vsel %vm624, %v1834, 0
        %v1897 = vsel %vm624, %v1835, 0
        %v1900 = vsel %vm624, %v1836, 0
        %v1903 = vsel %vm624, %v1837, 0
        %v1906 = vsel %vm624, %v1838, 0
        %v1909 = vsel %vm624, %v1839, 0
        %v1912 = vsel %vm624, %v1840, 0
        %v1915 = vsel %vm624, %v1841, 0
        %v1918 = vsel %vm624, %v1842, 0
        %v1921 = vsel %vm624, %v1843, 0
        %v1924 = vsel %vm624, %v1844, 0
        %v1927 = vsel %vm624, %v1845, 0
        %v1930 = vsel %vm624, %v1846, 0
        %v1933 = vsel %vm624, %v1847, 0
        %v1936 = vsel %vm624, %v1848, 0
        %v1939 = vsel %vm624, %v1849, 0
        %v1942 = vsel %vm624, %v1850, 0
        %v1945 = vsel %vm624, %v1851, 0
        %v1948 = vsel %vm624, %v1852, 0
        %v1951 = vsel %vm624, %v1853, 0
        %v1954 = vsel %vm624, %v1854, 0
        %v1957 = vsel %vm624, %v1855, 0
        %1959 = vmatprep.subr.mxu0 0.0
        %1960 = vmatpush1.msra.mxu0 %v1857
        %1961 = vmatprep.subr.mxu0 0.0
        %1962 = vmatpush1.msra.mxu0 %v1858
        %1963 = vmatprep.subr.mxu0 0.0
        %1964 = vmatpush1.msra.mxu0 %v1859
        %1965 = vmatprep.subr.mxu0 0.0
        %1966 = vmatpush1.msra.mxu0 %v1860
        %1967 = vmatprep.subr.mxu0 0.0
        %1968 = vmatpush1.msra.mxu0 %v1861
        %1969 = vmatprep.subr.mxu0 0.0
        %1970 = vmatpush1.msra.mxu0 %v1862
        %1971 = vmatprep.subr.mxu0 0.0
        %1972 = vmatpush1.msra.mxu0 0.0
        %1973 = vmatprep.subr.mxu0 0.0
        %1974 = vmatpush1.msra.mxu0 0.0
        %1975 = vmatprep.subr.mxu0 0.0
        %1976 = vmatpush1.msra.mxu0 0.0
        %1977 = vmatprep.subr.mxu0 0.0
        %1978 = vmatpush1.msra.mxu0 0.0
        %1979 = vmatprep.subr.mxu0 0.0
        %1980 = vmatpush1.msra.mxu0 0.0
        %1981 = vmatprep.subr.mxu0 0.0
        %1982 = vmatpush1.msra.mxu0 0.0
        %1983 = vmatprep.subr.mxu0 0.0
        %1984 = vmatpush1.msra.mxu0 0.0
        %1985 = vmatprep.subr.mxu0 0.0
        %1986 = vmatpush1.msra.mxu0 0.0
        %1987 = vmatprep.subr.mxu0 0.0
        %1988 = vmatpush1.msra.mxu0 0.0
        %1989 = vmatprep.subr.mxu0 0.0
        %1990 = vmatpush1.msra.mxu0 0.0
        %1991 = vmatprep.subr.mxu0 0.0
        %1992 = vmatpush1.msra.mxu0 0.0
        %1993 = vmatprep.subr.mxu0 0.0
        %1994 = vmatpush1.msra.mxu0 0.0
        %1995 = vmatprep.subr.mxu0 0.0
        %1996 = vmatpush1.msra.mxu0 0.0
        %1997 = vmatprep.subr.mxu0 0.0
        %1998 = vmatpush1.msra.mxu0 0.0
        %1999 = vmatprep.subr.mxu0 0.0
        %2000 = vmatpush1.msra.mxu0 0.0
        %2001 = vmatprep.subr.mxu0 0.0
        %2002 = vmatpush1.msra.mxu0 0.0
        %2003 = vmatprep.subr.mxu0 0.0
        %2004 = vmatpush1.msra.mxu0 0.0
        %2005 = vmatprep.subr.mxu0 0.0
        %2006 = vmatpush1.msra.mxu0 0.0
        %2007 = vmatprep.subr.mxu0 0.0
        %2008 = vmatpush1.msra.mxu0 0.0
        %2009 = vmatprep.subr.mxu0 0.0
        %2010 = vmatpush1.msra.mxu0 0.0
        %2011 = vmatprep.subr.mxu0 0.0
        %2012 = vmatpush1.msra.mxu0 0.0
        %2013 = vmatprep.subr.mxu0 0.0
        %2014 = vmatpush1.msra.mxu0 0.0
        %2015 = vmatprep.subr.mxu0 0.0
        %2016 = vmatpush1.msra.mxu0 0.0
        %2017 = vmatprep.subr.mxu0 0.0
        %2018 = vmatpush1.msra.mxu0 0.0
        %2019 = vmatprep.subr.mxu0 0.0
        %2020 = vmatpush1.msra.mxu0 0.0
        %2021 = vmatprep.subr.mxu0 0.0
        %2022 = vmatpush1.msra.mxu0 0.0
        %2023 = vmatprep.mubr.f32.mxu0 0.0
        %2024 = vmatmul.mubr.f32.gmra.mrb[0].mxu0 %v1864
        %v2025 = vpop.f32.mrb[0].mxu0
        %v2026 = vadd.f32 0.0, %v2025
        %v2027 = vpop.f32.mrb[0].mxu0
        %2028 = vmatprep.mubr.f32.mxu0 0.0
        %2029 = vmatmul.mubr.f32.gmra.mrb[0].mxu0 %v1867
        %v2030 = vpop.f32.mrb[0].mxu0
        %v2031 = vadd.f32 0.0, %v2030
        %v2032 = vpop.f32.mrb[0].mxu0
        %2033 = vmatprep.mubr.f32.mxu0 0.0
        %2034 = vmatmul.mubr.f32.gmra.mrb[0].mxu0 %v1870
        %v2035 = vpop.f32.mrb[0].mxu0
        %v2036 = vadd.f32 0.0, %v2035
        %v2037 = vpop.f32.mrb[0].mxu0
        %2038 = vmatprep.mubr.f32.mxu0 0.0
        %2039 = vmatmul.mubr.f32.gmra.mrb[0].mxu0 %v1873
        %v2040 = vpop.f32.mrb[0].mxu0
        %v2041 = vadd.f32 0.0, %v2040
        %v2042 = vpop.f32.mrb[0].mxu0
        %2043 = vmatprep.mubr.f32.mxu0 0.0
        %2044 = vmatmul.mubr.f32.gmra.mrb[0].mxu0 %v1876
        %v2045 = vpop.f32.mrb[0].mxu0
        %v2046 = vadd.f32 0.0, %v2045
        %v2047 = vpop.f32.mrb[0].mxu0
        %2048 = vmatprep.mubr.f32.mxu0 0.0
        %2049 = vmatmul.mubr.f32.gmra.mrb[0].mxu0 %v1879
        %v2050 = vpop.f32.mrb[0].mxu0
        %v2051 = vadd.f32 0.0, %v2050
        %v2052 = vpop.f32.mrb[0].mxu0
        %2053 = vmatprep.mubr.f32.mxu0 0.0
        %2054 = vmatmul.mubr.f32.gmra.mrb[0].mxu0 %v1882
        %v2055 = vpop.f32.mrb[0].mxu0
        %v2056 = vadd.f32 0.0, %v2055
        %v2057 = vpop.f32.mrb[0].mxu0
        %2058 = vmatprep.mubr.f32.mxu0 0.0
        %2059 = vmatmul.mubr.f32.gmra.mrb[0].mxu0 %v1885
        %v2060 = vpop.f32.mrb[0].mxu0
        %v2061 = vadd.f32 0.0, %v2060
        %v2062 = vpop.f32.mrb[0].mxu0
        %2063 = vmatprep.mubr.f32.mxu0 0.0
        %2064 = vmatmul.mubr.f32.gmra.mrb[0].mxu0 %v1888
        %v2065 = vpop.f32.mrb[0].mxu0
        %v2066 = vadd.f32 0.0, %v2065
        %v2067 = vpop.f32.mrb[0].mxu0
        %2068 = vmatprep.mubr.f32.mxu0 0.0
        %2069 = vmatmul.mubr.f32.gmra.mrb[0].mxu0 %v1891
        %v2070 = vpop.f32.mrb[0].mxu0
        %v2071 = vadd.f32 0.0, %v2070
        %v2072 = vpop.f32.mrb[0].mxu0
        %2073 = vmatprep.mubr.f32.mxu0 0.0
        %2074 = vmatmul.mubr.f32.gmra.mrb[0].mxu0 %v1894
        %v2075 = vpop.f32.mrb[0].mxu0
        %v2076 = vadd.f32 0.0, %v2075
        %v2077 = vpop.f32.mrb[0].mxu0
        %2078 = vmatprep.mubr.f32.mxu0 0.0
        %2079 = vmatmul.mubr.f32.gmra.mrb[0].mxu0 %v1897
        %v2080 = vpop.f32.mrb[0].mxu0
        %v2081 = vadd.f32 0.0, %v2080
        %v2082 = vpop.f32.mrb[0].mxu0
        %2083 = vmatprep.mubr.f32.mxu0 0.0
        %2084 = vmatmul.mubr.f32.gmra.mrb[0].mxu0 %v1900
        %v2085 = vpop.f32.mrb[0].mxu0
        %v2086 = vadd.f32 0.0, %v2085
        %v2087 = vpop.f32.mrb[0].mxu0
        %2088 = vmatprep.mubr.f32.mxu0 0.0
        %2089 = vmatmul.mubr.f32.gmra.mrb[0].mxu0 %v1903
        %v2090 = vpop.f32.mrb[0].mxu0
        %v2091 = vadd.f32 0.0, %v2090
        %v2092 = vpop.f32.mrb[0].mxu0
        %2093 = vmatprep.mubr.f32.mxu0 0.0
        %2094 = vmatmul.mubr.f32.gmra.mrb[0].mxu0 %v1906
        %v2095 = vpop.f32.mrb[0].mxu0
        %v2096 = vadd.f32 0.0, %v2095
        %v2097 = vpop.f32.mrb[0].mxu0
        %2098 = vmatprep.mubr.f32.mxu0 0.0
        %2099 = vmatmul.mubr.f32.gmra.mrb[0].mxu0 %v1909
        %v2100 = vpop.f32.mrb[0].mxu0
        %v2101 = vadd.f32 0.0, %v2100
        %v2102 = vpop.f32.mrb[0].mxu0
        %2103 = vmatprep.mubr.f32.mxu0 0.0
        %2104 = vmatmul.mubr.f32.gmra.mrb[0].mxu0 %v1912
        %v2105 = vpop.f32.mrb[0].mxu0
        %v2106 = vadd.f32 0.0, %v2105
        %v2107 = vpop.f32.mrb[0].mxu0
        %2108 = vmatprep.mubr.f32.mxu0 0.0
        %2109 = vmatmul.mubr.f32.gmra.mrb[0].mxu0 %v1915
        %v2110 = vpop.f32.mrb[0].mxu0
        %v2111 = vadd.f32 0.0, %v2110
        %v2112 = vpop.f32.mrb[0].mxu0
        %2113 = vmatprep.mubr.f32.mxu0 0.0
        %2114 = vmatmul.mubr.f32.gmra.mrb[0].mxu0 %v1918
        %v2115 = vpop.f32.mrb[0].mxu0
        %v2116 = vadd.f32 0.0, %v2115
        %v2117 = vpop.f32.mrb[0].mxu0
        %2118 = vmatprep.mubr.f32.mxu0 0.0
        %2119 = vmatmul.mubr.f32.gmra.mrb[0].mxu0 %v1921
        %v2120 = vpop.f32.mrb[0].mxu0
        %v2121 = vadd.f32 0.0, %v2120
        %v2122 = vpop.f32.mrb[0].mxu0
        %2123 = vmatprep.mubr.f32.mxu0 0.0
        %2124 = vmatmul.mubr.f32.gmra.mrb[0].mxu0 %v1924
        %v2125 = vpop.f32.mrb[0].mxu0
        %v2126 = vadd.f32 0.0, %v2125
        %v2127 = vpop.f32.mrb[0].mxu0
        %2128 = vmatprep.mubr.f32.mxu0 0.0
        %2129 = vmatmul.mubr.f32.gmra.mrb[0].mxu0 %v1927
        %v2130 = vpop.f32.mrb[0].mxu0
        %v2131 = vadd.f32 0.0, %v2130
        %v2132 = vpop.f32.mrb[0].mxu0
        %2133 = vmatprep.mubr.f32.mxu0 0.0
        %2134 = vmatmul.mubr.f32.gmra.mrb[0].mxu0 %v1930
        %v2135 = vpop.f32.mrb[0].mxu0
        %v2136 = vadd.f32 0.0, %v2135
        %v2137 = vpop.f32.mrb[0].mxu0
        %2138 = vmatprep.mubr.f32.mxu0 0.0
        %2139 = vmatmul.mubr.f32.gmra.mrb[0].mxu0 %v1933
        %v2140 = vpop.f32.mrb[0].mxu0
        %v2141 = vadd.f32 0.0, %v2140
        %v2142 = vpop.f32.mrb[0].mxu0
        %2143 = vmatprep.mubr.f32.mxu0 0.0
        %2144 = vmatmul.mubr.f32.gmra.mrb[0].mxu0 %v1936
        %v2145 = vpop.f32.mrb[0].mxu0
        %v2146 = vadd.f32 0.0, %v2145
        %v2147 = vpop.f32.mrb[0].mxu0
        %2148 = vmatprep.mubr.f32.mxu0 0.0
        %2149 = vmatmul.mubr.f32.gmra.mrb[0].mxu0 %v1939
        %v2150 = vpop.f32.mrb[0].mxu0
        %v2151 = vadd.f32 0.0, %v2150
        %v2152 = vpop.f32.mrb[0].mxu0
        %2153 = vmatprep.mubr.f32.mxu0 0.0
        %2154 = vmatmul.mubr.f32.gmra.mrb[0].mxu0 %v1942
        %v2155 = vpop.f32.mrb[0].mxu0
        %v2156 = vadd.f32 0.0, %v2155
        %v2157 = vpop.f32.mrb[0].mxu0
        %2158 = vmatprep.mubr.f32.mxu0 0.0
        %2159 = vmatmul.mubr.f32.gmra.mrb[0].mxu0 %v1945
        %v2160 = vpop.f32.mrb[0].mxu0
        %v2161 = vadd.f32 0.0, %v2160
        %v2162 = vpop.f32.mrb[0].mxu0
        %2163 = vmatprep.mubr.f32.mxu0 0.0
        %2164 = vmatmul.mubr.f32.gmra.mrb[0].mxu0 %v1948
        %v2165 = vpop.f32.mrb[0].mxu0
        %v2166 = vadd.f32 0.0, %v2165
        %v2167 = vpop.f32.mrb[0].mxu0
        %2168 = vmatprep.mubr.f32.mxu0 0.0
        %2169 = vmatmul.mubr.f32.gmra.mrb[0].mxu0 %v1951
        %v2170 = vpop.f32.mrb[0].mxu0
        %v2171 = vadd.f32 0.0, %v2170
        %v2172 = vpop.f32.mrb[0].mxu0
        %2173 = vmatprep.mubr.f32.mxu0 0.0
        %2174 = vmatmul.mubr.f32.gmra.mrb[0].mxu0 %v1954
        %v2175 = vpop.f32.mrb[0].mxu0
        %v2176 = vadd.f32 0.0, %v2175
        %v2177 = vpop.f32.mrb[0].mxu0
        %2178 = vmatprep.mubr.f32.mxu0 0.0
        %2179 = vmatmul.mubr.f32.gmra.mrb[0].mxu0 %v1957
        %v2180 = vpop.f32.mrb[0].mxu0
        %v2181 = vadd.f32 0.0, %v2180
        %v2182 = vpop.f32.mrb[0].mxu0
        %2183 = vdwg.mxu0
        %v2184 = vadd.f32 %v1792, %v2026
        %v2185 = vadd.f32 %v1793, %v2031
        %v2186 = vadd.f32 %v1794, %v2036
        %v2187 = vadd.f32 %v1795, %v2041
        %v2188 = vadd.f32 %v1796, %v2046
        %v2189 = vadd.f32 %v1797, %v2051
        %v2190 = vadd.f32 %v1798, %v2056
        %v2191 = vadd.f32 %v1799, %v2061
        %v2192 = vadd.f32 %v1800, %v2066
        %v2193 = vadd.f32 %v1801, %v2071
        %v2194 = vadd.f32 %v1802, %v2076
        %v2195 = vadd.f32 %v1803, %v2081
        %v2196 = vadd.f32 %v1804, %v2086
        %v2197 = vadd.f32 %v1805, %v2091
        %v2198 = vadd.f32 %v1806, %v2096
        %v2199 = vadd.f32 %v1807, %v2101
        %v2200 = vadd.f32 %v1808, %v2106
        %v2201 = vadd.f32 %v1809, %v2111
        %v2202 = vadd.f32 %v1810, %v2116
        %v2203 = vadd.f32 %v1811, %v2121
        %v2204 = vadd.f32 %v1812, %v2126
        %v2205 = vadd.f32 %v1813, %v2131
        %v2206 = vadd.f32 %v1814, %v2136
        %v2207 = vadd.f32 %v1815, %v2141
        %v2208 = vadd.f32 %v1816, %v2146
        %v2209 = vadd.f32 %v1817, %v2151
        %v2210 = vadd.f32 %v1818, %v2156
        %v2211 = vadd.f32 %v1819, %v2161
        %v2212 = vadd.f32 %v1820, %v2166
        %v2213 = vadd.f32 %v1821, %v2171
        %v2214 = vadd.f32 %v1822, %v2176
        %v2215 = vadd.f32 %v1823, %v2181
        %v2216 = vld [vmem:[%s680 + $0x1] sm:$0xff]
        %v2217 = vld [vmem:[%s680 + $0x9] sm:$0xff]
        %v2218 = vld [vmem:[%s680 + $0x19] sm:$0xff]
        %v2219 = vld [vmem:[%s680 + $0x21] sm:$0xff]
        %v2220 = vld [vmem:[%s680 + $0x31] sm:$0xff]
        %v2221 = vld [vmem:[%s680 + $0x39] sm:$0xff]
        %v2222 = vld [vmem:[%s680 + $0x49] sm:$0xff]
        %v2223 = vld [vmem:[%s680 + $0x51] sm:$0xff]
        %v2224 = vld [vmem:[%s680 + $0x61] sm:$0xff]
        %v2225 = vld [vmem:[%s680 + $0x69] sm:$0xff]
        %v2226 = vld [vmem:[%s680 + $0x79] sm:$0xff]
        %v2227 = vld [vmem:[%s680 + $0x81] sm:$0xff]
        %v2228 = vld [vmem:[%s680 + $0x91] sm:$0xff]
        %v2229 = vld [vmem:[%s680 + $0x99] sm:$0xff]
        %v2230 = vld [vmem:[%s680 + $0xa9] sm:$0xff]
        %v2231 = vld [vmem:[%s680 + $0xb1] sm:$0xff]
        %v2232 = vld [vmem:[%s680 + $0xc1] sm:$0xff]
        %v2233 = vld [vmem:[%s680 + $0xc9] sm:$0xff]
        %v2234 = vld [vmem:[%s680 + $0xd9] sm:$0xff]
        %v2235 = vld [vmem:[%s680 + $0xe1] sm:$0xff]
        %v2236 = vld [vmem:[%s680 + $0xf1] sm:$0xff]
        %v2237 = vld [vmem:[%s680 + $0xf9] sm:$0xff]
        %v2238 = vld [vmem:[%s680 + $0x109] sm:$0xff]
        %v2239 = vld [vmem:[%s680 + $0x111] sm:$0xff]
        %v2240 = vld [vmem:[%s680 + $0x121] sm:$0xff]
        %v2241 = vld [vmem:[%s680 + $0x129] sm:$0xff]
        %v2242 = vld [vmem:[%s680 + $0x139] sm:$0xff]
        %v2243 = vld [vmem:[%s680 + $0x141] sm:$0xff]
        %v2244 = vld [vmem:[%s680 + $0x151] sm:$0xff]
        %v2245 = vld [vmem:[%s680 + $0x159] sm:$0xff]
        %v2246 = vld [vmem:[%s680 + $0x169] sm:$0xff]
        %v2247 = vld [vmem:[%s680 + $0x171] sm:$0xff]
        %s2248 = scalar_lea.vmem %s3, 192
        %v2249 = vld [vmem:[%s2248] sm:$0xff]
        %v2250 = vld [vmem:[%s2248 + $0x8] sm:$0xff]
        %v2251 = vld [vmem:[%s2248 + $0x10] sm:$0xff]
        %v2252 = vld [vmem:[%s2248 + $0x18] sm:$0xff]
        %v2253 = vld [vmem:[%s2248 + $0x20] sm:$0xff]
        %v2254 = vld [vmem:[%s2248 + $0x28] sm:$0xff]
        %v2256 = vsel %vm624, %v2216, 0
        %v2259 = vsel %vm624, %v2217, 0
        %v2262 = vsel %vm624, %v2218, 0
        %v2265 = vsel %vm624, %v2219, 0
        %v2268 = vsel %vm624, %v2220, 0
        %v2271 = vsel %vm624, %v2221, 0
        %v2274 = vsel %vm624, %v2222, 0
        %v2277 = vsel %vm624, %v2223, 0
        %v2280 = vsel %vm624, %v2224, 0
        %v2283 = vsel %vm624, %v2225, 0
        %v2286 = vsel %vm624, %v2226, 0
        %v2289 = vsel %vm624, %v2227, 0
        %v2292 = vsel %vm624, %v2228, 0
        %v2295 = vsel %vm624, %v2229, 0
        %v2298 = vsel %vm624, %v2230, 0
        %v2301 = vsel %vm624, %v2231, 0
        %v2304 = vsel %vm624, %v2232, 0
        %v2307 = vsel %vm624, %v2233, 0
        %v2310 = vsel %vm624, %v2234, 0
        %v2313 = vsel %vm624, %v2235, 0
        %v2316 = vsel %vm624, %v2236, 0
        %v2319 = vsel %vm624, %v2237, 0
        %v2322 = vsel %vm624, %v2238, 0
        %v2325 = vsel %vm624, %v2239, 0
        %v2328 = vsel %vm624, %v2240, 0
        %v2331 = vsel %vm624, %v2241, 0
        %v2334 = vsel %vm624, %v2242, 0
        %v2337 = vsel %vm624, %v2243, 0
        %v2340 = vsel %vm624, %v2244, 0
        %v2343 = vsel %vm624, %v2245, 0
        %v2346 = vsel %vm624, %v2246, 0
        %v2349 = vsel %vm624, %v2247, 0
        %2351 = vmatprep.subr.mxu0 0.0
        %2352 = vmatpush1.msra.mxu0 %v2249
        %2353 = vmatprep.subr.mxu0 0.0
        %2354 = vmatpush1.msra.mxu0 %v2250
        %2355 = vmatprep.subr.mxu0 0.0
        %2356 = vmatpush1.msra.mxu0 %v2251
        %2357 = vmatprep.subr.mxu0 0.0
        %2358 = vmatpush1.msra.mxu0 %v2252
        %2359 = vmatprep.subr.mxu0 0.0
        %2360 = vmatpush1.msra.mxu0 %v2253
        %2361 = vmatprep.subr.mxu0 0.0
        %2362 = vmatpush1.msra.mxu0 %v2254
        %2363 = vmatprep.subr.mxu0 0.0
        %2364 = vmatpush1.msra.mxu0 0.0
        %2365 = vmatprep.subr.mxu0 0.0
        %2366 = vmatpush1.msra.mxu0 0.0
        %2367 = vmatprep.subr.mxu0 0.0
        %2368 = vmatpush1.msra.mxu0 0.0
        %2369 = vmatprep.subr.mxu0 0.0
        %2370 = vmatpush1.msra.mxu0 0.0
        %2371 = vmatprep.subr.mxu0 0.0
        %2372 = vmatpush1.msra.mxu0 0.0
        %2373 = vmatprep.subr.mxu0 0.0
        %2374 = vmatpush1.msra.mxu0 0.0
        %2375 = vmatprep.subr.mxu0 0.0
        %2376 = vmatpush1.msra.mxu0 0.0
        %2377 = vmatprep.subr.mxu0 0.0
        %2378 = vmatpush1.msra.mxu0 0.0
        %2379 = vmatprep.subr.mxu0 0.0
        %2380 = vmatpush1.msra.mxu0 0.0
        %2381 = vmatprep.subr.mxu0 0.0
        %2382 = vmatpush1.msra.mxu0 0.0
        %2383 = vmatprep.subr.mxu0 0.0
        %2384 = vmatpush1.msra.mxu0 0.0
        %2385 = vmatprep.subr.mxu0 0.0
        %2386 = vmatpush1.msra.mxu0 0.0
        %2387 = vmatprep.subr.mxu0 0.0
        %2388 = vmatpush1.msra.mxu0 0.0
        %2389 = vmatprep.subr.mxu0 0.0
        %2390 = vmatpush1.msra.mxu0 0.0
        %2391 = vmatprep.subr.mxu0 0.0
        %2392 = vmatpush1.msra.mxu0 0.0
        %2393 = vmatprep.subr.mxu0 0.0
        %2394 = vmatpush1.msra.mxu0 0.0
        %2395 = vmatprep.subr.mxu0 0.0
        %2396 = vmatpush1.msra.mxu0 0.0
        %2397 = vmatprep.subr.mxu0 0.0
        %2398 = vmatpush1.msra.mxu0 0.0
        %2399 = vmatprep.subr.mxu0 0.0
        %2400 = vmatpush1.msra.mxu0 0.0
        %2401 = vmatprep.subr.mxu0 0.0
        %2402 = vmatpush1.msra.mxu0 0.0
        %2403 = vmatprep.subr.mxu0 0.0
        %2404 = vmatpush1.msra.mxu0 0.0
        %2405 = vmatprep.subr.mxu0 0.0
        %2406 = vmatpush1.msra.mxu0 0.0
        %2407 = vmatprep.subr.mxu0 0.0
        %2408 = vmatpush1.msra.mxu0 0.0
        %2409 = vmatprep.subr.mxu0 0.0
        %2410 = vmatpush1.msra.mxu0 0.0
        %2411 = vmatprep.subr.mxu0 0.0
        %2412 = vmatpush1.msra.mxu0 0.0
        %2413 = vmatprep.subr.mxu0 0.0
        %2414 = vmatpush1.msra.mxu0 0.0
        %2415 = vmatprep.mubr.f32.mxu0 0.0
        %2416 = vmatmul.mubr.f32.gmra.mrb[0].mxu0 %v2256
        %v2417 = vpop.f32.mrb[0].mxu0
        %v2418 = vadd.f32 0.0, %v2417
        %v2419 = vpop.f32.mrb[0].mxu0
        %2420 = vmatprep.mubr.f32.mxu0 0.0
        %2421 = vmatmul.mubr.f32.gmra.mrb[0].mxu0 %v2259
        %v2422 = vpop.f32.mrb[0].mxu0
        %v2423 = vadd.f32 0.0, %v2422
        %v2424 = vpop.f32.mrb[0].mxu0
        %2425 = vmatprep.mubr.f32.mxu0 0.0
        %2426 = vmatmul.mubr.f32.gmra.mrb[0].mxu0 %v2262
        %v2427 = vpop.f32.mrb[0].mxu0
        %v2428 = vadd.f32 0.0, %v2427
        %v2429 = vpop.f32.mrb[0].mxu0
        %2430 = vmatprep.mubr.f32.mxu0 0.0
        %2431 = vmatmul.mubr.f32.gmra.mrb[0].mxu0 %v2265
        %v2432 = vpop.f32.mrb[0].mxu0
        %v2433 = vadd.f32 0.0, %v2432
        %v2434 = vpop.f32.mrb[0].mxu0
        %2435 = vmatprep.mubr.f32.mxu0 0.0
        %2436 = vmatmul.mubr.f32.gmra.mrb[0].mxu0 %v2268
        %v2437 = vpop.f32.mrb[0].mxu0
        %v2438 = vadd.f32 0.0, %v2437
        %v2439 = vpop.f32.mrb[0].mxu0
        %2440 = vmatprep.mubr.f32.mxu0 0.0
        %2441 = vmatmul.mubr.f32.gmra.mrb[0].mxu0 %v2271
        %v2442 = vpop.f32.mrb[0].mxu0
        %v2443 = vadd.f32 0.0, %v2442
        %v2444 = vpop.f32.mrb[0].mxu0
        %2445 = vmatprep.mubr.f32.mxu0 0.0
        %2446 = vmatmul.mubr.f32.gmra.mrb[0].mxu0 %v2274
        %v2447 = vpop.f32.mrb[0].mxu0
        %v2448 = vadd.f32 0.0, %v2447
        %v2449 = vpop.f32.mrb[0].mxu0
        %2450 = vmatprep.mubr.f32.mxu0 0.0
        %2451 = vmatmul.mubr.f32.gmra.mrb[0].mxu0 %v2277
        %v2452 = vpop.f32.mrb[0].mxu0
        %v2453 = vadd.f32 0.0, %v2452
        %v2454 = vpop.f32.mrb[0].mxu0
        %2455 = vmatprep.mubr.f32.mxu0 0.0
        %2456 = vmatmul.mubr.f32.gmra.mrb[0].mxu0 %v2280
        %v2457 = vpop.f32.mrb[0].mxu0
        %v2458 = vadd.f32 0.0, %v2457
        %v2459 = vpop.f32.mrb[0].mxu0
        %2460 = vmatprep.mubr.f32.mxu0 0.0
        %2461 = vmatmul.mubr.f32.gmra.mrb[0].mxu0 %v2283
        %v2462 = vpop.f32.mrb[0].mxu0
        %v2463 = vadd.f32 0.0, %v2462
        %v2464 = vpop.f32.mrb[0].mxu0
        %2465 = vmatprep.mubr.f32.mxu0 0.0
        %2466 = vmatmul.mubr.f32.gmra.mrb[0].mxu0 %v2286
        %v2467 = vpop.f32.mrb[0].mxu0
        %v2468 = vadd.f32 0.0, %v2467
        %v2469 = vpop.f32.mrb[0].mxu0
        %2470 = vmatprep.mubr.f32.mxu0 0.0
        %2471 = vmatmul.mubr.f32.gmra.mrb[0].mxu0 %v2289
        %v2472 = vpop.f32.mrb[0].mxu0
        %v2473 = vadd.f32 0.0, %v2472
        %v2474 = vpop.f32.mrb[0].mxu0
        %2475 = vmatprep.mubr.f32.mxu0 0.0
        %2476 = vmatmul.mubr.f32.gmra.mrb[0].mxu0 %v2292
        %v2477 = vpop.f32.mrb[0].mxu0
        %v2478 = vadd.f32 0.0, %v2477
        %v2479 = vpop.f32.mrb[0].mxu0
        %2480 = vmatprep.mubr.f32.mxu0 0.0
        %2481 = vmatmul.mubr.f32.gmra.mrb[0].mxu0 %v2295
        %v2482 = vpop.f32.mrb[0].mxu0
        %v2483 = vadd.f32 0.0, %v2482
        %v2484 = vpop.f32.mrb[0].mxu0
        %2485 = vmatprep.mubr.f32.mxu0 0.0
        %2486 = vmatmul.mubr.f32.gmra.mrb[0].mxu0 %v2298
        %v2487 = vpop.f32.mrb[0].mxu0
        %v2488 = vadd.f32 0.0, %v2487
        %v2489 = vpop.f32.mrb[0].mxu0
        %2490 = vmatprep.mubr.f32.mxu0 0.0
        %2491 = vmatmul.mubr.f32.gmra.mrb[0].mxu0 %v2301
        %v2492 = vpop.f32.mrb[0].mxu0
        %v2493 = vadd.f32 0.0, %v2492
        %v2494 = vpop.f32.mrb[0].mxu0
        %2495 = vmatprep.mubr.f32.mxu0 0.0
        %2496 = vmatmul.mubr.f32.gmra.mrb[0].mxu0 %v2304
        %v2497 = vpop.f32.mrb[0].mxu0
        %v2498 = vadd.f32 0.0, %v2497
        %v2499 = vpop.f32.mrb[0].mxu0
        %2500 = vmatprep.mubr.f32.mxu0 0.0
        %2501 = vmatmul.mubr.f32.gmra.mrb[0].mxu0 %v2307
        %v2502 = vpop.f32.mrb[0].mxu0
        %v2503 = vadd.f32 0.0, %v2502
        %v2504 = vpop.f32.mrb[0].mxu0
        %2505 = vmatprep.mubr.f32.mxu0 0.0
        %2506 = vmatmul.mubr.f32.gmra.mrb[0].mxu0 %v2310
        %v2507 = vpop.f32.mrb[0].mxu0
        %v2508 = vadd.f32 0.0, %v2507
        %v2509 = vpop.f32.mrb[0].mxu0
        %2510 = vmatprep.mubr.f32.mxu0 0.0
        %2511 = vmatmul.mubr.f32.gmra.mrb[0].mxu0 %v2313
        %v2512 = vpop.f32.mrb[0].mxu0
        %v2513 = vadd.f32 0.0, %v2512
        %v2514 = vpop.f32.mrb[0].mxu0
        %2515 = vmatprep.mubr.f32.mxu0 0.0
        %2516 = vmatmul.mubr.f32.gmra.mrb[0].mxu0 %v2316
        %v2517 = vpop.f32.mrb[0].mxu0
        %v2518 = vadd.f32 0.0, %v2517
        %v2519 = vpop.f32.mrb[0].mxu0
        %2520 = vmatprep.mubr.f32.mxu0 0.0
        %2521 = vmatmul.mubr.f32.gmra.mrb[0].mxu0 %v2319
        %v2522 = vpop.f32.mrb[0].mxu0
        %v2523 = vadd.f32 0.0, %v2522
        %v2524 = vpop.f32.mrb[0].mxu0
        %2525 = vmatprep.mubr.f32.mxu0 0.0
        %2526 = vmatmul.mubr.f32.gmra.mrb[0].mxu0 %v2322
        %v2527 = vpop.f32.mrb[0].mxu0
        %v2528 = vadd.f32 0.0, %v2527
        %v2529 = vpop.f32.mrb[0].mxu0
        %2530 = vmatprep.mubr.f32.mxu0 0.0
        %2531 = vmatmul.mubr.f32.gmra.mrb[0].mxu0 %v2325
        %v2532 = vpop.f32.mrb[0].mxu0
        %v2533 = vadd.f32 0.0, %v2532
        %v2534 = vpop.f32.mrb[0].mxu0
        %2535 = vmatprep.mubr.f32.mxu0 0.0
        %2536 = vmatmul.mubr.f32.gmra.mrb[0].mxu0 %v2328
        %v2537 = vpop.f32.mrb[0].mxu0
        %v2538 = vadd.f32 0.0, %v2537
        %v2539 = vpop.f32.mrb[0].mxu0
        %2540 = vmatprep.mubr.f32.mxu0 0.0
        %2541 = vmatmul.mubr.f32.gmra.mrb[0].mxu0 %v2331
        %v2542 = vpop.f32.mrb[0].mxu0
        %v2543 = vadd.f32 0.0, %v2542
        %v2544 = vpop.f32.mrb[0].mxu0
        %2545 = vmatprep.mubr.f32.mxu0 0.0
        %2546 = vmatmul.mubr.f32.gmra.mrb[0].mxu0 %v2334
        %v2547 = vpop.f32.mrb[0].mxu0
        %v2548 = vadd.f32 0.0, %v2547
        %v2549 = vpop.f32.mrb[0].mxu0
        %2550 = vmatprep.mubr.f32.mxu0 0.0
        %2551 = vmatmul.mubr.f32.gmra.mrb[0].mxu0 %v2337
        %v2552 = vpop.f32.mrb[0].mxu0
        %v2553 = vadd.f32 0.0, %v2552
        %v2554 = vpop.f32.mrb[0].mxu0
        %2555 = vmatprep.mubr.f32.mxu0 0.0
        %2556 = vmatmul.mubr.f32.gmra.mrb[0].mxu0 %v2340
        %v2557 = vpop.f32.mrb[0].mxu0
        %v2558 = vadd.f32 0.0, %v2557
        %v2559 = vpop.f32.mrb[0].mxu0
        %2560 = vmatprep.mubr.f32.mxu0 0.0
        %2561 = vmatmul.mubr.f32.gmra.mrb[0].mxu0 %v2343
        %v2562 = vpop.f32.mrb[0].mxu0
        %v2563 = vadd.f32 0.0, %v2562
        %v2564 = vpop.f32.mrb[0].mxu0
        %2565 = vmatprep.mubr.f32.mxu0 0.0
        %2566 = vmatmul.mubr.f32.gmra.mrb[0].mxu0 %v2346
        %v2567 = vpop.f32.mrb[0].mxu0
        %v2568 = vadd.f32 0.0, %v2567
        %v2569 = vpop.f32.mrb[0].mxu0
        %2570 = vmatprep.mubr.f32.mxu0 0.0
        %2571 = vmatmul.mubr.f32.gmra.mrb[0].mxu0 %v2349
        %v2572 = vpop.f32.mrb[0].mxu0
        %v2573 = vadd.f32 0.0, %v2572
        %v2574 = vpop.f32.mrb[0].mxu0
        %2575 = vdwg.mxu0
        %v2576 = vadd.f32 %v2184, %v2418
        %v2577 = vadd.f32 %v2185, %v2423
        %v2578 = vadd.f32 %v2186, %v2428
        %v2579 = vadd.f32 %v2187, %v2433
        %v2580 = vadd.f32 %v2188, %v2438
        %v2581 = vadd.f32 %v2189, %v2443
        %v2582 = vadd.f32 %v2190, %v2448
        %v2583 = vadd.f32 %v2191, %v2453
        %v2584 = vadd.f32 %v2192, %v2458
        %v2585 = vadd.f32 %v2193, %v2463
        %v2586 = vadd.f32 %v2194, %v2468
        %v2587 = vadd.f32 %v2195, %v2473
        %v2588 = vadd.f32 %v2196, %v2478
        %v2589 = vadd.f32 %v2197, %v2483
        %v2590 = vadd.f32 %v2198, %v2488
        %v2591 = vadd.f32 %v2199, %v2493
        %v2592 = vadd.f32 %v2200, %v2498
        %v2593 = vadd.f32 %v2201, %v2503
        %v2594 = vadd.f32 %v2202, %v2508
        %v2595 = vadd.f32 %v2203, %v2513
        %v2596 = vadd.f32 %v2204, %v2518
        %v2597 = vadd.f32 %v2205, %v2523
        %v2598 = vadd.f32 %v2206, %v2528
        %v2599 = vadd.f32 %v2207, %v2533
        %v2600 = vadd.f32 %v2208, %v2538
        %v2601 = vadd.f32 %v2209, %v2543
        %v2602 = vadd.f32 %v2210, %v2548
        %v2603 = vadd.f32 %v2211, %v2553
        %v2604 = vadd.f32 %v2212, %v2558
        %v2605 = vadd.f32 %v2213, %v2563
        %v2606 = vadd.f32 %v2214, %v2568
        %v2607 = vadd.f32 %v2215, %v2573
        %v2608 = vld [vmem:[%s680 + $0x2] sm:$0xff]
        %v2609 = vld [vmem:[%s680 + $0xa] sm:$0xff]
        %v2610 = vld [vmem:[%s680 + $0x1a] sm:$0xff]
        %v2611 = vld [vmem:[%s680 + $0x22] sm:$0xff]
        %v2612 = vld [vmem:[%s680 + $0x32] sm:$0xff]
        %v2613 = vld [vmem:[%s680 + $0x3a] sm:$0xff]
        %v2614 = vld [vmem:[%s680 + $0x4a] sm:$0xff]
        %v2615 = vld [vmem:[%s680 + $0x52] sm:$0xff]
        %v2616 = vld [vmem:[%s680 + $0x62] sm:$0xff]
        %v2617 = vld [vmem:[%s680 + $0x6a] sm:$0xff]
        %v2618 = vld [vmem:[%s680 + $0x7a] sm:$0xff]
        %v2619 = vld [vmem:[%s680 + $0x82] sm:$0xff]
        %v2620 = vld [vmem:[%s680 + $0x92] sm:$0xff]
        %v2621 = vld [vmem:[%s680 + $0x9a] sm:$0xff]
        %v2622 = vld [vmem:[%s680 + $0xaa] sm:$0xff]
        %v2623 = vld [vmem:[%s680 + $0xb2] sm:$0xff]
        %v2624 = vld [vmem:[%s680 + $0xc2] sm:$0xff]
        %v2625 = vld [vmem:[%s680 + $0xca] sm:$0xff]
        %v2626 = vld [vmem:[%s680 + $0xda] sm:$0xff]
        %v2627 = vld [vmem:[%s680 + $0xe2] sm:$0xff]
        %v2628 = vld [vmem:[%s680 + $0xf2] sm:$0xff]
        %v2629 = vld [vmem:[%s680 + $0xfa] sm:$0xff]
        %v2630 = vld [vmem:[%s680 + $0x10a] sm:$0xff]
        %v2631 = vld [vmem:[%s680 + $0x112] sm:$0xff]
        %v2632 = vld [vmem:[%s680 + $0x122] sm:$0xff]
        %v2633 = vld [vmem:[%s680 + $0x12a] sm:$0xff]
        %v2634 = vld [vmem:[%s680 + $0x13a] sm:$0xff]
        %v2635 = vld [vmem:[%s680 + $0x142] sm:$0xff]
        %v2636 = vld [vmem:[%s680 + $0x152] sm:$0xff]
        %v2637 = vld [vmem:[%s680 + $0x15a] sm:$0xff]
        %v2638 = vld [vmem:[%s680 + $0x16a] sm:$0xff]
        %v2639 = vld [vmem:[%s680 + $0x172] sm:$0xff]
        %s2640 = scalar_lea.vmem %s3, 240
        %v2641 = vld [vmem:[%s2640] sm:$0xff]
        %v2642 = vld [vmem:[%s2640 + $0x8] sm:$0xff]
        %v2643 = vld [vmem:[%s2640 + $0x10] sm:$0xff]
        %v2644 = vld [vmem:[%s2640 + $0x18] sm:$0xff]
        %v2645 = vld [vmem:[%s2640 + $0x20] sm:$0xff]
        %v2646 = vld [vmem:[%s2640 + $0x28] sm:$0xff]
        %v2648 = vsel %vm624, %v2608, 0
        %v2651 = vsel %vm624, %v2609, 0
        %v2654 = vsel %vm624, %v2610, 0
        %v2657 = vsel %vm624, %v2611, 0
        %v2660 = vsel %vm624, %v2612, 0
        %v2663 = vsel %vm624, %v2613, 0
        %v2666 = vsel %vm624, %v2614, 0
        %v2669 = vsel %vm624, %v2615, 0
        %v2672 = vsel %vm624, %v2616, 0
        %v2675 = vsel %vm624, %v2617, 0
        %v2678 = vsel %vm624, %v2618, 0
        %v2681 = vsel %vm624, %v2619, 0
        %v2684 = vsel %vm624, %v2620, 0
        %v2687 = vsel %vm624, %v2621, 0
        %v2690 = vsel %vm624, %v2622, 0
        %v2693 = vsel %vm624, %v2623, 0
        %v2696 = vsel %vm624, %v2624, 0
        %v2699 = vsel %vm624, %v2625, 0
        %v2702 = vsel %vm624, %v2626, 0
        %v2705 = vsel %vm624, %v2627, 0
        %v2708 = vsel %vm624, %v2628, 0
        %v2711 = vsel %vm624, %v2629, 0
        %v2714 = vsel %vm624, %v2630, 0
        %v2717 = vsel %vm624, %v2631, 0
        %v2720 = vsel %vm624, %v2632, 0
        %v2723 = vsel %vm624, %v2633, 0
        %v2726 = vsel %vm624, %v2634, 0
        %v2729 = vsel %vm624, %v2635, 0
        %v2732 = vsel %vm624, %v2636, 0
        %v2735 = vsel %vm624, %v2637, 0
        %v2738 = vsel %vm624, %v2638, 0
        %v2741 = vsel %vm624, %v2639, 0
        %2743 = vmatprep.subr.mxu0 0.0
        %2744 = vmatpush1.msra.mxu0 %v2641
        %2745 = vmatprep.subr.mxu0 0.0
        %2746 = vmatpush1.msra.mxu0 %v2642
        %2747 = vmatprep.subr.mxu0 0.0
        %2748 = vmatpush1.msra.mxu0 %v2643
        %2749 = vmatprep.subr.mxu0 0.0
        %2750 = vmatpush1.msra.mxu0 %v2644
        %2751 = vmatprep.subr.mxu0 0.0
        %2752 = vmatpush1.msra.mxu0 %v2645
        %2753 = vmatprep.subr.mxu0 0.0
        %2754 = vmatpush1.msra.mxu0 %v2646
        %2755 = vmatprep.subr.mxu0 0.0
        %2756 = vmatpush1.msra.mxu0 0.0
        %2757 = vmatprep.subr.mxu0 0.0
        %2758 = vmatpush1.msra.mxu0 0.0
        %2759 = vmatprep.subr.mxu0 0.0
        %2760 = vmatpush1.msra.mxu0 0.0
        %2761 = vmatprep.subr.mxu0 0.0
        %2762 = vmatpush1.msra.mxu0 0.0
        %2763 = vmatprep.subr.mxu0 0.0
        %2764 = vmatpush1.msra.mxu0 0.0
        %2765 = vmatprep.subr.mxu0 0.0
        %2766 = vmatpush1.msra.mxu0 0.0
        %2767 = vmatprep.subr.mxu0 0.0
        %2768 = vmatpush1.msra.mxu0 0.0
        %2769 = vmatprep.subr.mxu0 0.0
        %2770 = vmatpush1.msra.mxu0 0.0
        %2771 = vmatprep.subr.mxu0 0.0
        %2772 = vmatpush1.msra.mxu0 0.0
        %2773 = vmatprep.subr.mxu0 0.0
        %2774 = vmatpush1.msra.mxu0 0.0
        %2775 = vmatprep.subr.mxu0 0.0
        %2776 = vmatpush1.msra.mxu0 0.0
        %2777 = vmatprep.subr.mxu0 0.0
        %2778 = vmatpush1.msra.mxu0 0.0
        %2779 = vmatprep.subr.mxu0 0.0
        %2780 = vmatpush1.msra.mxu0 0.0
        %2781 = vmatprep.subr.mxu0 0.0
        %2782 = vmatpush1.msra.mxu0 0.0
        %2783 = vmatprep.subr.mxu0 0.0
        %2784 = vmatpush1.msra.mxu0 0.0
        %2785 = vmatprep.subr.mxu0 0.0
        %2786 = vmatpush1.msra.mxu0 0.0
        %2787 = vmatprep.subr.mxu0 0.0
        %2788 = vmatpush1.msra.mxu0 0.0
        %2789 = vmatprep.subr.mxu0 0.0
        %2790 = vmatpush1.msra.mxu0 0.0
        %2791 = vmatprep.subr.mxu0 0.0
        %2792 = vmatpush1.msra.mxu0 0.0
        %2793 = vmatprep.subr.mxu0 0.0
        %2794 = vmatpush1.msra.mxu0 0.0
        %2795 = vmatprep.subr.mxu0 0.0
        %2796 = vmatpush1.msra.mxu0 0.0
        %2797 = vmatprep.subr.mxu0 0.0
        %2798 = vmatpush1.msra.mxu0 0.0
        %2799 = vmatprep.subr.mxu0 0.0
        %2800 = vmatpush1.msra.mxu0 0.0
        %2801 = vmatprep.subr.mxu0 0.0
        %2802 = vmatpush1.msra.mxu0 0.0
        %2803 = vmatprep.subr.mxu0 0.0
        %2804 = vmatpush1.msra.mxu0 0.0
        %2805 = vmatprep.subr.mxu0 0.0
        %2806 = vmatpush1.msra.mxu0 0.0
        %2807 = vmatprep.mubr.f32.mxu0 0.0
        %2808 = vmatmul.mubr.f32.gmra.mrb[0].mxu0 %v2648
        %v2809 = vpop.f32.mrb[0].mxu0
        %v2810 = vadd.f32 0.0, %v2809
        %v2811 = vpop.f32.mrb[0].mxu0
        %2812 = vmatprep.mubr.f32.mxu0 0.0
        %2813 = vmatmul.mubr.f32.gmra.mrb[0].mxu0 %v2651
        %v2814 = vpop.f32.mrb[0].mxu0
        %v2815 = vadd.f32 0.0, %v2814
        %v2816 = vpop.f32.mrb[0].mxu0
        %2817 = vmatprep.mubr.f32.mxu0 0.0
        %2818 = vmatmul.mubr.f32.gmra.mrb[0].mxu0 %v2654
        %v2819 = vpop.f32.mrb[0].mxu0
        %v2820 = vadd.f32 0.0, %v2819
        %v2821 = vpop.f32.mrb[0].mxu0
        %2822 = vmatprep.mubr.f32.mxu0 0.0
        %2823 = vmatmul.mubr.f32.gmra.mrb[0].mxu0 %v2657
        %v2824 = vpop.f32.mrb[0].mxu0
        %v2825 = vadd.f32 0.0, %v2824
        %v2826 = vpop.f32.mrb[0].mxu0
        %2827 = vmatprep.mubr.f32.mxu0 0.0
        %2828 = vmatmul.mubr.f32.gmra.mrb[0].mxu0 %v2660
        %v2829 = vpop.f32.mrb[0].mxu0
        %v2830 = vadd.f32 0.0, %v2829
        %v2831 = vpop.f32.mrb[0].mxu0
        %2832 = vmatprep.mubr.f32.mxu0 0.0
        %2833 = vmatmul.mubr.f32.gmra.mrb[0].mxu0 %v2663
        %v2834 = vpop.f32.mrb[0].mxu0
        %v2835 = vadd.f32 0.0, %v2834
        %v2836 = vpop.f32.mrb[0].mxu0
        %2837 = vmatprep.mubr.f32.mxu0 0.0
        %2838 = vmatmul.mubr.f32.gmra.mrb[0].mxu0 %v2666
        %v2839 = vpop.f32.mrb[0].mxu0
        %v2840 = vadd.f32 0.0, %v2839
        %v2841 = vpop.f32.mrb[0].mxu0
        %2842 = vmatprep.mubr.f32.mxu0 0.0
        %2843 = vmatmul.mubr.f32.gmra.mrb[0].mxu0 %v2669
        %v2844 = vpop.f32.mrb[0].mxu0
        %v2845 = vadd.f32 0.0, %v2844
        %v2846 = vpop.f32.mrb[0].mxu0
        %2847 = vmatprep.mubr.f32.mxu0 0.0
        %2848 = vmatmul.mubr.f32.gmra.mrb[0].mxu0 %v2672
        %v2849 = vpop.f32.mrb[0].mxu0
        %v2850 = vadd.f32 0.0, %v2849
        %v2851 = vpop.f32.mrb[0].mxu0
        %2852 = vmatprep.mubr.f32.mxu0 0.0
        %2853 = vmatmul.mubr.f32.gmra.mrb[0].mxu0 %v2675
        %v2854 = vpop.f32.mrb[0].mxu0
        %v2855 = vadd.f32 0.0, %v2854
        %v2856 = vpop.f32.mrb[0].mxu0
        %2857 = vmatprep.mubr.f32.mxu0 0.0
        %2858 = vmatmul.mubr.f32.gmra.mrb[0].mxu0 %v2678
        %v2859 = vpop.f32.mrb[0].mxu0
        %v2860 = vadd.f32 0.0, %v2859
        %v2861 = vpop.f32.mrb[0].mxu0
        %2862 = vmatprep.mubr.f32.mxu0 0.0
        %2863 = vmatmul.mubr.f32.gmra.mrb[0].mxu0 %v2681
        %v2864 = vpop.f32.mrb[0].mxu0
        %v2865 = vadd.f32 0.0, %v2864
        %v2866 = vpop.f32.mrb[0].mxu0
        %2867 = vmatprep.mubr.f32.mxu0 0.0
        %2868 = vmatmul.mubr.f32.gmra.mrb[0].mxu0 %v2684
        %v2869 = vpop.f32.mrb[0].mxu0
        %v2870 = vadd.f32 0.0, %v2869
        %v2871 = vpop.f32.mrb[0].mxu0
        %2872 = vmatprep.mubr.f32.mxu0 0.0
        %2873 = vmatmul.mubr.f32.gmra.mrb[0].mxu0 %v2687
        %v2874 = vpop.f32.mrb[0].mxu0
        %v2875 = vadd.f32 0.0, %v2874
        %v2876 = vpop.f32.mrb[0].mxu0
        %2877 = vmatprep.mubr.f32.mxu0 0.0
        %2878 = vmatmul.mubr.f32.gmra.mrb[0].mxu0 %v2690
        %v2879 = vpop.f32.mrb[0].mxu0
        %v2880 = vadd.f32 0.0, %v2879
        %v2881 = vpop.f32.mrb[0].mxu0
        %2882 = vmatprep.mubr.f32.mxu0 0.0
        %2883 = vmatmul.mubr.f32.gmra.mrb[0].mxu0 %v2693
        %v2884 = vpop.f32.mrb[0].mxu0
        %v2885 = vadd.f32 0.0, %v2884
        %v2886 = vpop.f32.mrb[0].mxu0
        %2887 = vmatprep.mubr.f32.mxu0 0.0
        %2888 = vmatmul.mubr.f32.gmra.mrb[0].mxu0 %v2696
        %v2889 = vpop.f32.mrb[0].mxu0
        %v2890 = vadd.f32 0.0, %v2889
        %v2891 = vpop.f32.mrb[0].mxu0
        %2892 = vmatprep.mubr.f32.mxu0 0.0
        %2893 = vmatmul.mubr.f32.gmra.mrb[0].mxu0 %v2699
        %v2894 = vpop.f32.mrb[0].mxu0
        %v2895 = vadd.f32 0.0, %v2894
        %v2896 = vpop.f32.mrb[0].mxu0
        %2897 = vmatprep.mubr.f32.mxu0 0.0
        %2898 = vmatmul.mubr.f32.gmra.mrb[0].mxu0 %v2702
        %v2899 = vpop.f32.mrb[0].mxu0
        %v2900 = vadd.f32 0.0, %v2899
        %v2901 = vpop.f32.mrb[0].mxu0
        %2902 = vmatprep.mubr.f32.mxu0 0.0
        %2903 = vmatmul.mubr.f32.gmra.mrb[0].mxu0 %v2705
        %v2904 = vpop.f32.mrb[0].mxu0
        %v2905 = vadd.f32 0.0, %v2904
        %v2906 = vpop.f32.mrb[0].mxu0
        %2907 = vmatprep.mubr.f32.mxu0 0.0
        %2908 = vmatmul.mubr.f32.gmra.mrb[0].mxu0 %v2708
        %v2909 = vpop.f32.mrb[0].mxu0
        %v2910 = vadd.f32 0.0, %v2909
        %v2911 = vpop.f32.mrb[0].mxu0
        %2912 = vmatprep.mubr.f32.mxu0 0.0
        %2913 = vmatmul.mubr.f32.gmra.mrb[0].mxu0 %v2711
        %v2914 = vpop.f32.mrb[0].mxu0
        %v2915 = vadd.f32 0.0, %v2914
        %v2916 = vpop.f32.mrb[0].mxu0
        %2917 = vmatprep.mubr.f32.mxu0 0.0
        %2918 = vmatmul.mubr.f32.gmra.mrb[0].mxu0 %v2714
        %v2919 = vpop.f32.mrb[0].mxu0
        %v2920 = vadd.f32 0.0, %v2919
        %v2921 = vpop.f32.mrb[0].mxu0
        %2922 = vmatprep.mubr.f32.mxu0 0.0
        %2923 = vmatmul.mubr.f32.gmra.mrb[0].mxu0 %v2717
        %v2924 = vpop.f32.mrb[0].mxu0
        %v2925 = vadd.f32 0.0, %v2924
        %v2926 = vpop.f32.mrb[0].mxu0
        %2927 = vmatprep.mubr.f32.mxu0 0.0
        %2928 = vmatmul.mubr.f32.gmra.mrb[0].mxu0 %v2720
        %v2929 = vpop.f32.mrb[0].mxu0
        %v2930 = vadd.f32 0.0, %v2929
        %v2931 = vpop.f32.mrb[0].mxu0
        %2932 = vmatprep.mubr.f32.mxu0 0.0
        %2933 = vmatmul.mubr.f32.gmra.mrb[0].mxu0 %v2723
        %v2934 = vpop.f32.mrb[0].mxu0
        %v2935 = vadd.f32 0.0, %v2934
        %v2936 = vpop.f32.mrb[0].mxu0
        %2937 = vmatprep.mubr.f32.mxu0 0.0
        %2938 = vmatmul.mubr.f32.gmra.mrb[0].mxu0 %v2726
        %v2939 = vpop.f32.mrb[0].mxu0
        %v2940 = vadd.f32 0.0, %v2939
        %v2941 = vpop.f32.mrb[0].mxu0
        %2942 = vmatprep.mubr.f32.mxu0 0.0
        %2943 = vmatmul.mubr.f32.gmra.mrb[0].mxu0 %v2729
        %v2944 = vpop.f32.mrb[0].mxu0
        %v2945 = vadd.f32 0.0, %v2944
        %v2946 = vpop.f32.mrb[0].mxu0
        %2947 = vmatprep.mubr.f32.mxu0 0.0
        %2948 = vmatmul.mubr.f32.gmra.mrb[0].mxu0 %v2732
        %v2949 = vpop.f32.mrb[0].mxu0
        %v2950 = vadd.f32 0.0, %v2949
        %v2951 = vpop.f32.mrb[0].mxu0
        %2952 = vmatprep.mubr.f32.mxu0 0.0
        %2953 = vmatmul.mubr.f32.gmra.mrb[0].mxu0 %v2735
        %v2954 = vpop.f32.mrb[0].mxu0
        %v2955 = vadd.f32 0.0, %v2954
        %v2956 = vpop.f32.mrb[0].mxu0
        %2957 = vmatprep.mubr.f32.mxu0 0.0
        %2958 = vmatmul.mubr.f32.gmra.mrb[0].mxu0 %v2738
        %v2959 = vpop.f32.mrb[0].mxu0
        %v2960 = vadd.f32 0.0, %v2959
        %v2961 = vpop.f32.mrb[0].mxu0
        %2962 = vmatprep.mubr.f32.mxu0 0.0
        %2963 = vmatmul.mubr.f32.gmra.mrb[0].mxu0 %v2741
        %v2964 = vpop.f32.mrb[0].mxu0
        %v2965 = vadd.f32 0.0, %v2964
        %v2966 = vpop.f32.mrb[0].mxu0
        %2967 = vdwg.mxu0
        %v2968 = vadd.f32 %v2576, %v2810
        %v2969 = vadd.f32 %v2577, %v2815
        %v2970 = vadd.f32 %v2578, %v2820
        %v2971 = vadd.f32 %v2579, %v2825
        %v2972 = vadd.f32 %v2580, %v2830
        %v2973 = vadd.f32 %v2581, %v2835
        %v2974 = vadd.f32 %v2582, %v2840
        %v2975 = vadd.f32 %v2583, %v2845
        %v2976 = vadd.f32 %v2584, %v2850
        %v2977 = vadd.f32 %v2585, %v2855
        %v2978 = vadd.f32 %v2586, %v2860
        %v2979 = vadd.f32 %v2587, %v2865
        %v2980 = vadd.f32 %v2588, %v2870
        %v2981 = vadd.f32 %v2589, %v2875
        %v2982 = vadd.f32 %v2590, %v2880
        %v2983 = vadd.f32 %v2591, %v2885
        %v2984 = vadd.f32 %v2592, %v2890
        %v2985 = vadd.f32 %v2593, %v2895
        %v2986 = vadd.f32 %v2594, %v2900
        %v2987 = vadd.f32 %v2595, %v2905
        %v2988 = vadd.f32 %v2596, %v2910
        %v2989 = vadd.f32 %v2597, %v2915
        %v2990 = vadd.f32 %v2598, %v2920
        %v2991 = vadd.f32 %v2599, %v2925
        %v2992 = vadd.f32 %v2600, %v2930
        %v2993 = vadd.f32 %v2601, %v2935
        %v2994 = vadd.f32 %v2602, %v2940
        %v2995 = vadd.f32 %v2603, %v2945
        %v2996 = vadd.f32 %v2604, %v2950
        %v2997 = vadd.f32 %v2605, %v2955
        %v2998 = vadd.f32 %v2606, %v2960
        %v2999 = vadd.f32 %v2607, %v2965
        %s3000 = scalar_lea.vmem [#allocation2], 48
        %v3001 = vld [vmem:[%s3000] sm:$0xff]
        %v3002 = vld [vmem:[%s3000 + $0x8] sm:$0xff]
        %v3003 = vld [vmem:[%s3000 + $0x18] sm:$0xff]
        %v3004 = vld [vmem:[%s3000 + $0x20] sm:$0xff]
        %v3005 = vld [vmem:[%s3000 + $0x30] sm:$0xff]
        %v3006 = vld [vmem:[%s3000 + $0x38] sm:$0xff]
        %v3007 = vld [vmem:[%s3000 + $0x48] sm:$0xff]
        %v3008 = vld [vmem:[%s3000 + $0x50] sm:$0xff]
        %v3009 = vld [vmem:[%s3000 + $0x60] sm:$0xff]
        %v3010 = vld [vmem:[%s3000 + $0x68] sm:$0xff]
        %v3011 = vld [vmem:[%s3000 + $0x78] sm:$0xff]
        %v3012 = vld [vmem:[%s3000 + $0x80] sm:$0xff]
        %v3013 = vld [vmem:[%s3000 + $0x90] sm:$0xff]
        %v3014 = vld [vmem:[%s3000 + $0x98] sm:$0xff]
        %v3015 = vld [vmem:[%s3000 + $0xa8] sm:$0xff]
        %v3016 = vld [vmem:[%s3000 + $0xb0] sm:$0xff]
        %v3017 = vld [vmem:[%s3000 + $0xc0] sm:$0xff]
        %v3018 = vld [vmem:[%s3000 + $0xc8] sm:$0xff]
        %v3019 = vld [vmem:[%s3000 + $0xd8] sm:$0xff]
        %v3020 = vld [vmem:[%s3000 + $0xe0] sm:$0xff]
        %v3021 = vld [vmem:[%s3000 + $0xf0] sm:$0xff]
        %v3022 = vld [vmem:[%s3000 + $0xf8] sm:$0xff]
        %v3023 = vld [vmem:[%s3000 + $0x108] sm:$0xff]
        %v3024 = vld [vmem:[%s3000 + $0x110] sm:$0xff]
        %v3025 = vld [vmem:[%s3000 + $0x120] sm:$0xff]
        %v3026 = vld [vmem:[%s3000 + $0x128] sm:$0xff]
        %v3027 = vld [vmem:[%s3000 + $0x138] sm:$0xff]
        %v3028 = vld [vmem:[%s3000 + $0x140] sm:$0xff]
        %v3029 = vld [vmem:[%s3000 + $0x150] sm:$0xff]
        %v3030 = vld [vmem:[%s3000 + $0x158] sm:$0xff]
        %v3031 = vld [vmem:[%s3000 + $0x168] sm:$0xff]
        %v3032 = vld [vmem:[%s3000 + $0x170] sm:$0xff]
        %s3033 = scalar_lea.vmem %s3, 288
        %v3034 = vld [vmem:[%s3033] sm:$0xff]
        %v3035 = vld [vmem:[%s3033 + $0x8] sm:$0xff]
        %v3036 = vld [vmem:[%s3033 + $0x10] sm:$0xff]
        %v3037 = vld [vmem:[%s3033 + $0x18] sm:$0xff]
        %v3038 = vld [vmem:[%s3033 + $0x20] sm:$0xff]
        %v3039 = vld [vmem:[%s3033 + $0x28] sm:$0xff]
        %v3041 = vsel %vm624, %v3001, 0
        %v3044 = vsel %vm624, %v3002, 0
        %v3047 = vsel %vm624, %v3003, 0
        %v3050 = vsel %vm624, %v3004, 0
        %v3053 = vsel %vm624, %v3005, 0
        %v3056 = vsel %vm624, %v3006, 0
        %v3059 = vsel %vm624, %v3007, 0
        %v3062 = vsel %vm624, %v3008, 0
        %v3065 = vsel %vm624, %v3009, 0
        %v3068 = vsel %vm624, %v3010, 0
        %v3071 = vsel %vm624, %v3011, 0
        %v3074 = vsel %vm624, %v3012, 0
        %v3077 = vsel %vm624, %v3013, 0
        %v3080 = vsel %vm624, %v3014, 0
        %v3083 = vsel %vm624, %v3015, 0
        %v3086 = vsel %vm624, %v3016, 0
        %v3089 = vsel %vm624, %v3017, 0
        %v3092 = vsel %vm624, %v3018, 0
        %v3095 = vsel %vm624, %v3019, 0
        %v3098 = vsel %vm624, %v3020, 0
        %v3101 = vsel %vm624, %v3021, 0
        %v3104 = vsel %vm624, %v3022, 0
        %v3107 = vsel %vm624, %v3023, 0
        %v3110 = vsel %vm624, %v3024, 0
        %v3113 = vsel %vm624, %v3025, 0
        %v3116 = vsel %vm624, %v3026, 0
        %v3119 = vsel %vm624, %v3027, 0
        %v3122 = vsel %vm624, %v3028, 0
        %v3125 = vsel %vm624, %v3029, 0
        %v3128 = vsel %vm624, %v3030, 0
        %v3131 = vsel %vm624, %v3031, 0
        %v3134 = vsel %vm624, %v3032, 0
        %3136 = vmatprep.subr.mxu0 0.0
        %3137 = vmatpush1.msra.mxu0 %v3034
        %3138 = vmatprep.subr.mxu0 0.0
        %3139 = vmatpush1.msra.mxu0 %v3035
        %3140 = vmatprep.subr.mxu0 0.0
        %3141 = vmatpush1.msra.mxu0 %v3036
        %3142 = vmatprep.subr.mxu0 0.0
        %3143 = vmatpush1.msra.mxu0 %v3037
        %3144 = vmatprep.subr.mxu0 0.0
        %3145 = vmatpush1.msra.mxu0 %v3038
        %3146 = vmatprep.subr.mxu0 0.0
        %3147 = vmatpush1.msra.mxu0 %v3039
        %3148 = vmatprep.subr.mxu0 0.0
        %3149 = vmatpush1.msra.mxu0 0.0
        %3150 = vmatprep.subr.mxu0 0.0
        %3151 = vmatpush1.msra.mxu0 0.0
        %3152 = vmatprep.subr.mxu0 0.0
        %3153 = vmatpush1.msra.mxu0 0.0
        %3154 = vmatprep.subr.mxu0 0.0
        %3155 = vmatpush1.msra.mxu0 0.0
        %3156 = vmatprep.subr.mxu0 0.0
        %3157 = vmatpush1.msra.mxu0 0.0
        %3158 = vmatprep.subr.mxu0 0.0
        %3159 = vmatpush1.msra.mxu0 0.0
        %3160 = vmatprep.subr.mxu0 0.0
        %3161 = vmatpush1.msra.mxu0 0.0
        %3162 = vmatprep.subr.mxu0 0.0
        %3163 = vmatpush1.msra.mxu0 0.0
        %3164 = vmatprep.subr.mxu0 0.0
        %3165 = vmatpush1.msra.mxu0 0.0
        %3166 = vmatprep.subr.mxu0 0.0
        %3167 = vmatpush1.msra.mxu0 0.0
        %3168 = vmatprep.subr.mxu0 0.0
        %3169 = vmatpush1.msra.mxu0 0.0
        %3170 = vmatprep.subr.mxu0 0.0
        %3171 = vmatpush1.msra.mxu0 0.0
        %3172 = vmatprep.subr.mxu0 0.0
        %3173 = vmatpush1.msra.mxu0 0.0
        %3174 = vmatprep.subr.mxu0 0.0
        %3175 = vmatpush1.msra.mxu0 0.0
        %3176 = vmatprep.subr.mxu0 0.0
        %3177 = vmatpush1.msra.mxu0 0.0
        %3178 = vmatprep.subr.mxu0 0.0
        %3179 = vmatpush1.msra.mxu0 0.0
        %3180 = vmatprep.subr.mxu0 0.0
        %3181 = vmatpush1.msra.mxu0 0.0
        %3182 = vmatprep.subr.mxu0 0.0
        %3183 = vmatpush1.msra.mxu0 0.0
        %3184 = vmatprep.subr.mxu0 0.0
        %3185 = vmatpush1.msra.mxu0 0.0
        %3186 = vmatprep.subr.mxu0 0.0
        %3187 = vmatpush1.msra.mxu0 0.0
        %3188 = vmatprep.subr.mxu0 0.0
        %3189 = vmatpush1.msra.mxu0 0.0
        %3190 = vmatprep.subr.mxu0 0.0
        %3191 = vmatpush1.msra.mxu0 0.0
        %3192 = vmatprep.subr.mxu0 0.0
        %3193 = vmatpush1.msra.mxu0 0.0
        %3194 = vmatprep.subr.mxu0 0.0
        %3195 = vmatpush1.msra.mxu0 0.0
        %3196 = vmatprep.subr.mxu0 0.0
        %3197 = vmatpush1.msra.mxu0 0.0
        %3198 = vmatprep.subr.mxu0 0.0
        %3199 = vmatpush1.msra.mxu0 0.0
        %3200 = vmatprep.mubr.f32.mxu0 0.0
        %3201 = vmatmul.mubr.f32.gmra.mrb[0].mxu0 %v3041
        %v3202 = vpop.f32.mrb[0].mxu0
        %v3203 = vadd.f32 0.0, %v3202
        %v3204 = vpop.f32.mrb[0].mxu0
        %3205 = vmatprep.mubr.f32.mxu0 0.0
        %3206 = vmatmul.mubr.f32.gmra.mrb[0].mxu0 %v3044
        %v3207 = vpop.f32.mrb[0].mxu0
        %v3208 = vadd.f32 0.0, %v3207
        %v3209 = vpop.f32.mrb[0].mxu0
        %3210 = vmatprep.mubr.f32.mxu0 0.0
        %3211 = vmatmul.mubr.f32.gmra.mrb[0].mxu0 %v3047
        %v3212 = vpop.f32.mrb[0].mxu0
        %v3213 = vadd.f32 0.0, %v3212
        %v3214 = vpop.f32.mrb[0].mxu0
        %3215 = vmatprep.mubr.f32.mxu0 0.0
        %3216 = vmatmul.mubr.f32.gmra.mrb[0].mxu0 %v3050
        %v3217 = vpop.f32.mrb[0].mxu0
        %v3218 = vadd.f32 0.0, %v3217
        %v3219 = vpop.f32.mrb[0].mxu0
        %3220 = vmatprep.mubr.f32.mxu0 0.0
        %3221 = vmatmul.mubr.f32.gmra.mrb[0].mxu0 %v3053
        %v3222 = vpop.f32.mrb[0].mxu0
        %v3223 = vadd.f32 0.0, %v3222
        %v3224 = vpop.f32.mrb[0].mxu0
        %3225 = vmatprep.mubr.f32.mxu0 0.0
        %3226 = vmatmul.mubr.f32.gmra.mrb[0].mxu0 %v3056
        %v3227 = vpop.f32.mrb[0].mxu0
        %v3228 = vadd.f32 0.0, %v3227
        %v3229 = vpop.f32.mrb[0].mxu0
        %3230 = vmatprep.mubr.f32.mxu0 0.0
        %3231 = vmatmul.mubr.f32.gmra.mrb[0].mxu0 %v3059
        %v3232 = vpop.f32.mrb[0].mxu0
        %v3233 = vadd.f32 0.0, %v3232
        %v3234 = vpop.f32.mrb[0].mxu0
        %3235 = vmatprep.mubr.f32.mxu0 0.0
        %3236 = vmatmul.mubr.f32.gmra.mrb[0].mxu0 %v3062
        %v3237 = vpop.f32.mrb[0].mxu0
        %v3238 = vadd.f32 0.0, %v3237
        %v3239 = vpop.f32.mrb[0].mxu0
        %3240 = vmatprep.mubr.f32.mxu0 0.0
        %3241 = vmatmul.mubr.f32.gmra.mrb[0].mxu0 %v3065
        %v3242 = vpop.f32.mrb[0].mxu0
        %v3243 = vadd.f32 0.0, %v3242
        %v3244 = vpop.f32.mrb[0].mxu0
        %3245 = vmatprep.mubr.f32.mxu0 0.0
        %3246 = vmatmul.mubr.f32.gmra.mrb[0].mxu0 %v3068
        %v3247 = vpop.f32.mrb[0].mxu0
        %v3248 = vadd.f32 0.0, %v3247
        %v3249 = vpop.f32.mrb[0].mxu0
        %3250 = vmatprep.mubr.f32.mxu0 0.0
        %3251 = vmatmul.mubr.f32.gmra.mrb[0].mxu0 %v3071
        %v3252 = vpop.f32.mrb[0].mxu0
        %v3253 = vadd.f32 0.0, %v3252
        %v3254 = vpop.f32.mrb[0].mxu0
        %3255 = vmatprep.mubr.f32.mxu0 0.0
        %3256 = vmatmul.mubr.f32.gmra.mrb[0].mxu0 %v3074
        %v3257 = vpop.f32.mrb[0].mxu0
        %v3258 = vadd.f32 0.0, %v3257
        %v3259 = vpop.f32.mrb[0].mxu0
        %3260 = vmatprep.mubr.f32.mxu0 0.0
        %3261 = vmatmul.mubr.f32.gmra.mrb[0].mxu0 %v3077
        %v3262 = vpop.f32.mrb[0].mxu0
        %v3263 = vadd.f32 0.0, %v3262
        %v3264 = vpop.f32.mrb[0].mxu0
        %3265 = vmatprep.mubr.f32.mxu0 0.0
        %3266 = vmatmul.mubr.f32.gmra.mrb[0].mxu0 %v3080
        %v3267 = vpop.f32.mrb[0].mxu0
        %v3268 = vadd.f32 0.0, %v3267
        %v3269 = vpop.f32.mrb[0].mxu0
        %3270 = vmatprep.mubr.f32.mxu0 0.0
        %3271 = vmatmul.mubr.f32.gmra.mrb[0].mxu0 %v3083
        %v3272 = vpop.f32.mrb[0].mxu0
        %v3273 = vadd.f32 0.0, %v3272
        %v3274 = vpop.f32.mrb[0].mxu0
        %3275 = vmatprep.mubr.f32.mxu0 0.0
        %3276 = vmatmul.mubr.f32.gmra.mrb[0].mxu0 %v3086
        %v3277 = vpop.f32.mrb[0].mxu0
        %v3278 = vadd.f32 0.0, %v3277
        %v3279 = vpop.f32.mrb[0].mxu0
        %3280 = vmatprep.mubr.f32.mxu0 0.0
        %3281 = vmatmul.mubr.f32.gmra.mrb[0].mxu0 %v3089
        %v3282 = vpop.f32.mrb[0].mxu0
        %v3283 = vadd.f32 0.0, %v3282
        %v3284 = vpop.f32.mrb[0].mxu0
        %3285 = vmatprep.mubr.f32.mxu0 0.0
        %3286 = vmatmul.mubr.f32.gmra.mrb[0].mxu0 %v3092
        %v3287 = vpop.f32.mrb[0].mxu0
        %v3288 = vadd.f32 0.0, %v3287
        %v3289 = vpop.f32.mrb[0].mxu0
        %3290 = vmatprep.mubr.f32.mxu0 0.0
        %3291 = vmatmul.mubr.f32.gmra.mrb[0].mxu0 %v3095
        %v3292 = vpop.f32.mrb[0].mxu0
        %v3293 = vadd.f32 0.0, %v3292
        %v3294 = vpop.f32.mrb[0].mxu0
        %3295 = vmatprep.mubr.f32.mxu0 0.0
        %3296 = vmatmul.mubr.f32.gmra.mrb[0].mxu0 %v3098
        %v3297 = vpop.f32.mrb[0].mxu0
        %v3298 = vadd.f32 0.0, %v3297
        %v3299 = vpop.f32.mrb[0].mxu0
        %3300 = vmatprep.mubr.f32.mxu0 0.0
        %3301 = vmatmul.mubr.f32.gmra.mrb[0].mxu0 %v3101
        %v3302 = vpop.f32.mrb[0].mxu0
        %v3303 = vadd.f32 0.0, %v3302
        %v3304 = vpop.f32.mrb[0].mxu0
        %3305 = vmatprep.mubr.f32.mxu0 0.0
        %3306 = vmatmul.mubr.f32.gmra.mrb[0].mxu0 %v3104
        %v3307 = vpop.f32.mrb[0].mxu0
        %v3308 = vadd.f32 0.0, %v3307
        %v3309 = vpop.f32.mrb[0].mxu0
        %3310 = vmatprep.mubr.f32.mxu0 0.0
        %3311 = vmatmul.mubr.f32.gmra.mrb[0].mxu0 %v3107
        %v3312 = vpop.f32.mrb[0].mxu0
        %v3313 = vadd.f32 0.0, %v3312
        %v3314 = vpop.f32.mrb[0].mxu0
        %3315 = vmatprep.mubr.f32.mxu0 0.0
        %3316 = vmatmul.mubr.f32.gmra.mrb[0].mxu0 %v3110
        %v3317 = vpop.f32.mrb[0].mxu0
        %v3318 = vadd.f32 0.0, %v3317
        %v3319 = vpop.f32.mrb[0].mxu0
        %3320 = vmatprep.mubr.f32.mxu0 0.0
        %3321 = vmatmul.mubr.f32.gmra.mrb[0].mxu0 %v3113
        %v3322 = vpop.f32.mrb[0].mxu0
        %v3323 = vadd.f32 0.0, %v3322
        %v3324 = vpop.f32.mrb[0].mxu0
        %3325 = vmatprep.mubr.f32.mxu0 0.0
        %3326 = vmatmul.mubr.f32.gmra.mrb[0].mxu0 %v3116
        %v3327 = vpop.f32.mrb[0].mxu0
        %v3328 = vadd.f32 0.0, %v3327
        %v3329 = vpop.f32.mrb[0].mxu0
        %3330 = vmatprep.mubr.f32.mxu0 0.0
        %3331 = vmatmul.mubr.f32.gmra.mrb[0].mxu0 %v3119
        %v3332 = vpop.f32.mrb[0].mxu0
        %v3333 = vadd.f32 0.0, %v3332
        %v3334 = vpop.f32.mrb[0].mxu0
        %3335 = vmatprep.mubr.f32.mxu0 0.0
        %3336 = vmatmul.mubr.f32.gmra.mrb[0].mxu0 %v3122
        %v3337 = vpop.f32.mrb[0].mxu0
        %v3338 = vadd.f32 0.0, %v3337
        %v3339 = vpop.f32.mrb[0].mxu0
        %3340 = vmatprep.mubr.f32.mxu0 0.0
        %3341 = vmatmul.mubr.f32.gmra.mrb[0].mxu0 %v3125
        %v3342 = vpop.f32.mrb[0].mxu0
        %v3343 = vadd.f32 0.0, %v3342
        %v3344 = vpop.f32.mrb[0].mxu0
        %3345 = vmatprep.mubr.f32.mxu0 0.0
        %3346 = vmatmul.mubr.f32.gmra.mrb[0].mxu0 %v3128
        %v3347 = vpop.f32.mrb[0].mxu0
        %v3348 = vadd.f32 0.0, %v3347
        %v3349 = vpop.f32.mrb[0].mxu0
        %3350 = vmatprep.mubr.f32.mxu0 0.0
        %3351 = vmatmul.mubr.f32.gmra.mrb[0].mxu0 %v3131
        %v3352 = vpop.f32.mrb[0].mxu0
        %v3353 = vadd.f32 0.0, %v3352
        %v3354 = vpop.f32.mrb[0].mxu0
        %3355 = vmatprep.mubr.f32.mxu0 0.0
        %3356 = vmatmul.mubr.f32.gmra.mrb[0].mxu0 %v3134
        %v3357 = vpop.f32.mrb[0].mxu0
        %v3358 = vadd.f32 0.0, %v3357
        %v3359 = vpop.f32.mrb[0].mxu0
        %3360 = vdwg.mxu0
        %v3361 = vadd.f32 %v2968, %v3203
        %v3362 = vadd.f32 %v2969, %v3208
        %v3363 = vadd.f32 %v2970, %v3213
        %v3364 = vadd.f32 %v2971, %v3218
        %v3365 = vadd.f32 %v2972, %v3223
        %v3366 = vadd.f32 %v2973, %v3228
        %v3367 = vadd.f32 %v2974, %v3233
        %v3368 = vadd.f32 %v2975, %v3238
        %v3369 = vadd.f32 %v2976, %v3243
        %v3370 = vadd.f32 %v2977, %v3248
        %v3371 = vadd.f32 %v2978, %v3253
        %v3372 = vadd.f32 %v2979, %v3258
        %v3373 = vadd.f32 %v2980, %v3263
        %v3374 = vadd.f32 %v2981, %v3268
        %v3375 = vadd.f32 %v2982, %v3273
        %v3376 = vadd.f32 %v2983, %v3278
        %v3377 = vadd.f32 %v2984, %v3283
        %v3378 = vadd.f32 %v2985, %v3288
        %v3379 = vadd.f32 %v2986, %v3293
        %v3380 = vadd.f32 %v2987, %v3298
        %v3381 = vadd.f32 %v2988, %v3303
        %v3382 = vadd.f32 %v2989, %v3308
        %v3383 = vadd.f32 %v2990, %v3313
        %v3384 = vadd.f32 %v2991, %v3318
        %v3385 = vadd.f32 %v2992, %v3323
        %v3386 = vadd.f32 %v2993, %v3328
        %v3387 = vadd.f32 %v2994, %v3333
        %v3388 = vadd.f32 %v2995, %v3338
        %v3389 = vadd.f32 %v2996, %v3343
        %v3390 = vadd.f32 %v2997, %v3348
        %v3391 = vadd.f32 %v2998, %v3353
        %v3392 = vadd.f32 %v2999, %v3358
        %v3393 = vld [vmem:[%s3000 + $0x1] sm:$0xff]
        %v3394 = vld [vmem:[%s3000 + $0x9] sm:$0xff]
        %v3395 = vld [vmem:[%s3000 + $0x19] sm:$0xff]
        %v3396 = vld [vmem:[%s3000 + $0x21] sm:$0xff]
        %v3397 = vld [vmem:[%s3000 + $0x31] sm:$0xff]
        %v3398 = vld [vmem:[%s3000 + $0x39] sm:$0xff]
        %v3399 = vld [vmem:[%s3000 + $0x49] sm:$0xff]
        %v3400 = vld [vmem:[%s3000 + $0x51] sm:$0xff]
        %v3401 = vld [vmem:[%s3000 + $0x61] sm:$0xff]
        %v3402 = vld [vmem:[%s3000 + $0x69] sm:$0xff]
        %v3403 = vld [vmem:[%s3000 + $0x79] sm:$0xff]
        %v3404 = vld [vmem:[%s3000 + $0x81] sm:$0xff]
        %v3405 = vld [vmem:[%s3000 + $0x91] sm:$0xff]
        %v3406 = vld [vmem:[%s3000 + $0x99] sm:$0xff]
        %v3407 = vld [vmem:[%s3000 + $0xa9] sm:$0xff]
        %v3408 = vld [vmem:[%s3000 + $0xb1] sm:$0xff]
        %v3409 = vld [vmem:[%s3000 + $0xc1] sm:$0xff]
        %v3410 = vld [vmem:[%s3000 + $0xc9] sm:$0xff]
        %v3411 = vld [vmem:[%s3000 + $0xd9] sm:$0xff]
        %v3412 = vld [vmem:[%s3000 + $0xe1] sm:$0xff]
        %v3413 = vld [vmem:[%s3000 + $0xf1] sm:$0xff]
        %v3414 = vld [vmem:[%s3000 + $0xf9] sm:$0xff]
        %v3415 = vld [vmem:[%s3000 + $0x109] sm:$0xff]
        %v3416 = vld [vmem:[%s3000 + $0x111] sm:$0xff]
        %v3417 = vld [vmem:[%s3000 + $0x121] sm:$0xff]
        %v3418 = vld [vmem:[%s3000 + $0x129] sm:$0xff]
        %v3419 = vld [vmem:[%s3000 + $0x139] sm:$0xff]
        %v3420 = vld [vmem:[%s3000 + $0x141] sm:$0xff]
        %v3421 = vld [vmem:[%s3000 + $0x151] sm:$0xff]
        %v3422 = vld [vmem:[%s3000 + $0x159] sm:$0xff]
        %v3423 = vld [vmem:[%s3000 + $0x169] sm:$0xff]
        %v3424 = vld [vmem:[%s3000 + $0x171] sm:$0xff]
        %s3425 = scalar_lea.vmem %s3, 336
        %v3426 = vld [vmem:[%s3425] sm:$0xff]
        %v3427 = vld [vmem:[%s3425 + $0x8] sm:$0xff]
        %v3428 = vld [vmem:[%s3425 + $0x10] sm:$0xff]
        %v3429 = vld [vmem:[%s3425 + $0x18] sm:$0xff]
        %v3430 = vld [vmem:[%s3425 + $0x20] sm:$0xff]
        %v3431 = vld [vmem:[%s3425 + $0x28] sm:$0xff]
        %v3433 = vsel %vm624, %v3393, 0
        %v3436 = vsel %vm624, %v3394, 0
        %v3439 = vsel %vm624, %v3395, 0
        %v3442 = vsel %vm624, %v3396, 0
        %v3445 = vsel %vm624, %v3397, 0
        %v3448 = vsel %vm624, %v3398, 0
        %v3451 = vsel %vm624, %v3399, 0
        %v3454 = vsel %vm624, %v3400, 0
        %v3457 = vsel %vm624, %v3401, 0
        %v3460 = vsel %vm624, %v3402, 0
        %v3463 = vsel %vm624, %v3403, 0
        %v3466 = vsel %vm624, %v3404, 0
        %v3469 = vsel %vm624, %v3405, 0
        %v3472 = vsel %vm624, %v3406, 0
        %v3475 = vsel %vm624, %v3407, 0
        %v3478 = vsel %vm624, %v3408, 0
        %v3481 = vsel %vm624, %v3409, 0
        %v3484 = vsel %vm624, %v3410, 0
        %v3487 = vsel %vm624, %v3411, 0
        %v3490 = vsel %vm624, %v3412, 0
        %v3493 = vsel %vm624, %v3413, 0
        %v3496 = vsel %vm624, %v3414, 0
        %v3499 = vsel %vm624, %v3415, 0
        %v3502 = vsel %vm624, %v3416, 0
        %v3505 = vsel %vm624, %v3417, 0
        %v3508 = vsel %vm624, %v3418, 0
        %v3511 = vsel %vm624, %v3419, 0
        %v3514 = vsel %vm624, %v3420, 0
        %v3517 = vsel %vm624, %v3421, 0
        %v3520 = vsel %vm624, %v3422, 0
        %v3523 = vsel %vm624, %v3423, 0
        %v3526 = vsel %vm624, %v3424, 0
        %3528 = vmatprep.subr.mxu0 0.0
        %3529 = vmatpush1.msra.mxu0 %v3426
        %3530 = vmatprep.subr.mxu0 0.0
        %3531 = vmatpush1.msra.mxu0 %v3427
        %3532 = vmatprep.subr.mxu0 0.0
        %3533 = vmatpush1.msra.mxu0 %v3428
        %3534 = vmatprep.subr.mxu0 0.0
        %3535 = vmatpush1.msra.mxu0 %v3429
        %3536 = vmatprep.subr.mxu0 0.0
        %3537 = vmatpush1.msra.mxu0 %v3430
        %3538 = vmatprep.subr.mxu0 0.0
        %3539 = vmatpush1.msra.mxu0 %v3431
        %3540 = vmatprep.subr.mxu0 0.0
        %3541 = vmatpush1.msra.mxu0 0.0
        %3542 = vmatprep.subr.mxu0 0.0
        %3543 = vmatpush1.msra.mxu0 0.0
        %3544 = vmatprep.subr.mxu0 0.0
        %3545 = vmatpush1.msra.mxu0 0.0
        %3546 = vmatprep.subr.mxu0 0.0
        %3547 = vmatpush1.msra.mxu0 0.0
        %3548 = vmatprep.subr.mxu0 0.0
        %3549 = vmatpush1.msra.mxu0 0.0
        %3550 = vmatprep.subr.mxu0 0.0
        %3551 = vmatpush1.msra.mxu0 0.0
        %3552 = vmatprep.subr.mxu0 0.0
        %3553 = vmatpush1.msra.mxu0 0.0
        %3554 = vmatprep.subr.mxu0 0.0
        %3555 = vmatpush1.msra.mxu0 0.0
        %3556 = vmatprep.subr.mxu0 0.0
        %3557 = vmatpush1.msra.mxu0 0.0
        %3558 = vmatprep.subr.mxu0 0.0
        %3559 = vmatpush1.msra.mxu0 0.0
        %3560 = vmatprep.subr.mxu0 0.0
        %3561 = vmatpush1.msra.mxu0 0.0
        %3562 = vmatprep.subr.mxu0 0.0
        %3563 = vmatpush1.msra.mxu0 0.0
        %3564 = vmatprep.subr.mxu0 0.0
        %3565 = vmatpush1.msra.mxu0 0.0
        %3566 = vmatprep.subr.mxu0 0.0
        %3567 = vmatpush1.msra.mxu0 0.0
        %3568 = vmatprep.subr.mxu0 0.0
        %3569 = vmatpush1.msra.mxu0 0.0
        %3570 = vmatprep.subr.mxu0 0.0
        %3571 = vmatpush1.msra.mxu0 0.0
        %3572 = vmatprep.subr.mxu0 0.0
        %3573 = vmatpush1.msra.mxu0 0.0
        %3574 = vmatprep.subr.mxu0 0.0
        %3575 = vmatpush1.msra.mxu0 0.0
        %3576 = vmatprep.subr.mxu0 0.0
        %3577 = vmatpush1.msra.mxu0 0.0
        %3578 = vmatprep.subr.mxu0 0.0
        %3579 = vmatpush1.msra.mxu0 0.0
        %3580 = vmatprep.subr.mxu0 0.0
        %3581 = vmatpush1.msra.mxu0 0.0
        %3582 = vmatprep.subr.mxu0 0.0
        %3583 = vmatpush1.msra.mxu0 0.0
        %3584 = vmatprep.subr.mxu0 0.0
        %3585 = vmatpush1.msra.mxu0 0.0
        %3586 = vmatprep.subr.mxu0 0.0
        %3587 = vmatpush1.msra.mxu0 0.0
        %3588 = vmatprep.subr.mxu0 0.0
        %3589 = vmatpush1.msra.mxu0 0.0
        %3590 = vmatprep.subr.mxu0 0.0
        %3591 = vmatpush1.msra.mxu0 0.0
        %3592 = vmatprep.mubr.f32.mxu0 0.0
        %3593 = vmatmul.mubr.f32.gmra.mrb[0].mxu0 %v3433
        %v3594 = vpop.f32.mrb[0].mxu0
        %v3595 = vadd.f32 0.0, %v3594
        %v3596 = vpop.f32.mrb[0].mxu0
        %3597 = vmatprep.mubr.f32.mxu0 0.0
        %3598 = vmatmul.mubr.f32.gmra.mrb[0].mxu0 %v3436
        %v3599 = vpop.f32.mrb[0].mxu0
        %v3600 = vadd.f32 0.0, %v3599
        %v3601 = vpop.f32.mrb[0].mxu0
        %3602 = vmatprep.mubr.f32.mxu0 0.0
        %3603 = vmatmul.mubr.f32.gmra.mrb[0].mxu0 %v3439
        %v3604 = vpop.f32.mrb[0].mxu0
        %v3605 = vadd.f32 0.0, %v3604
        %v3606 = vpop.f32.mrb[0].mxu0
        %3607 = vmatprep.mubr.f32.mxu0 0.0
        %3608 = vmatmul.mubr.f32.gmra.mrb[0].mxu0 %v3442
        %v3609 = vpop.f32.mrb[0].mxu0
        %v3610 = vadd.f32 0.0, %v3609
        %v3611 = vpop.f32.mrb[0].mxu0
        %3612 = vmatprep.mubr.f32.mxu0 0.0
        %3613 = vmatmul.mubr.f32.gmra.mrb[0].mxu0 %v3445
        %v3614 = vpop.f32.mrb[0].mxu0
        %v3615 = vadd.f32 0.0, %v3614
        %v3616 = vpop.f32.mrb[0].mxu0
        %3617 = vmatprep.mubr.f32.mxu0 0.0
        %3618 = vmatmul.mubr.f32.gmra.mrb[0].mxu0 %v3448
        %v3619 = vpop.f32.mrb[0].mxu0
        %v3620 = vadd.f32 0.0, %v3619
        %v3621 = vpop.f32.mrb[0].mxu0
        %3622 = vmatprep.mubr.f32.mxu0 0.0
        %3623 = vmatmul.mubr.f32.gmra.mrb[0].mxu0 %v3451
        %v3624 = vpop.f32.mrb[0].mxu0
        %v3625 = vadd.f32 0.0, %v3624
        %v3626 = vpop.f32.mrb[0].mxu0
        %3627 = vmatprep.mubr.f32.mxu0 0.0
        %3628 = vmatmul.mubr.f32.gmra.mrb[0].mxu0 %v3454
        %v3629 = vpop.f32.mrb[0].mxu0
        %v3630 = vadd.f32 0.0, %v3629
        %v3631 = vpop.f32.mrb[0].mxu0
        %3632 = vmatprep.mubr.f32.mxu0 0.0
        %3633 = vmatmul.mubr.f32.gmra.mrb[0].mxu0 %v3457
        %v3634 = vpop.f32.mrb[0].mxu0
        %v3635 = vadd.f32 0.0, %v3634
        %v3636 = vpop.f32.mrb[0].mxu0
        %3637 = vmatprep.mubr.f32.mxu0 0.0
        %3638 = vmatmul.mubr.f32.gmra.mrb[0].mxu0 %v3460
        %v3639 = vpop.f32.mrb[0].mxu0
        %v3640 = vadd.f32 0.0, %v3639
        %v3641 = vpop.f32.mrb[0].mxu0
        %3642 = vmatprep.mubr.f32.mxu0 0.0
        %3643 = vmatmul.mubr.f32.gmra.mrb[0].mxu0 %v3463
        %v3644 = vpop.f32.mrb[0].mxu0
        %v3645 = vadd.f32 0.0, %v3644
        %v3646 = vpop.f32.mrb[0].mxu0
        %3647 = vmatprep.mubr.f32.mxu0 0.0
        %3648 = vmatmul.mubr.f32.gmra.mrb[0].mxu0 %v3466
        %v3649 = vpop.f32.mrb[0].mxu0
        %v3650 = vadd.f32 0.0, %v3649
        %v3651 = vpop.f32.mrb[0].mxu0
        %3652 = vmatprep.mubr.f32.mxu0 0.0
        %3653 = vmatmul.mubr.f32.gmra.mrb[0].mxu0 %v3469
        %v3654 = vpop.f32.mrb[0].mxu0
        %v3655 = vadd.f32 0.0, %v3654
        %v3656 = vpop.f32.mrb[0].mxu0
        %3657 = vmatprep.mubr.f32.mxu0 0.0
        %3658 = vmatmul.mubr.f32.gmra.mrb[0].mxu0 %v3472
        %v3659 = vpop.f32.mrb[0].mxu0
        %v3660 = vadd.f32 0.0, %v3659
        %v3661 = vpop.f32.mrb[0].mxu0
        %3662 = vmatprep.mubr.f32.mxu0 0.0
        %3663 = vmatmul.mubr.f32.gmra.mrb[0].mxu0 %v3475
        %v3664 = vpop.f32.mrb[0].mxu0
        %v3665 = vadd.f32 0.0, %v3664
        %v3666 = vpop.f32.mrb[0].mxu0
        %3667 = vmatprep.mubr.f32.mxu0 0.0
        %3668 = vmatmul.mubr.f32.gmra.mrb[0].mxu0 %v3478
        %v3669 = vpop.f32.mrb[0].mxu0
        %v3670 = vadd.f32 0.0, %v3669
        %v3671 = vpop.f32.mrb[0].mxu0
        %3672 = vmatprep.mubr.f32.mxu0 0.0
        %3673 = vmatmul.mubr.f32.gmra.mrb[0].mxu0 %v3481
        %v3674 = vpop.f32.mrb[0].mxu0
        %v3675 = vadd.f32 0.0, %v3674
        %v3676 = vpop.f32.mrb[0].mxu0
        %3677 = vmatprep.mubr.f32.mxu0 0.0
        %3678 = vmatmul.mubr.f32.gmra.mrb[0].mxu0 %v3484
        %v3679 = vpop.f32.mrb[0].mxu0
        %v3680 = vadd.f32 0.0, %v3679
        %v3681 = vpop.f32.mrb[0].mxu0
        %3682 = vmatprep.mubr.f32.mxu0 0.0
        %3683 = vmatmul.mubr.f32.gmra.mrb[0].mxu0 %v3487
        %v3684 = vpop.f32.mrb[0].mxu0
        %v3685 = vadd.f32 0.0, %v3684
        %v3686 = vpop.f32.mrb[0].mxu0
        %3687 = vmatprep.mubr.f32.mxu0 0.0
        %3688 = vmatmul.mubr.f32.gmra.mrb[0].mxu0 %v3490
        %v3689 = vpop.f32.mrb[0].mxu0
        %v3690 = vadd.f32 0.0, %v3689
        %v3691 = vpop.f32.mrb[0].mxu0
        %3692 = vmatprep.mubr.f32.mxu0 0.0
        %3693 = vmatmul.mubr.f32.gmra.mrb[0].mxu0 %v3493
        %v3694 = vpop.f32.mrb[0].mxu0
        %v3695 = vadd.f32 0.0, %v3694
        %v3696 = vpop.f32.mrb[0].mxu0
        %3697 = vmatprep.mubr.f32.mxu0 0.0
        %3698 = vmatmul.mubr.f32.gmra.mrb[0].mxu0 %v3496
        %v3699 = vpop.f32.mrb[0].mxu0
        %v3700 = vadd.f32 0.0, %v3699
        %v3701 = vpop.f32.mrb[0].mxu0
        %3702 = vmatprep.mubr.f32.mxu0 0.0
        %3703 = vmatmul.mubr.f32.gmra.mrb[0].mxu0 %v3499
        %v3704 = vpop.f32.mrb[0].mxu0
        %v3705 = vadd.f32 0.0, %v3704
        %v3706 = vpop.f32.mrb[0].mxu0
        %3707 = vmatprep.mubr.f32.mxu0 0.0
        %3708 = vmatmul.mubr.f32.gmra.mrb[0].mxu0 %v3502
        %v3709 = vpop.f32.mrb[0].mxu0
        %v3710 = vadd.f32 0.0, %v3709
        %v3711 = vpop.f32.mrb[0].mxu0
        %3712 = vmatprep.mubr.f32.mxu0 0.0
        %3713 = vmatmul.mubr.f32.gmra.mrb[0].mxu0 %v3505
        %v3714 = vpop.f32.mrb[0].mxu0
        %v3715 = vadd.f32 0.0, %v3714
        %v3716 = vpop.f32.mrb[0].mxu0
        %3717 = vmatprep.mubr.f32.mxu0 0.0
        %3718 = vmatmul.mubr.f32.gmra.mrb[0].mxu0 %v3508
        %v3719 = vpop.f32.mrb[0].mxu0
        %v3720 = vadd.f32 0.0, %v3719
        %v3721 = vpop.f32.mrb[0].mxu0
        %3722 = vmatprep.mubr.f32.mxu0 0.0
        %3723 = vmatmul.mubr.f32.gmra.mrb[0].mxu0 %v3511
        %v3724 = vpop.f32.mrb[0].mxu0
        %v3725 = vadd.f32 0.0, %v3724
        %v3726 = vpop.f32.mrb[0].mxu0
        %3727 = vmatprep.mubr.f32.mxu0 0.0
        %3728 = vmatmul.mubr.f32.gmra.mrb[0].mxu0 %v3514
        %v3729 = vpop.f32.mrb[0].mxu0
        %v3730 = vadd.f32 0.0, %v3729
        %v3731 = vpop.f32.mrb[0].mxu0
        %3732 = vmatprep.mubr.f32.mxu0 0.0
        %3733 = vmatmul.mubr.f32.gmra.mrb[0].mxu0 %v3517
        %v3734 = vpop.f32.mrb[0].mxu0
        %v3735 = vadd.f32 0.0, %v3734
        %v3736 = vpop.f32.mrb[0].mxu0
        %3737 = vmatprep.mubr.f32.mxu0 0.0
        %3738 = vmatmul.mubr.f32.gmra.mrb[0].mxu0 %v3520
        %v3739 = vpop.f32.mrb[0].mxu0
        %v3740 = vadd.f32 0.0, %v3739
        %v3741 = vpop.f32.mrb[0].mxu0
        %3742 = vmatprep.mubr.f32.mxu0 0.0
        %3743 = vmatmul.mubr.f32.gmra.mrb[0].mxu0 %v3523
        %v3744 = vpop.f32.mrb[0].mxu0
        %v3745 = vadd.f32 0.0, %v3744
        %v3746 = vpop.f32.mrb[0].mxu0
        %3747 = vmatprep.mubr.f32.mxu0 0.0
        %3748 = vmatmul.mubr.f32.gmra.mrb[0].mxu0 %v3526
        %v3749 = vpop.f32.mrb[0].mxu0
        %v3750 = vadd.f32 0.0, %v3749
        %v3751 = vpop.f32.mrb[0].mxu0
        %3752 = vdwg.mxu0
        %v3753 = vadd.f32 %v3361, %v3595
        %v3754 = vadd.f32 %v3362, %v3600
        %v3755 = vadd.f32 %v3363, %v3605
        %v3756 = vadd.f32 %v3364, %v3610
        %v3757 = vadd.f32 %v3365, %v3615
        %v3758 = vadd.f32 %v3366, %v3620
        %v3759 = vadd.f32 %v3367, %v3625
        %v3760 = vadd.f32 %v3368, %v3630
        %v3761 = vadd.f32 %v3369, %v3635
        %v3762 = vadd.f32 %v3370, %v3640
        %v3763 = vadd.f32 %v3371, %v3645
        %v3764 = vadd.f32 %v3372, %v3650
        %v3765 = vadd.f32 %v3373, %v3655
        %v3766 = vadd.f32 %v3374, %v3660
        %v3767 = vadd.f32 %v3375, %v3665
        %v3768 = vadd.f32 %v3376, %v3670
        %v3769 = vadd.f32 %v3377, %v3675
        %v3770 = vadd.f32 %v3378, %v3680
        %v3771 = vadd.f32 %v3379, %v3685
        %v3772 = vadd.f32 %v3380, %v3690
        %v3773 = vadd.f32 %v3381, %v3695
        %v3774 = vadd.f32 %v3382, %v3700
        %v3775 = vadd.f32 %v3383, %v3705
        %v3776 = vadd.f32 %v3384, %v3710
        %v3777 = vadd.f32 %v3385, %v3715
        %v3778 = vadd.f32 %v3386, %v3720
        %v3779 = vadd.f32 %v3387, %v3725
        %v3780 = vadd.f32 %v3388, %v3730
        %v3781 = vadd.f32 %v3389, %v3735
        %v3782 = vadd.f32 %v3390, %v3740
        %v3783 = vadd.f32 %v3391, %v3745
        %v3784 = vadd.f32 %v3392, %v3750
        %v3785 = vld [vmem:[%s3000 + $0x2] sm:$0xff]
        %v3786 = vld [vmem:[%s3000 + $0xa] sm:$0xff]
        %v3787 = vld [vmem:[%s3000 + $0x1a] sm:$0xff]
        %v3788 = vld [vmem:[%s3000 + $0x22] sm:$0xff]
        %v3789 = vld [vmem:[%s3000 + $0x32] sm:$0xff]
        %v3790 = vld [vmem:[%s3000 + $0x3a] sm:$0xff]
        %v3791 = vld [vmem:[%s3000 + $0x4a] sm:$0xff]
        %v3792 = vld [vmem:[%s3000 + $0x52] sm:$0xff]
        %v3793 = vld [vmem:[%s3000 + $0x62] sm:$0xff]
        %v3794 = vld [vmem:[%s3000 + $0x6a] sm:$0xff]
        %v3795 = vld [vmem:[%s3000 + $0x7a] sm:$0xff]
        %v3796 = vld [vmem:[%s3000 + $0x82] sm:$0xff]
        %v3797 = vld [vmem:[%s3000 + $0x92] sm:$0xff]
        %v3798 = vld [vmem:[%s3000 + $0x9a] sm:$0xff]
        %v3799 = vld [vmem:[%s3000 + $0xaa] sm:$0xff]
        %v3800 = vld [vmem:[%s3000 + $0xb2] sm:$0xff]
        %v3801 = vld [vmem:[%s3000 + $0xc2] sm:$0xff]
        %v3802 = vld [vmem:[%s3000 + $0xca] sm:$0xff]
        %v3803 = vld [vmem:[%s3000 + $0xda] sm:$0xff]
        %v3804 = vld [vmem:[%s3000 + $0xe2] sm:$0xff]
        %v3805 = vld [vmem:[%s3000 + $0xf2] sm:$0xff]
        %v3806 = vld [vmem:[%s3000 + $0xfa] sm:$0xff]
        %v3807 = vld [vmem:[%s3000 + $0x10a] sm:$0xff]
        %v3808 = vld [vmem:[%s3000 + $0x112] sm:$0xff]
        %v3809 = vld [vmem:[%s3000 + $0x122] sm:$0xff]
        %v3810 = vld [vmem:[%s3000 + $0x12a] sm:$0xff]
        %v3811 = vld [vmem:[%s3000 + $0x13a] sm:$0xff]
        %v3812 = vld [vmem:[%s3000 + $0x142] sm:$0xff]
        %v3813 = vld [vmem:[%s3000 + $0x152] sm:$0xff]
        %v3814 = vld [vmem:[%s3000 + $0x15a] sm:$0xff]
        %v3815 = vld [vmem:[%s3000 + $0x16a] sm:$0xff]
        %v3816 = vld [vmem:[%s3000 + $0x172] sm:$0xff]
        %s3817 = scalar_lea.vmem %s3, 384
        %v3818 = vld [vmem:[%s3817] sm:$0xff]
        %v3819 = vld [vmem:[%s3817 + $0x8] sm:$0xff]
        %v3820 = vld [vmem:[%s3817 + $0x10] sm:$0xff]
        %v3821 = vld [vmem:[%s3817 + $0x18] sm:$0xff]
        %v3822 = vld [vmem:[%s3817 + $0x20] sm:$0xff]
        %v3823 = vld [vmem:[%s3817 + $0x28] sm:$0xff]
        %v3825 = vsel %vm624, %v3785, 0
        %v3828 = vsel %vm624, %v3786, 0
        %v3831 = vsel %vm624, %v3787, 0
        %v3834 = vsel %vm624, %v3788, 0
        %v3837 = vsel %vm624, %v3789, 0
        %v3840 = vsel %vm624, %v3790, 0
        %v3843 = vsel %vm624, %v3791, 0
        %v3846 = vsel %vm624, %v3792, 0
        %v3849 = vsel %vm624, %v3793, 0
        %v3852 = vsel %vm624, %v3794, 0
        %v3855 = vsel %vm624, %v3795, 0
        %v3858 = vsel %vm624, %v3796, 0
        %v3861 = vsel %vm624, %v3797, 0
        %v3864 = vsel %vm624, %v3798, 0
        %v3867 = vsel %vm624, %v3799, 0
        %v3870 = vsel %vm624, %v3800, 0
        %v3873 = vsel %vm624, %v3801, 0
        %v3876 = vsel %vm624, %v3802, 0
        %v3879 = vsel %vm624, %v3803, 0
        %v3882 = vsel %vm624, %v3804, 0
        %v3885 = vsel %vm624, %v3805, 0
        %v3888 = vsel %vm624, %v3806, 0
        %v3891 = vsel %vm624, %v3807, 0
        %v3894 = vsel %vm624, %v3808, 0
        %v3897 = vsel %vm624, %v3809, 0
        %v3900 = vsel %vm624, %v3810, 0
        %v3903 = vsel %vm624, %v3811, 0
        %v3906 = vsel %vm624, %v3812, 0
        %v3909 = vsel %vm624, %v3813, 0
        %v3912 = vsel %vm624, %v3814, 0
        %v3915 = vsel %vm624, %v3815, 0
        %v3918 = vsel %vm624, %v3816, 0
        %3920 = vmatprep.subr.mxu0 0.0
        %3921 = vmatpush1.msra.mxu0 %v3818
        %3922 = vmatprep.subr.mxu0 0.0
        %3923 = vmatpush1.msra.mxu0 %v3819
        %3924 = vmatprep.subr.mxu0 0.0
        %3925 = vmatpush1.msra.mxu0 %v3820
        %3926 = vmatprep.subr.mxu0 0.0
        %3927 = vmatpush1.msra.mxu0 %v3821
        %3928 = vmatprep.subr.mxu0 0.0
        %3929 = vmatpush1.msra.mxu0 %v3822
        %3930 = vmatprep.subr.mxu0 0.0
        %3931 = vmatpush1.msra.mxu0 %v3823
        %3932 = vmatprep.subr.mxu0 0.0
        %3933 = vmatpush1.msra.mxu0 0.0
        %3934 = vmatprep.subr.mxu0 0.0
        %3935 = vmatpush1.msra.mxu0 0.0
        %3936 = vmatprep.subr.mxu0 0.0
        %3937 = vmatpush1.msra.mxu0 0.0
        %3938 = vmatprep.subr.mxu0 0.0
        %3939 = vmatpush1.msra.mxu0 0.0
        %3940 = vmatprep.subr.mxu0 0.0
        %3941 = vmatpush1.msra.mxu0 0.0
        %3942 = vmatprep.subr.mxu0 0.0
        %3943 = vmatpush1.msra.mxu0 0.0
        %3944 = vmatprep.subr.mxu0 0.0
        %3945 = vmatpush1.msra.mxu0 0.0
        %3946 = vmatprep.subr.mxu0 0.0
        %3947 = vmatpush1.msra.mxu0 0.0
        %3948 = vmatprep.subr.mxu0 0.0
        %3949 = vmatpush1.msra.mxu0 0.0
        %3950 = vmatprep.subr.mxu0 0.0
        %3951 = vmatpush1.msra.mxu0 0.0
        %3952 = vmatprep.subr.mxu0 0.0
        %3953 = vmatpush1.msra.mxu0 0.0
        %3954 = vmatprep.subr.mxu0 0.0
        %3955 = vmatpush1.msra.mxu0 0.0
        %3956 = vmatprep.subr.mxu0 0.0
        %3957 = vmatpush1.msra.mxu0 0.0
        %3958 = vmatprep.subr.mxu0 0.0
        %3959 = vmatpush1.msra.mxu0 0.0
        %3960 = vmatprep.subr.mxu0 0.0
        %3961 = vmatpush1.msra.mxu0 0.0
        %3962 = vmatprep.subr.mxu0 0.0
        %3963 = vmatpush1.msra.mxu0 0.0
        %3964 = vmatprep.subr.mxu0 0.0
        %3965 = vmatpush1.msra.mxu0 0.0
        %3966 = vmatprep.subr.mxu0 0.0
        %3967 = vmatpush1.msra.mxu0 0.0
        %3968 = vmatprep.subr.mxu0 0.0
        %3969 = vmatpush1.msra.mxu0 0.0
        %3970 = vmatprep.subr.mxu0 0.0
        %3971 = vmatpush1.msra.mxu0 0.0
        %3972 = vmatprep.subr.mxu0 0.0
        %3973 = vmatpush1.msra.mxu0 0.0
        %3974 = vmatprep.subr.mxu0 0.0
        %3975 = vmatpush1.msra.mxu0 0.0
        %3976 = vmatprep.subr.mxu0 0.0
        %3977 = vmatpush1.msra.mxu0 0.0
        %3978 = vmatprep.subr.mxu0 0.0
        %3979 = vmatpush1.msra.mxu0 0.0
        %3980 = vmatprep.subr.mxu0 0.0
        %3981 = vmatpush1.msra.mxu0 0.0
        %3982 = vmatprep.subr.mxu0 0.0
        %3983 = vmatpush1.msra.mxu0 0.0
        %3984 = vmatprep.mubr.f32.mxu0 0.0
        %3985 = vmatmul.mubr.f32.gmra.mrb[0].mxu0 %v3825
        %v3986 = vpop.f32.mrb[0].mxu0
        %v3987 = vadd.f32 0.0, %v3986
        %v3988 = vpop.f32.mrb[0].mxu0
        %3989 = vmatprep.mubr.f32.mxu0 0.0
        %3990 = vmatmul.mubr.f32.gmra.mrb[0].mxu0 %v3828
        %v3991 = vpop.f32.mrb[0].mxu0
        %v3992 = vadd.f32 0.0, %v3991
        %v3993 = vpop.f32.mrb[0].mxu0
        %3994 = vmatprep.mubr.f32.mxu0 0.0
        %3995 = vmatmul.mubr.f32.gmra.mrb[0].mxu0 %v3831
        %v3996 = vpop.f32.mrb[0].mxu0
        %v3997 = vadd.f32 0.0, %v3996
        %v3998 = vpop.f32.mrb[0].mxu0
        %3999 = vmatprep.mubr.f32.mxu0 0.0
        %4000 = vmatmul.mubr.f32.gmra.mrb[0].mxu0 %v3834
        %v4001 = vpop.f32.mrb[0].mxu0
        %v4002 = vadd.f32 0.0, %v4001
        %v4003 = vpop.f32.mrb[0].mxu0
        %4004 = vmatprep.mubr.f32.mxu0 0.0
        %4005 = vmatmul.mubr.f32.gmra.mrb[0].mxu0 %v3837
        %v4006 = vpop.f32.mrb[0].mxu0
        %v4007 = vadd.f32 0.0, %v4006
        %v4008 = vpop.f32.mrb[0].mxu0
        %4009 = vmatprep.mubr.f32.mxu0 0.0
        %4010 = vmatmul.mubr.f32.gmra.mrb[0].mxu0 %v3840
        %v4011 = vpop.f32.mrb[0].mxu0
        %v4012 = vadd.f32 0.0, %v4011
        %v4013 = vpop.f32.mrb[0].mxu0
        %4014 = vmatprep.mubr.f32.mxu0 0.0
        %4015 = vmatmul.mubr.f32.gmra.mrb[0].mxu0 %v3843
        %v4016 = vpop.f32.mrb[0].mxu0
        %v4017 = vadd.f32 0.0, %v4016
        %v4018 = vpop.f32.mrb[0].mxu0
        %4019 = vmatprep.mubr.f32.mxu0 0.0
        %4020 = vmatmul.mubr.f32.gmra.mrb[0].mxu0 %v3846
        %v4021 = vpop.f32.mrb[0].mxu0
        %v4022 = vadd.f32 0.0, %v4021
        %v4023 = vpop.f32.mrb[0].mxu0
        %4024 = vmatprep.mubr.f32.mxu0 0.0
        %4025 = vmatmul.mubr.f32.gmra.mrb[0].mxu0 %v3849
        %v4026 = vpop.f32.mrb[0].mxu0
        %v4027 = vadd.f32 0.0, %v4026
        %v4028 = vpop.f32.mrb[0].mxu0
        %4029 = vmatprep.mubr.f32.mxu0 0.0
        %4030 = vmatmul.mubr.f32.gmra.mrb[0].mxu0 %v3852
        %v4031 = vpop.f32.mrb[0].mxu0
        %v4032 = vadd.f32 0.0, %v4031
        %v4033 = vpop.f32.mrb[0].mxu0
        %4034 = vmatprep.mubr.f32.mxu0 0.0
        %4035 = vmatmul.mubr.f32.gmra.mrb[0].mxu0 %v3855
        %v4036 = vpop.f32.mrb[0].mxu0
        %v4037 = vadd.f32 0.0, %v4036
        %v4038 = vpop.f32.mrb[0].mxu0
        %4039 = vmatprep.mubr.f32.mxu0 0.0
        %4040 = vmatmul.mubr.f32.gmra.mrb[0].mxu0 %v3858
        %v4041 = vpop.f32.mrb[0].mxu0
        %v4042 = vadd.f32 0.0, %v4041
        %v4043 = vpop.f32.mrb[0].mxu0
        %4044 = vmatprep.mubr.f32.mxu0 0.0
        %4045 = vmatmul.mubr.f32.gmra.mrb[0].mxu0 %v3861
        %v4046 = vpop.f32.mrb[0].mxu0
        %v4047 = vadd.f32 0.0, %v4046
        %v4048 = vpop.f32.mrb[0].mxu0
        %4049 = vmatprep.mubr.f32.mxu0 0.0
        %4050 = vmatmul.mubr.f32.gmra.mrb[0].mxu0 %v3864
        %v4051 = vpop.f32.mrb[0].mxu0
        %v4052 = vadd.f32 0.0, %v4051
        %v4053 = vpop.f32.mrb[0].mxu0
        %4054 = vmatprep.mubr.f32.mxu0 0.0
        %4055 = vmatmul.mubr.f32.gmra.mrb[0].mxu0 %v3867
        %v4056 = vpop.f32.mrb[0].mxu0
        %v4057 = vadd.f32 0.0, %v4056
        %v4058 = vpop.f32.mrb[0].mxu0
        %4059 = vmatprep.mubr.f32.mxu0 0.0
        %4060 = vmatmul.mubr.f32.gmra.mrb[0].mxu0 %v3870
        %v4061 = vpop.f32.mrb[0].mxu0
        %v4062 = vadd.f32 0.0, %v4061
        %v4063 = vpop.f32.mrb[0].mxu0
        %4064 = vmatprep.mubr.f32.mxu0 0.0
        %4065 = vmatmul.mubr.f32.gmra.mrb[0].mxu0 %v3873
        %v4066 = vpop.f32.mrb[0].mxu0
        %v4067 = vadd.f32 0.0, %v4066
        %v4068 = vpop.f32.mrb[0].mxu0
        %4069 = vmatprep.mubr.f32.mxu0 0.0
        %4070 = vmatmul.mubr.f32.gmra.mrb[0].mxu0 %v3876
        %v4071 = vpop.f32.mrb[0].mxu0
        %v4072 = vadd.f32 0.0, %v4071
        %v4073 = vpop.f32.mrb[0].mxu0
        %4074 = vmatprep.mubr.f32.mxu0 0.0
        %4075 = vmatmul.mubr.f32.gmra.mrb[0].mxu0 %v3879
        %v4076 = vpop.f32.mrb[0].mxu0
        %v4077 = vadd.f32 0.0, %v4076
        %v4078 = vpop.f32.mrb[0].mxu0
        %4079 = vmatprep.mubr.f32.mxu0 0.0
        %4080 = vmatmul.mubr.f32.gmra.mrb[0].mxu0 %v3882
        %v4081 = vpop.f32.mrb[0].mxu0
        %v4082 = vadd.f32 0.0, %v4081
        %v4083 = vpop.f32.mrb[0].mxu0
        %4084 = vmatprep.mubr.f32.mxu0 0.0
        %4085 = vmatmul.mubr.f32.gmra.mrb[0].mxu0 %v3885
        %v4086 = vpop.f32.mrb[0].mxu0
        %v4087 = vadd.f32 0.0, %v4086
        %v4088 = vpop.f32.mrb[0].mxu0
        %4089 = vmatprep.mubr.f32.mxu0 0.0
        %4090 = vmatmul.mubr.f32.gmra.mrb[0].mxu0 %v3888
        %v4091 = vpop.f32.mrb[0].mxu0
        %v4092 = vadd.f32 0.0, %v4091
        %v4093 = vpop.f32.mrb[0].mxu0
        %4094 = vmatprep.mubr.f32.mxu0 0.0
        %4095 = vmatmul.mubr.f32.gmra.mrb[0].mxu0 %v3891
        %v4096 = vpop.f32.mrb[0].mxu0
        %v4097 = vadd.f32 0.0, %v4096
        %v4098 = vpop.f32.mrb[0].mxu0
        %4099 = vmatprep.mubr.f32.mxu0 0.0
        %4100 = vmatmul.mubr.f32.gmra.mrb[0].mxu0 %v3894
        %v4101 = vpop.f32.mrb[0].mxu0
        %v4102 = vadd.f32 0.0, %v4101
        %v4103 = vpop.f32.mrb[0].mxu0
        %4104 = vmatprep.mubr.f32.mxu0 0.0
        %4105 = vmatmul.mubr.f32.gmra.mrb[0].mxu0 %v3897
        %v4106 = vpop.f32.mrb[0].mxu0
        %v4107 = vadd.f32 0.0, %v4106
        %v4108 = vpop.f32.mrb[0].mxu0
        %4109 = vmatprep.mubr.f32.mxu0 0.0
        %4110 = vmatmul.mubr.f32.gmra.mrb[0].mxu0 %v3900
        %v4111 = vpop.f32.mrb[0].mxu0
        %v4112 = vadd.f32 0.0, %v4111
        %v4113 = vpop.f32.mrb[0].mxu0
        %4114 = vmatprep.mubr.f32.mxu0 0.0
        %4115 = vmatmul.mubr.f32.gmra.mrb[0].mxu0 %v3903
        %v4116 = vpop.f32.mrb[0].mxu0
        %v4117 = vadd.f32 0.0, %v4116
        %v4118 = vpop.f32.mrb[0].mxu0
        %4119 = vmatprep.mubr.f32.mxu0 0.0
        %4120 = vmatmul.mubr.f32.gmra.mrb[0].mxu0 %v3906
        %v4121 = vpop.f32.mrb[0].mxu0
        %v4122 = vadd.f32 0.0, %v4121
        %v4123 = vpop.f32.mrb[0].mxu0
        %4124 = vmatprep.mubr.f32.mxu0 0.0
        %4125 = vmatmul.mubr.f32.gmra.mrb[0].mxu0 %v3909
        %v4126 = vpop.f32.mrb[0].mxu0
        %v4127 = vadd.f32 0.0, %v4126
        %v4128 = vpop.f32.mrb[0].mxu0
        %4129 = vmatprep.mubr.f32.mxu0 0.0
        %4130 = vmatmul.mubr.f32.gmra.mrb[0].mxu0 %v3912
        %v4131 = vpop.f32.mrb[0].mxu0
        %v4132 = vadd.f32 0.0, %v4131
        %v4133 = vpop.f32.mrb[0].mxu0
        %4134 = vmatprep.mubr.f32.mxu0 0.0
        %4135 = vmatmul.mubr.f32.gmra.mrb[0].mxu0 %v3915
        %v4136 = vpop.f32.mrb[0].mxu0
        %v4137 = vadd.f32 0.0, %v4136
        %v4138 = vpop.f32.mrb[0].mxu0
        %4139 = vmatprep.mubr.f32.mxu0 0.0
        %4140 = vmatmul.mubr.f32.gmra.mrb[0].mxu0 %v3918
        %v4141 = vpop.f32.mrb[0].mxu0
        %v4142 = vadd.f32 0.0, %v4141
        %v4143 = vpop.f32.mrb[0].mxu0
        %4144 = vdwg.mxu0
        %v4145 = vadd.f32 %v3753, %v3987
        %v4146 = vadd.f32 %v3754, %v3992
        %v4147 = vadd.f32 %v3755, %v3997
        %v4148 = vadd.f32 %v3756, %v4002
        %v4149 = vadd.f32 %v3757, %v4007
        %v4150 = vadd.f32 %v3758, %v4012
        %v4151 = vadd.f32 %v3759, %v4017
        %v4152 = vadd.f32 %v3760, %v4022
        %v4153 = vadd.f32 %v3761, %v4027
        %v4154 = vadd.f32 %v3762, %v4032
        %v4155 = vadd.f32 %v3763, %v4037
        %v4156 = vadd.f32 %v3764, %v4042
        %v4157 = vadd.f32 %v3765, %v4047
        %v4158 = vadd.f32 %v3766, %v4052
        %v4159 = vadd.f32 %v3767, %v4057
        %v4160 = vadd.f32 %v3768, %v4062
        %v4161 = vadd.f32 %v3769, %v4067
        %v4162 = vadd.f32 %v3770, %v4072
        %v4163 = vadd.f32 %v3771, %v4077
        %v4164 = vadd.f32 %v3772, %v4082
        %v4165 = vadd.f32 %v3773, %v4087
        %v4166 = vadd.f32 %v3774, %v4092
        %v4167 = vadd.f32 %v3775, %v4097
        %v4168 = vadd.f32 %v3776, %v4102
        %v4169 = vadd.f32 %v3777, %v4107
        %v4170 = vadd.f32 %v3778, %v4112
        %v4171 = vadd.f32 %v3779, %v4117
        %v4172 = vadd.f32 %v3780, %v4122
        %v4173 = vadd.f32 %v3781, %v4127
        %v4174 = vadd.f32 %v3782, %v4132
        %v4175 = vadd.f32 %v3783, %v4137
        %v4176 = vadd.f32 %v3784, %v4142
        %v4177 = vld [vmem:[%s4] sm:$0x1]
        %v4179 = vlaneseq
        %v4180 = vshrl.u32 %v4179, 7
        %v4181 = vsub.s32 0, %v4180
        %v4182 = vrot.slane %v4177, %v4181
        %v4184 = vadd.f32 %v4145, %v4182
        %v4185 = vadd.f32 %v4146, %v4182
        %v4186 = vadd.f32 %v4147, %v4182
        %v4187 = vadd.f32 %v4148, %v4182
        %v4188 = vadd.f32 %v4149, %v4182
        %v4189 = vadd.f32 %v4150, %v4182
        %v4190 = vadd.f32 %v4151, %v4182
        %v4191 = vadd.f32 %v4152, %v4182
        %v4192 = vadd.f32 %v4153, %v4182
        %v4193 = vadd.f32 %v4154, %v4182
        %v4194 = vadd.f32 %v4155, %v4182
        %v4195 = vadd.f32 %v4156, %v4182
        %v4196 = vadd.f32 %v4157, %v4182
        %v4197 = vadd.f32 %v4158, %v4182
        %v4198 = vadd.f32 %v4159, %v4182
        %v4199 = vadd.f32 %v4160, %v4182
        %v4200 = vadd.f32 %v4161, %v4182
        %v4201 = vadd.f32 %v4162, %v4182
        %v4202 = vadd.f32 %v4163, %v4182
        %v4203 = vadd.f32 %v4164, %v4182
        %v4204 = vadd.f32 %v4165, %v4182
        %v4205 = vadd.f32 %v4166, %v4182
        %v4206 = vadd.f32 %v4167, %v4182
        %v4207 = vadd.f32 %v4168, %v4182
        %v4208 = vadd.f32 %v4169, %v4182
        %v4209 = vadd.f32 %v4170, %v4182
        %v4210 = vadd.f32 %v4171, %v4182
        %v4211 = vadd.f32 %v4172, %v4182
        %v4212 = vadd.f32 %v4173, %v4182
        %v4213 = vadd.f32 %v4174, %v4182
        %v4214 = vadd.f32 %v4175, %v4182
        %v4215 = vadd.f32 %v4176, %v4182
        %v4216 = vmax.f32 %v4184, 0.0
        %v4217 = vmax.f32 %v4185, 0.0
        %v4218 = vmax.f32 %v4186, 0.0
        %v4219 = vmax.f32 %v4187, 0.0
        %v4220 = vmax.f32 %v4188, 0.0
        %v4221 = vmax.f32 %v4189, 0.0
        %v4222 = vmax.f32 %v4190, 0.0
        %v4223 = vmax.f32 %v4191, 0.0
        %v4224 = vmax.f32 %v4192, 0.0
        %v4225 = vmax.f32 %v4193, 0.0
        %v4226 = vmax.f32 %v4194, 0.0
        %v4227 = vmax.f32 %v4195, 0.0
        %v4228 = vmax.f32 %v4196, 0.0
        %v4229 = vmax.f32 %v4197, 0.0
        %v4230 = vmax.f32 %v4198, 0.0
        %v4231 = vmax.f32 %v4199, 0.0
        %v4232 = vmax.f32 %v4200, 0.0
        %v4233 = vmax.f32 %v4201, 0.0
        %v4234 = vmax.f32 %v4202, 0.0
        %v4235 = vmax.f32 %v4203, 0.0
        %v4236 = vmax.f32 %v4204, 0.0
        %v4237 = vmax.f32 %v4205, 0.0
        %v4238 = vmax.f32 %v4206, 0.0
        %v4239 = vmax.f32 %v4207, 0.0
        %v4240 = vmax.f32 %v4208, 0.0
        %v4241 = vmax.f32 %v4209, 0.0
        %v4242 = vmax.f32 %v4210, 0.0
        %v4243 = vmax.f32 %v4211, 0.0
        %v4244 = vmax.f32 %v4212, 0.0
        %v4245 = vmax.f32 %v4213, 0.0
        %v4246 = vmax.f32 %v4214, 0.0
        %v4247 = vmax.f32 %v4215, 0.0
        %vm4248 = vcmask 785408
        %4249 = vst.msk [vmem:[#allocation3] sm:$0xff] %vm4248, 0.0
        %4250 = vst.msk [vmem:[#allocation3 + $0x8] sm:$0xff] %vm4248, 0.0
        %vm4251 = vcmask 779264
        %4252 = vst.msk [vmem:[#allocation3 + $0x10] sm:$0x3] %vm4251, 0.0
        %4253 = vst.msk [vmem:[#allocation3 + $0x18] sm:$0xff] %vm4248, 0.0
        %4254 = vst.msk [vmem:[#allocation3 + $0x20] sm:$0xff] %vm4248, 0.0
        %4255 = vst.msk [vmem:[#allocation3 + $0x28] sm:$0x3] %vm4251, 0.0
        %4256 = vst.msk [vmem:[#allocation3 + $0x30] sm:$0xff] %vm4248, 0.0
        %4257 = vst.msk [vmem:[#allocation3 + $0x38] sm:$0xff] %vm4248, 0.0
        %4258 = vst.msk [vmem:[#allocation3 + $0x40] sm:$0x3] %vm4251, 0.0
        %4259 = vst.msk [vmem:[#allocation3 + $0x48] sm:$0xff] %vm4248, 0.0
        %4260 = vst.msk [vmem:[#allocation3 + $0x50] sm:$0xff] %vm4248, 0.0
        %4261 = vst.msk [vmem:[#allocation3 + $0x58] sm:$0x3] %vm4251, 0.0
        %4262 = vst.msk [vmem:[#allocation3 + $0x60] sm:$0xff] %vm4248, 0.0
        %4263 = vst.msk [vmem:[#allocation3 + $0x68] sm:$0xff] %vm4248, 0.0
        %4264 = vst.msk [vmem:[#allocation3 + $0x70] sm:$0x3] %vm4251, 0.0
        %4265 = vst.msk [vmem:[#allocation3 + $0x78] sm:$0xff] %vm4248, 0.0
        %4266 = vst.msk [vmem:[#allocation3 + $0x80] sm:$0xff] %vm4248, 0.0
        %4267 = vst.msk [vmem:[#allocation3 + $0x88] sm:$0x3] %vm4251, 0.0
        %4268 = vst.msk [vmem:[#allocation3 + $0x90] sm:$0xff] %vm4248, 0.0
        %4269 = vst.msk [vmem:[#allocation3 + $0x98] sm:$0xff] %vm4248, 0.0
        %4270 = vst.msk [vmem:[#allocation3 + $0xa0] sm:$0x3] %vm4251, 0.0
        %4271 = vst.msk [vmem:[#allocation3 + $0xa8] sm:$0xff] %vm4248, 0.0
        %4272 = vst.msk [vmem:[#allocation3 + $0xb0] sm:$0xff] %vm4248, 0.0
        %4273 = vst.msk [vmem:[#allocation3 + $0xb8] sm:$0x3] %vm4251, 0.0
        %4274 = vst.msk [vmem:[#allocation3 + $0xc0] sm:$0xff] %vm4248, 0.0
        %4275 = vst.msk [vmem:[#allocation3 + $0xc8] sm:$0xff] %vm4248, 0.0
        %4276 = vst.msk [vmem:[#allocation3 + $0xd0] sm:$0x3] %vm4251, 0.0
        %4277 = vst.msk [vmem:[#allocation3 + $0xd8] sm:$0xff] %vm4248, 0.0
        %4278 = vst.msk [vmem:[#allocation3 + $0xe0] sm:$0xff] %vm4248, 0.0
        %4279 = vst.msk [vmem:[#allocation3 + $0xe8] sm:$0x3] %vm4251, 0.0
        %4280 = vst.msk [vmem:[#allocation3 + $0xf0] sm:$0xff] %vm4248, 0.0
        %4281 = vst.msk [vmem:[#allocation3 + $0xf8] sm:$0xff] %vm4248, 0.0
        %4282 = vst.msk [vmem:[#allocation3 + $0x100] sm:$0x3] %vm4251, 0.0
        %4283 = vst.msk [vmem:[#allocation3 + $0x108] sm:$0xff] %vm4248, 0.0
        %4284 = vst.msk [vmem:[#allocation3 + $0x110] sm:$0xff] %vm4248, 0.0
        %4285 = vst.msk [vmem:[#allocation3 + $0x118] sm:$0x3] %vm4251, 0.0
        %4286 = vst.msk [vmem:[#allocation3 + $0x120] sm:$0xff] %vm4248, 0.0
        %4287 = vst.msk [vmem:[#allocation3 + $0x128] sm:$0xff] %vm4248, 0.0
        %4288 = vst.msk [vmem:[#allocation3 + $0x130] sm:$0x3] %vm4251, 0.0
        %4289 = vst.msk [vmem:[#allocation3 + $0x138] sm:$0xff] %vm4248, 0.0
        %4290 = vst.msk [vmem:[#allocation3 + $0x140] sm:$0xff] %vm4248, 0.0
        %4291 = vst.msk [vmem:[#allocation3 + $0x148] sm:$0x3] %vm4251, 0.0
        %4292 = vst.msk [vmem:[#allocation3 + $0x150] sm:$0xff] %vm4248, 0.0
        %4293 = vst.msk [vmem:[#allocation3 + $0x158] sm:$0xff] %vm4248, 0.0
        %4294 = vst.msk [vmem:[#allocation3 + $0x160] sm:$0x3] %vm4251, 0.0
        %4295 = vst.msk [vmem:[#allocation3 + $0x168] sm:$0xff] %vm4248, 0.0
        %4296 = vst.msk [vmem:[#allocation3 + $0x170] sm:$0xff] %vm4248, 0.0
        %4297 = vst.msk [vmem:[#allocation3 + $0x178] sm:$0x3] %vm4251, 0.0
        %4298 = vst.msk [vmem:[#allocation3 + $0x180] sm:$0xff] %vm4248, 0.0
        %4299 = vst.msk [vmem:[#allocation3 + $0x188] sm:$0xff] %vm4248, 0.0
        %4300 = vst.msk [vmem:[#allocation3 + $0x190] sm:$0x3] %vm4251, 0.0
        %4301 = vst.msk [vmem:[#allocation3 + $0x198] sm:$0xff] %vm4248, 0.0
        %4302 = vst.msk [vmem:[#allocation3 + $0x1a0] sm:$0xff] %vm4248, 0.0
        %4303 = vst.msk [vmem:[#allocation3 + $0x1a8] sm:$0x3] %vm4251, 0.0
        %s4304 = scalar_lea.vmem [#allocation3], 24
        %4305 = vst.msk [vmem:[%s4304 + $0x1] sm:$0xff] %vm4248, %v4216
        %4306 = vst.msk [vmem:[%s4304 + $0x9] sm:$0xff] %vm4248, %v4217
        %4307 = vst.msk [vmem:[%s4304 + $0x19] sm:$0xff] %vm4248, %v4218
        %4308 = vst.msk [vmem:[%s4304 + $0x21] sm:$0xff] %vm4248, %v4219
        %4309 = vst.msk [vmem:[%s4304 + $0x31] sm:$0xff] %vm4248, %v4220
        %4310 = vst.msk [vmem:[%s4304 + $0x39] sm:$0xff] %vm4248, %v4221
        %4311 = vst.msk [vmem:[%s4304 + $0x49] sm:$0xff] %vm4248, %v4222
        %4312 = vst.msk [vmem:[%s4304 + $0x51] sm:$0xff] %vm4248, %v4223
        %4313 = vst.msk [vmem:[%s4304 + $0x61] sm:$0xff] %vm4248, %v4224
        %4314 = vst.msk [vmem:[%s4304 + $0x69] sm:$0xff] %vm4248, %v4225
        %4315 = vst.msk [vmem:[%s4304 + $0x79] sm:$0xff] %vm4248, %v4226
        %4316 = vst.msk [vmem:[%s4304 + $0x81] sm:$0xff] %vm4248, %v4227
        %4317 = vst.msk [vmem:[%s4304 + $0x91] sm:$0xff] %vm4248, %v4228
        %4318 = vst.msk [vmem:[%s4304 + $0x99] sm:$0xff] %vm4248, %v4229
        %4319 = vst.msk [vmem:[%s4304 + $0xa9] sm:$0xff] %vm4248, %v4230
        %4320 = vst.msk [vmem:[%s4304 + $0xb1] sm:$0xff] %vm4248, %v4231
        %4321 = vst.msk [vmem:[%s4304 + $0xc1] sm:$0xff] %vm4248, %v4232
        %4322 = vst.msk [vmem:[%s4304 + $0xc9] sm:$0xff] %vm4248, %v4233
        %4323 = vst.msk [vmem:[%s4304 + $0xd9] sm:$0xff] %vm4248, %v4234
        %4324 = vst.msk [vmem:[%s4304 + $0xe1] sm:$0xff] %vm4248, %v4235
        %4325 = vst.msk [vmem:[%s4304 + $0xf1] sm:$0xff] %vm4248, %v4236
        %4326 = vst.msk [vmem:[%s4304 + $0xf9] sm:$0xff] %vm4248, %v4237
        %4327 = vst.msk [vmem:[%s4304 + $0x109] sm:$0xff] %vm4248, %v4238
        %4328 = vst.msk [vmem:[%s4304 + $0x111] sm:$0xff] %vm4248, %v4239
        %4329 = vst.msk [vmem:[%s4304 + $0x121] sm:$0xff] %vm4248, %v4240
        %4330 = vst.msk [vmem:[%s4304 + $0x129] sm:$0xff] %vm4248, %v4241
        %4331 = vst.msk [vmem:[%s4304 + $0x139] sm:$0xff] %vm4248, %v4242
        %4332 = vst.msk [vmem:[%s4304 + $0x141] sm:$0xff] %vm4248, %v4243
        %4333 = vst.msk [vmem:[%s4304 + $0x151] sm:$0xff] %vm4248, %v4244
        %4334 = vst.msk [vmem:[%s4304 + $0x159] sm:$0xff] %vm4248, %v4245
        %4335 = vst.msk [vmem:[%s4304 + $0x169] sm:$0xff] %vm4248, %v4246
        %4336 = vst.msk [vmem:[%s4304 + $0x171] sm:$0xff] %vm4248, %v4247
        %v4337 = vld [vmem:[#allocation3] ss:$2 sm:$0xff]
        %s4338 = scalar_lea.vmem [#allocation3], 48
        %v4339 = vld [vmem:[%s4338] ss:$2 sm:$0xff]
        %s4340 = scalar_lea.vmem [#allocation3], 96
        %v4341 = vld [vmem:[%s4340] ss:$2 sm:$0xff]
        %s4342 = scalar_lea.vmem [#allocation3], 144
        %v4343 = vld [vmem:[%s4342] ss:$2 sm:$0xff]
        %s4344 = scalar_lea.vmem [#allocation3], 192
        %v4345 = vld [vmem:[%s4344] ss:$2 sm:$0xff]
        %s4346 = scalar_lea.vmem [#allocation3], 240
        %v4347 = vld [vmem:[%s4346] ss:$2 sm:$0xff]
        %s4348 = scalar_lea.vmem [#allocation3], 288
        %v4349 = vld [vmem:[%s4348] ss:$2 sm:$0xff]
        %s4350 = scalar_lea.vmem [#allocation3], 336
        %v4351 = vld [vmem:[%s4350] ss:$2 sm:$0xff]
        %s4352 = scalar_lea.vmem [#allocation3], 1
        %v4353 = vld [vmem:[%s4352] ss:$2 sm:$0xff]
        %s4354 = scalar_lea.vmem [#allocation3], 49
        %v4355 = vld [vmem:[%s4354] ss:$2 sm:$0xff]
        %s4356 = scalar_lea.vmem [#allocation3], 97
        %v4357 = vld [vmem:[%s4356] ss:$2 sm:$0xff]
        %s4358 = scalar_lea.vmem [#allocation3], 145
        %v4359 = vld [vmem:[%s4358] ss:$2 sm:$0xff]
        %s4360 = scalar_lea.vmem [#allocation3], 193
        %v4361 = vld [vmem:[%s4360] ss:$2 sm:$0xff]
        %s4362 = scalar_lea.vmem [#allocation3], 241
        %v4363 = vld [vmem:[%s4362] ss:$2 sm:$0xff]
        %s4364 = scalar_lea.vmem [#allocation3], 289
        %v4365 = vld [vmem:[%s4364] ss:$2 sm:$0xff]
        %s4366 = scalar_lea.vmem [#allocation3], 337
        %v4367 = vld [vmem:[%s4366] ss:$2 sm:$0xff]
        %v4368 = vmax.f32 %v4337, %v4353
        %v4369 = vmax.f32 %v4339, %v4355
        %v4370 = vmax.f32 %v4341, %v4357
        %v4371 = vmax.f32 %v4343, %v4359
        %v4372 = vmax.f32 %v4345, %v4361
        %v4373 = vmax.f32 %v4347, %v4363
        %v4374 = vmax.f32 %v4349, %v4365
        %v4375 = vmax.f32 %v4351, %v4367
        %s4376 = scalar_lea.vmem [#allocation3], 2
        %v4377 = vld [vmem:[%s4376] ss:$2 sm:$0xff]
        %s4378 = scalar_lea.vmem [#allocation3], 50
        %v4379 = vld [vmem:[%s4378] ss:$2 sm:$0xff]
        %s4380 = scalar_lea.vmem [#allocation3], 98
        %v4381 = vld [vmem:[%s4380] ss:$2 sm:$0xff]
        %s4382 = scalar_lea.vmem [#allocation3], 146
        %v4383 = vld [vmem:[%s4382] ss:$2 sm:$0xff]
        %s4384 = scalar_lea.vmem [#allocation3], 194
        %v4385 = vld [vmem:[%s4384] ss:$2 sm:$0xff]
        %s4386 = scalar_lea.vmem [#allocation3], 242
        %v4387 = vld [vmem:[%s4386] ss:$2 sm:$0xff]
        %s4388 = scalar_lea.vmem [#allocation3], 290
        %v4389 = vld [vmem:[%s4388] ss:$2 sm:$0xff]
        %s4390 = scalar_lea.vmem [#allocation3], 338
        %v4391 = vld [vmem:[%s4390] ss:$2 sm:$0xff]
        %v4392 = vmax.f32 %v4368, %v4377
        %v4393 = vmax.f32 %v4369, %v4379
        %v4394 = vmax.f32 %v4370, %v4381
        %v4395 = vmax.f32 %v4371, %v4383
        %v4396 = vmax.f32 %v4372, %v4385
        %v4397 = vmax.f32 %v4373, %v4387
        %v4398 = vmax.f32 %v4374, %v4389
        %v4399 = vmax.f32 %v4375, %v4391
        %v4400 = vld [vmem:[%s4304] ss:$2 sm:$0xff]
        %s4401 = scalar_lea.vmem %s4304, 48 [#allocation3]
        %v4402 = vld [vmem:[%s4401] ss:$2 sm:$0xff]
        %s4403 = scalar_lea.vmem %s4304, 96 [#allocation3]
        %v4404 = vld [vmem:[%s4403] ss:$2 sm:$0xff]
        %s4405 = scalar_lea.vmem %s4304, 144 [#allocation3]
        %v4406 = vld [vmem:[%s4405] ss:$2 sm:$0xff]
        %s4407 = scalar_lea.vmem %s4304, 192 [#allocation3]
        %v4408 = vld [vmem:[%s4407] ss:$2 sm:$0xff]
        %s4409 = scalar_lea.vmem %s4304, 240 [#allocation3]
        %v4410 = vld [vmem:[%s4409] ss:$2 sm:$0xff]
        %s4411 = scalar_lea.vmem %s4304, 288 [#allocation3]
        %v4412 = vld [vmem:[%s4411] ss:$2 sm:$0xff]
        %s4413 = scalar_lea.vmem %s4304, 336 [#allocation3]
        %v4414 = vld [vmem:[%s4413] ss:$2 sm:$0xff]
        %v4415 = vmax.f32 %v4392, %v4400
        %v4416 = vmax.f32 %v4393, %v4402
        %v4417 = vmax.f32 %v4394, %v4404
        %v4418 = vmax.f32 %v4395, %v4406
        %v4419 = vmax.f32 %v4396, %v4408
        %v4420 = vmax.f32 %v4397, %v4410
        %v4421 = vmax.f32 %v4398, %v4412
        %v4422 = vmax.f32 %v4399, %v4414
        %s4423 = scalar_lea.vmem %s4304, 1 [#allocation3]
        %v4424 = vld [vmem:[%s4423] ss:$2 sm:$0xff]
        %s4425 = scalar_lea.vmem %s4304, 49 [#allocation3]
        %v4426 = vld [vmem:[%s4425] ss:$2 sm:$0xff]
        %s4427 = scalar_lea.vmem %s4304, 97 [#allocation3]
        %v4428 = vld [vmem:[%s4427] ss:$2 sm:$0xff]
        %s4429 = scalar_lea.vmem %s4304, 145 [#allocation3]
        %v4430 = vld [vmem:[%s4429] ss:$2 sm:$0xff]
        %s4431 = scalar_lea.vmem %s4304, 193 [#allocation3]
        %v4432 = vld [vmem:[%s4431] ss:$2 sm:$0xff]
        %s4433 = scalar_lea.vmem %s4304, 241 [#allocation3]
        %v4434 = vld [vmem:[%s4433] ss:$2 sm:$0xff]
        %s4435 = scalar_lea.vmem %s4304, 289 [#allocation3]
        %v4436 = vld [vmem:[%s4435] ss:$2 sm:$0xff]
        %s4437 = scalar_lea.vmem %s4304, 337 [#allocation3]
        %v4438 = vld [vmem:[%s4437] ss:$2 sm:$0xff]
        %v4439 = vmax.f32 %v4415, %v4424
        %v4440 = vmax.f32 %v4416, %v4426
        %v4441 = vmax.f32 %v4417, %v4428
        %v4442 = vmax.f32 %v4418, %v4430
        %v4443 = vmax.f32 %v4419, %v4432
        %v4444 = vmax.f32 %v4420, %v4434
        %v4445 = vmax.f32 %v4421, %v4436
        %v4446 = vmax.f32 %v4422, %v4438
        %s4447 = scalar_lea.vmem %s4304, 2 [#allocation3]
        %v4448 = vld [vmem:[%s4447] ss:$2 sm:$0xff]
        %s4449 = scalar_lea.vmem %s4304, 50 [#allocation3]
        %v4450 = vld [vmem:[%s4449] ss:$2 sm:$0xff]
        %s4451 = scalar_lea.vmem %s4304, 98 [#allocation3]
        %v4452 = vld [vmem:[%s4451] ss:$2 sm:$0xff]
        %s4453 = scalar_lea.vmem %s4304, 146 [#allocation3]
        %v4454 = vld [vmem:[%s4453] ss:$2 sm:$0xff]
        %s4455 = scalar_lea.vmem %s4304, 194 [#allocation3]
        %v4456 = vld [vmem:[%s4455] ss:$2 sm:$0xff]
        %s4457 = scalar_lea.vmem %s4304, 242 [#allocation3]
        %v4458 = vld [vmem:[%s4457] ss:$2 sm:$0xff]
        %s4459 = scalar_lea.vmem %s4304, 290 [#allocation3]
        %v4460 = vld [vmem:[%s4459] ss:$2 sm:$0xff]
        %s4461 = scalar_lea.vmem %s4304, 338 [#allocation3]
        %v4462 = vld [vmem:[%s4461] ss:$2 sm:$0xff]
        %v4463 = vmax.f32 %v4439, %v4448
        %v4464 = vmax.f32 %v4440, %v4450
        %v4465 = vmax.f32 %v4441, %v4452
        %v4466 = vmax.f32 %v4442, %v4454
        %v4467 = vmax.f32 %v4443, %v4456
        %v4468 = vmax.f32 %v4444, %v4458
        %v4469 = vmax.f32 %v4445, %v4460
        %v4470 = vmax.f32 %v4446, %v4462
        %s4471 = scalar_lea.vmem [#allocation3], 48
        %v4472 = vld [vmem:[%s4471] ss:$2 sm:$0xff]
        %s4473 = scalar_lea.vmem %s4471, 48 [#allocation3]
        %v4474 = vld [vmem:[%s4473] ss:$2 sm:$0xff]
        %s4475 = scalar_lea.vmem %s4471, 96 [#allocation3]
        %v4476 = vld [vmem:[%s4475] ss:$2 sm:$0xff]
        %s4477 = scalar_lea.vmem %s4471, 144 [#allocation3]
        %v4478 = vld [vmem:[%s4477] ss:$2 sm:$0xff]
        %s4479 = scalar_lea.vmem %s4471, 192 [#allocation3]
        %v4480 = vld [vmem:[%s4479] ss:$2 sm:$0xff]
        %s4481 = scalar_lea.vmem %s4471, 240 [#allocation3]
        %v4482 = vld [vmem:[%s4481] ss:$2 sm:$0xff]
        %s4483 = scalar_lea.vmem %s4471, 288 [#allocation3]
        %v4484 = vld [vmem:[%s4483] ss:$2 sm:$0xff]
        %s4485 = scalar_lea.vmem %s4471, 336 [#allocation3]
        %v4486 = vld [vmem:[%s4485] ss:$2 sm:$0xff]
        %v4487 = vmax.f32 %v4463, %v4472
        %v4488 = vmax.f32 %v4464, %v4474
        %v4489 = vmax.f32 %v4465, %v4476
        %v4490 = vmax.f32 %v4466, %v4478
        %v4491 = vmax.f32 %v4467, %v4480
        %v4492 = vmax.f32 %v4468, %v4482
        %v4493 = vmax.f32 %v4469, %v4484
        %v4494 = vmax.f32 %v4470, %v4486
        %s4495 = scalar_lea.vmem %s4471, 1 [#allocation3]
        %v4496 = vld [vmem:[%s4495] ss:$2 sm:$0xff]
        %s4497 = scalar_lea.vmem %s4471, 49 [#allocation3]
        %v4498 = vld [vmem:[%s4497] ss:$2 sm:$0xff]
        %s4499 = scalar_lea.vmem %s4471, 97 [#allocation3]
        %v4500 = vld [vmem:[%s4499] ss:$2 sm:$0xff]
        %s4501 = scalar_lea.vmem %s4471, 145 [#allocation3]
        %v4502 = vld [vmem:[%s4501] ss:$2 sm:$0xff]
        %s4503 = scalar_lea.vmem %s4471, 193 [#allocation3]
        %v4504 = vld [vmem:[%s4503] ss:$2 sm:$0xff]
        %s4505 = scalar_lea.vmem %s4471, 241 [#allocation3]
        %v4506 = vld [vmem:[%s4505] ss:$2 sm:$0xff]
        %s4507 = scalar_lea.vmem %s4471, 289 [#allocation3]
        %v4508 = vld [vmem:[%s4507] ss:$2 sm:$0xff]
        %s4509 = scalar_lea.vmem %s4471, 337 [#allocation3]
        %v4510 = vld [vmem:[%s4509] ss:$2 sm:$0xff]
        %v4511 = vmax.f32 %v4487, %v4496
        %v4512 = vmax.f32 %v4488, %v4498
        %v4513 = vmax.f32 %v4489, %v4500
        %v4514 = vmax.f32 %v4490, %v4502
        %v4515 = vmax.f32 %v4491, %v4504
        %v4516 = vmax.f32 %v4492, %v4506
        %v4517 = vmax.f32 %v4493, %v4508
        %v4518 = vmax.f32 %v4494, %v4510
        %s4519 = scalar_lea.vmem %s4471, 2 [#allocation3]
        %v4520 = vld [vmem:[%s4519] ss:$2 sm:$0xff]
        %s4521 = scalar_lea.vmem %s4471, 50 [#allocation3]
        %v4522 = vld [vmem:[%s4521] ss:$2 sm:$0xff]
        %s4523 = scalar_lea.vmem %s4471, 98 [#allocation3]
        %v4524 = vld [vmem:[%s4523] ss:$2 sm:$0xff]
        %s4525 = scalar_lea.vmem %s4471, 146 [#allocation3]
        %v4526 = vld [vmem:[%s4525] ss:$2 sm:$0xff]
        %s4527 = scalar_lea.vmem %s4471, 194 [#allocation3]
        %v4528 = vld [vmem:[%s4527] ss:$2 sm:$0xff]
        %s4529 = scalar_lea.vmem %s4471, 242 [#allocation3]
        %v4530 = vld [vmem:[%s4529] ss:$2 sm:$0xff]
        %s4531 = scalar_lea.vmem %s4471, 290 [#allocation3]
        %v4532 = vld [vmem:[%s4531] ss:$2 sm:$0xff]
        %s4533 = scalar_lea.vmem %s4471, 338 [#allocation3]
        %v4534 = vld [vmem:[%s4533] ss:$2 sm:$0xff]
        %v4535 = vmax.f32 %v4511, %v4520
        %v4536 = vmax.f32 %v4512, %v4522
        %v4537 = vmax.f32 %v4513, %v4524
        %v4538 = vmax.f32 %v4514, %v4526
        %v4539 = vmax.f32 %v4515, %v4528
        %v4540 = vmax.f32 %v4516, %v4530
        %v4541 = vmax.f32 %v4517, %v4532
        %v4542 = vmax.f32 %v4518, %v4534
        %4543 = vst.msk [vmem:[%s217] sm:$0xff] %vm4248, %v4535
        %4544 = vst.msk [vmem:[%s217 + $0x8] sm:$0xff] %vm4248, %v4536
        %4545 = vst.msk [vmem:[%s217 + $0x10] sm:$0xff] %vm4248, %v4537
        %4546 = vst.msk [vmem:[%s217 + $0x18] sm:$0xff] %vm4248, %v4538
        %4547 = vst.msk [vmem:[%s217 + $0x20] sm:$0xff] %vm4248, %v4539
        %4548 = vst.msk [vmem:[%s217 + $0x28] sm:$0xff] %vm4248, %v4540
        %4549 = vst.msk [vmem:[%s217 + $0x30] sm:$0xff] %vm4248, %v4541
        %4550 = vst.msk [vmem:[%s217 + $0x38] sm:$0xff] %vm4248, %v4542
        %s4551 = sand.u32 %s137, 1
        %s4552 = scalar_lea.sflag [#allocation5], %s4551
        %s4553 = sand.u32 %s137, 1
        %s4554 = smul.addr %s4553, 64
        %s4555 = scalar_lea.vmem [#allocation4], %s4554
        // Predicated region
        $region41: #{conv_layers_forward.1} parent=39 // pred_check
          %p4556 = pneg %p147
        $region42: #{conv_layers_forward.1} parent=39 // pred_check_branch
          %4558 = sbr.rel (%p4556) target = $region44
        $region43: #{conv_layers_forward.1} parent=39 // pred_region
          %s4560 = ssub.s32 1024, 1024
          %4561 = vsyncadd %s4552, %s4560
          %s4562 = smul.addr %s19, 8
          %s4563 = smul.addr %s4562, 128
          %s4564 = scalar_lea.hbm %s5, %s4563
          %s4565 = sshll.u32 %s4555, 4
          %s4566 = int_to_ptr.vmem [resolvable:$true] %s4565
          %4571 = dma.vmem_to_hbm [thread:$0]  %s4566, 1024, %s4564, %s4552, 128, 128, 8
        $region44: #{conv_layers_forward.1} parent=39 // pred_fallthru
          _
      $region40: #{conv_layers_forward.1} parent=5 // pred_fallthru
        _
      %p4572 = scmp.le.s32.totalorder 2, %s14
      // Predicated region
      $region45: #{conv_layers_forward.1} parent=5 // pred_check
        %p4573 = pneg %p4572
      $region46: #{conv_layers_forward.1} parent=5 // pred_check_branch
        %4575 = sbr.rel (%p4573) target = $region48
      $region47: #{conv_layers_forward.1} parent=5 // pred_region
        %s4576 = ssub.s32 %s14, 2
        // Predicated region
        $region49: #{conv_layers_forward.1} parent=47 // pred_check
          %p4577 = pneg %p153
        $region50: #{conv_layers_forward.1} parent=47 // pred_check_branch
          %4579 = sbr.rel (%p4577) target = $region52
        $region51: #{conv_layers_forward.1} parent=47 // pred_region
          %s4580 = sand.u32 %s138, 1
          %s4581 = scalar_lea.sflag [#allocation5], %s4580
          %s4582 = sand.u32 %s138, 1
          %s4583 = smul.addr %s4582, 64
          %s4584 = scalar_lea.vmem [#allocation4], %s4583
          %4585 = dma.done %s4581, 1024
        $region52: #{conv_layers_forward.1} parent=47 // pred_fallthru
          _
      $region48: #{conv_layers_forward.1} parent=5 // pred_fallthru
        _
    $region6: #{conv_layers_forward.1} parent=1 // loop_footer
      %s18 = sadd.s32 1, %s14
    $region7: #{conv_layers_forward.1} parent=1 // loop_footer_branch
      %13 = sbr.rel target = $region3
    $region8: #{conv_layers_forward.1} parent=1 // loop_exit
      _
    %4586 = vsyncpa [#allocation5], 1
    %s4587 = scalar_lea.sflag [#allocation5], 1
    %4588 = vsyncpa %s4587, 1

</llo_original>
